<compile_context>
chip_gen: v7x
topology: tpu7x:2x2x1
jax: 0.10.0
libtpu: 0.0.40
codegen_flags: <defaults>
</compile_context>

<pallas_src>
import functools

import jax
import jax.numpy as jnp
from jax import lax
from jax.experimental import pallas as pl
from jax.experimental.pallas import tpu as pltpu


# ----------------------------------------------------------------------------
# Kernel 1: fused LayerwisePassageEstimator.
# Grid over layer-blocks; each step sees (Lt*P*B, H) rows laid out
# (layer, passage-slot, batch) with the attention "sequence" axis (batch B, per
# nn.MultiheadAttention batch_first=False semantics) contiguous per slot.
# Attention = block-diagonal masked attention over all rows (block size B).
# ----------------------------------------------------------------------------
def _estimator_kernel(x_ref, lora_ref, adw_ref, adb_ref, wqkv_ref, bqkv_ref,
                      wo_rel_ref, bo_rel_ref, wo_conf_ref, bo_conf_ref,
                      mean_rel_ref, mean_conf_ref, last_rel_ref,
                      acc_rel, acc_conf,
                      *, layers_per_block, num_slots, batch, hidden,
                      num_layers_total):
    Lt, P, B, H = layers_per_block, num_slots, batch, hidden
    PB = P * B
    Rt = Lt * PB
    bf16, f32 = jnp.bfloat16, jnp.float32

    @pl.when(pl.program_id(0) == 0)
    def _init():
        acc_rel[...] = jnp.zeros_like(acc_rel)
        acc_conf[...] = jnp.zeros_like(acc_conf)

    x = x_ref[0]                                                   # (Rt, H) bf16
    # lora_weights (no bias) -> adapter (bias).
    # TODO(synk): nn.Dropout(0.1) training-mode RNG masking not reproduced
    # (inference identity).
    h = jnp.dot(x, lora_ref[...], preferred_element_type=f32)
    a = (jnp.dot(h.astype(bf16), adw_ref[...], preferred_element_type=f32)
         + adb_ref[...])
    # One wide QKV matmul for BOTH attentions: columns [q_r|k_r|v_r|q_c|k_c|v_c].
    # The 1/sqrt(H) softmax scale is already folded into the Q columns.
    qkv = (jnp.dot(a.astype(bf16), wqkv_ref[...], preferred_element_type=f32)
           + bqkv_ref[...])                                        # (Rt, 6H) f32
    qkv16 = qkv.astype(bf16)                                       # single cast

    # Block-diagonal additive bias: rows r, c attend iff same (layer, slot)
    # block of B consecutive rows.  Built with compares only (no int div/mod).
    r1 = lax.broadcasted_iota(jnp.int32, (Rt, 1), 0)
    c1 = lax.broadcasted_iota(jnp.int32, (1, Rt), 1)
    rblk = jnp.zeros((Rt, 1), jnp.int32)
    cblk = jnp.zeros((1, Rt), jnp.int32)
    for t in range(1, Lt * P):                                     # static unroll
        lo = t * B
        rblk = jnp.where(r1 >= lo, t, rblk)
        cblk = jnp.where(c1 >= lo, t, cblk)
    neg_bias = jnp.where(rblk == cblk, 0.0, -1e30).astype(f32)     # (Rt, Rt)

    def attn(off, wo_ref, bo_ref):
        q = qkv16[:, off:off + H]
        k = qkv16[:, off + H:off + 2 * H]
        v = qkv16[:, off + 2 * H:off + 3 * H]
        s = lax.dot_general(q, k, (((1,), (1,)), ((), ())),
                            preferred_element_type=f32) + neg_bias
        w = jax.nn.softmax(s, axis=-1)
        ctx = jnp.dot(w.astype(bf16), v, preferred_element_type=f32)
        return (jnp.dot(ctx.astype(bf16), wo_ref[...],
                        preferred_element_type=f32) + bo_ref[...])  # (Rt, H) f32

    rel = attn(0, wo_rel_ref, bo_rel_ref)
    conf = attn(3 * H, wo_conf_ref, bo_conf_ref)

    # Within-block sum over the Lt layers via a tiny selection matmul:
    # sel[r, c] = 1 iff c == r (mod PB)  -> (PB, Rt) @ (Rt, H) = (PB, H).
    rs = lax.broadcasted_iota(jnp.int32, (PB, Rt), 0)
    cs = lax.broadcasted_iota(jnp.int32, (PB, Rt), 1)
    sel = jnp.zeros((PB, Rt), f32)
    for l in range(Lt):                                            # static unroll
        sel = jnp.where(cs == rs + l * PB, 1.0, sel)
    acc_rel[...] += jnp.dot(sel, rel, preferred_element_type=f32)
    acc_conf[...] += jnp.dot(sel, conf, preferred_element_type=f32)

    # Last layer of this block (final grid step leaves the global last layer).
    last_sel = jnp.where(cs == rs + (Lt - 1) * PB,
                         jnp.float32(1.0), jnp.zeros((PB, Rt), f32))
    last_rel_ref[...] = jnp.dot(last_sel, rel, preferred_element_type=f32)

    @pl.when(pl.program_id(0) == pl.num_programs(0) - 1)
    def _finalize():
        inv = 1.0 / num_layers_total
        mean_rel_ref[...] = acc_rel[...] * inv
        mean_conf_ref[...] = acc_conf[...] * inv


def passage_estimator_all_layers(hidden_layers, bounds, params,
                                 max_block_rows=256):
    """hidden_layers: (L, B, S, H) f32;  bounds: (B, P+1) int32.

    Returns (mean_relevance, mean_confidence, last_layer_relevance),
    each of shape (B, P, H) f32.
    """
    L, B, S, H = hidden_layers.shape
    P = bounds.shape[1] - 1
    PB = P * B

    # Largest divisor Lt of L with Lt*P*B <= max_block_rows (fills the MXU M dim
    # instead of running one P*B-row matmul per layer).
    Lt = 1
    for cand in range(1, L + 1):
        if L % cand == 0 and cand * PB <= max_block_rows:
            Lt = cand
    nblk = L // Lt
    Rt = Lt * PB

    # Gather passage-end rows BEFORE the LoRA projection (linear maps commute
    # with row gathers), directly in (layer, slot, batch) order with the bf16
    # cast fused in — one HBM pass, no separate transpose.
    idx = bounds[:, 1:] - 1                                        # (B, P)
    sent = hidden_layers[:, jnp.arange(B)[None, :], idx.T, :]      # (L, P, B, H)
    sent = sent.astype(jnp.bfloat16).reshape(nblk, Rt, H)

    kern = functools.partial(_estimator_kernel, layers_per_block=Lt,
                             num_slots=P, batch=B, hidden=H,
                             num_layers_total=L)

    def wspec(shape):
        # TODO(synk): at production H, add pipeline_mode=pl.Buffered(1) (weights
        # never change) and tile the 6H/H output columns to fit v7x's 64 MiB VMEM.
        return pl.BlockSpec(shape, lambda l: (0,) * len(shape))

    xspec = pl.BlockSpec((1, Rt, H), lambda l: (l, 0, 0))
    ospec = pl.BlockSpec((PB, H), lambda l: (0, 0))

    grid_spec = pltpu.PrefetchScalarGridSpec(
        num_scalar_prefetch=0, grid=(nblk,),
        in_specs=[xspec,
                  wspec((H, H)), wspec((H, H)), wspec((1, H)),
                  wspec((H, 6 * H)), wspec((1, 6 * H)),
                  wspec((H, H)), wspec((1, H)), wspec((H, H)), wspec((1, H))],
        out_specs=[ospec, ospec, ospec],
        scratch_shapes=[pltpu.VMEM((PB, H), jnp.float32),
                        pltpu.VMEM((PB, H), jnp.float32)])

    mean_rel, mean_conf, last_rel = pl.pallas_call(
        kern, grid_spec=grid_spec,
        out_shape=(jax.ShapeDtypeStruct((PB, H), jnp.float32),
                   jax.ShapeDtypeStruct((PB, H), jnp.float32),
                   jax.ShapeDtypeStruct((PB, H), jnp.float32)),
        compiler_params=pltpu.CompilerParams(
            dimension_semantics=("arbitrary",)),   # layer-mean accumulation axis
    )(sent, params["lora_w"], params["adapter_w"], params["adapter_b"],
      params["est_wqkv"], params["est_bqkv"],
      params["rel_wo"], params["rel_bo"], params["conf_wo"], params["conf_bo"])

    def unflat(v):                                   # (P*B, H) -> (B, P, H)
        return jnp.transpose(v.reshape(P, B, H), (1, 0, 2))

    return unflat(mean_rel), unflat(mean_conf), unflat(last_rel)


# ----------------------------------------------------------------------------
# Kernel 2: RelevanceAwarePassageFusion.  Grid over batch B.
# The additive (S, S) relevance mask is built in-kernel from small per-row /
# per-column id vectors (no (B, S, S) HBM tensor).
# ----------------------------------------------------------------------------
def _fusion_kernel(pid_row_ref, isq_row_ref, pid_col_ref, qpart_ref, x_ref,
                   wqkv_ref, bqkv_ref, wo_ref, bo_ref, o_ref,
                   qkv_scr, ctx_scr,
                   *, num_heads, head_dim, hidden, seq):
    H, d, S = hidden, head_dim, seq
    bf16, f32 = jnp.bfloat16, jnp.float32

    x = x_ref[0]                                                   # (S, H) bf16
    # Q columns already carry the 1/sqrt(d) softmax scale.
    qkv = (jnp.dot(x, wqkv_ref[...], preferred_element_type=f32)
           + bqkv_ref[...])                                        # (S, 3H) f32
    qkv_scr[...] = qkv.astype(bf16)                                # single cast

    # ---- additive relevance mask, 3 vectorized selects ----
    pid_r = pid_row_ref[0]                                         # (S, 1) i32
    isq_r = isq_row_ref[0]                                         # (S, 1) i32
    pid_c = pid_col_ref[0]                                         # (1, S) i32
    qpart = qpart_ref[0]                                           # (1, S) f32
    same = (pid_r == pid_c) & (pid_r >= 0)                         # (S, S)
    passage_part = jnp.where(same, 1.0, 0.0).astype(f32)
    mask = jnp.where(isq_r != 0, qpart, passage_part)              # (S, S) f32
    # NOTE: mirrors PyTorch float attn_mask semantics (additive); a 0.0 entry
    # does NOT block attention — preserved as-is from the reference module.

    # ---- multi-head attention; one output projection after the head loop ----
    for h in range(num_heads):                                     # static unroll
        lo = h * d
        qh = qkv_scr[:, lo:lo + d]
        kh = qkv_scr[:, H + lo:H + lo + d]
        vh = qkv_scr[:, 2 * H + lo:2 * H + lo + d]
        s = lax.dot_general(qh, kh, (((1,), (1,)), ((), ())),
                            preferred_element_type=f32) + mask
        w = jax.nn.softmax(s, axis=-1)
        ctx_scr[:, lo:lo + d] = jnp.dot(w.astype(bf16), vh,
                                        preferred_element_type=f32).astype(bf16)
    out = (jnp.dot(ctx_scr[...], wo_ref[...], preferred_element_type=f32)
           + bo_ref[...])
    o_ref[0] = out.astype(o_ref.dtype)
    # TODO(synk): at production S/H, tile the query axis flash-style so the
    # per-program working set fits v7x's 64 MiB VMEM.


def passage_fusion_last_layer(x_last, bounds, rel_scalar, fparams, num_heads):
    """x_last: (B, S, H) f32; bounds: (B, P+1) i32; rel_scalar: (B, P) f32."""
    B, S, H = x_last.shape
    P = bounds.shape[1] - 1
    d = H // num_heads

    # Tiny XLA prep: per-position passage-id / relevance / is-query vectors.
    pos = jnp.arange(S, dtype=jnp.int32)
    starts, ends = bounds[:, :-1], bounds[:, 1:]
    in_pass = ((pos[None, None, :] >= starts[:, :, None])
               & (pos[None, None, :] < ends[:, :, None]))          # (B, P, S)
    pid = jnp.where(in_pass, jnp.arange(P, dtype=jnp.int32)[None, :, None],
                    -1).max(axis=1)                                # (B, S) i32
    relc = jnp.sum(jnp.where(in_pass, rel_scalar[:, :, None], 0.0), axis=1)
    qpart = jnp.where(pid >= 0, relc, 1.0).astype(jnp.float32)     # (B, S)
    isq = (pos[None, :] < bounds[:, :1]).astype(jnp.int32)         # (B, S)

    kern = functools.partial(_fusion_kernel, num_heads=num_heads, head_dim=d,
                             hidden=H, seq=S)
    row_spec = pl.BlockSpec((1, S, 1), lambda b: (b, 0, 0))
    col_spec = pl.BlockSpec((1, 1, S), lambda b: (b, 0, 0))
    x_spec = pl.BlockSpec((1, S, H), lambda b: (b, 0, 0))

    def wspec(shape):
        return pl.BlockSpec(shape, lambda b: (0,) * len(shape))

    return pl.pallas_call(
        kern, grid=(B,),
        in_specs=[row_spec, row_spec, col_spec, col_spec, x_spec,
                  wspec((H, 3 * H)), wspec((1, 3 * H)),
                  wspec((H, H)), wspec((1, H))],
        out_specs=x_spec,
        out_shape=jax.ShapeDtypeStruct((B, S, H), jnp.bfloat16),
        scratch_shapes=[pltpu.VMEM((S, 3 * H), jnp.bfloat16),
                        pltpu.VMEM((S, H), jnp.bfloat16)],
        compiler_params=pltpu.CompilerParams(dimension_semantics=("parallel",)),
    )(pid[:, :, None], isq[:, :, None], pid[:, None, :], qpart[:, None, :],
      x_last.astype(jnp.bfloat16),
      fparams["wqkv"], fparams["bqkv"], fparams["wo"], fparams["bo"])


# ----------------------------------------------------------------------------
# Kernel 3: lm_head matmul (no bias), tiled over M/N/K with f32 accumulator.
# ----------------------------------------------------------------------------
def _matmul_kernel(x_ref, w_ref, o_ref, acc_ref):
    @pl.when(pl.program_id(2) == 0)
    def _init():
        acc_ref[...] = jnp.zeros_like(acc_ref)
    acc_ref[...] += jnp.dot(x_ref[...], w_ref[...],
                            preferred_element_type=jnp.float32)
    @pl.when(pl.program_id(2) == pl.num_programs(2) - 1)
    def _store():
        o_ref[...] = acc_ref[...].astype(o_ref.dtype)


def _pick_tile(dim, cap, base):
    """Largest multiple of `base` <= cap dividing `dim`; else the full dim."""
    if dim <= cap:
        return dim
    t = (cap // base) * base
    while t >= base:
        if dim % t == 0:
            return t
        t -= base
    return dim


def lm_head_matmul(x, w, *, tm_cap=256, tn_cap=512, tk_cap=512):
    """x: (M, K) bf16, w: (K, N) bf16 -> (M, N) f32."""
    M, K = x.shape
    N = w.shape[1]
    tm = _pick_tile(M, tm_cap, 8)
    tn = _pick_tile(N, tn_cap, 128)        # 256+ wide tiles for v6e/v7x MXU
    tk = _pick_tile(K, tk_cap, 128)
    return pl.pallas_call(
        _matmul_kernel,
        out_shape=jax.ShapeDtypeStruct((M, N), jnp.float32),
        grid=(M // tm, N // tn, K // tk),
        in_specs=[pl.BlockSpec((tm, tk), lambda i, j, k: (i, k)),
                  pl.BlockSpec((tk, tn), lambda i, j, k: (k, j))],
        out_specs=pl.BlockSpec((tm, tn), lambda i, j, k: (i, j)),
        scratch_shapes=[pltpu.VMEM((tm, tn), jnp.float32)],
        compiler_params=pltpu.CompilerParams(
            dimension_semantics=("parallel", "parallel", "arbitrary")),
    )(x, w)


# ----------------------------------------------------------------------------
# Parameters (torch (out,in) weights pre-transposed; Q-scale folded in; bf16
# MXU operands, f32 biases).
# ----------------------------------------------------------------------------
def _mha_params(key, H, head_dim, scale=0.02):
    ks = jax.random.split(key, 4)
    in_proj = scale * jax.random.normal(ks[0], (3 * H, H), jnp.float32)
    in_b = scale * jax.random.normal(ks[1], (3 * H,), jnp.float32)
    wo = scale * jax.random.normal(ks[2], (H, H), jnp.float32)
    bo = scale * jax.random.normal(ks[3], (H,), jnp.float32)
    qscale = 1.0 / (head_dim ** 0.5)
    wqkv = in_proj.T                                  # (H, 3H) cols [q|k|v]
    wqkv = wqkv.at[:, :H].multiply(qscale)            # fold softmax scale into Q
    bqkv = in_b.at[:H].multiply(qscale)
    return {"wqkv": wqkv.astype(jnp.bfloat16),
            "bqkv": bqkv[None, :].astype(jnp.float32),
            "wo": wo.T.astype(jnp.bfloat16),
            "bo": bo[None, :].astype(jnp.float32)}


def init_params(key, H, V, num_heads):
    ks = jax.random.split(key, 7)
    scale = 0.02
    rel = _mha_params(ks[3], H, H)                    # single head -> head_dim H
    conf = _mha_params(ks[4], H, H)
    return {
        "lora_w": (scale * jax.random.normal(ks[0], (H, H), jnp.float32)
                   ).T.astype(jnp.bfloat16),
        "adapter_w": (scale * jax.random.normal(ks[1], (H, H), jnp.float32)
                      ).T.astype(jnp.bfloat16),
        "adapter_b": (scale * jax.random.normal(ks[2], (H,), jnp.float32)
                      )[None, :],
        # relevance + confidence QKV fused into one (H, 6H) weight
        "est_wqkv": jnp.concatenate([rel["wqkv"], conf["wqkv"]], axis=1),
        "est_bqkv": jnp.concatenate([rel["bqkv"], conf["bqkv"]], axis=1),
        "rel_wo": rel["wo"], "rel_bo": rel["bo"],
        "conf_wo": conf["wo"], "conf_bo": conf["bo"],
        "fusion": _mha_params(ks[5], H, H // num_heads),
        "lm_head_wT": (scale * jax.random.normal(ks[6], (V, H), jnp.float32)
                       ).T.astype(jnp.bfloat16),
    }


# ----------------------------------------------------------------------------
# Forward pass.
# ----------------------------------------------------------------------------
def llm_open_qa_forward(hidden_states, bounds, params, num_heads,
                        est_block_rows=256):
    """hidden_states: (num_layers + 1, B, S, H) synthetic base-LLM activations."""
    B, S, H = hidden_states.shape[1:]
    # TODO(synk): tokenizer / add_special_tokens / LlamaForCausalLM are replaced
    # by the synthetic per-layer hidden states supplied by the caller.
    final_rel, final_conf, last_rel = passage_estimator_all_layers(
        hidden_states[1:], bounds, params, max_block_rows=est_block_rows)

    # Only the last layer's fused hidden state ever reaches lm_head (earlier
    # fused outputs are overwritten each loop iteration), so fusion runs once.
    # TODO(synk): base_llm.model.layers[layer_idx] decoder blocks between layers
    # are not reproducible (HF Llama weights unavailable).
    # TODO(synk): the reference assigns an H-dim relevance vector into scalar
    # mask slots (shape-inconsistent in PyTorch); we use its mean over H.
    rel_scalar = last_rel.mean(axis=-1).astype(jnp.float32)        # (B, P)
    fused = passage_fusion_last_layer(hidden_states[-1], bounds, rel_scalar,
                                      params["fusion"], num_heads)  # (B,S,H) bf16
    logits = lm_head_matmul(fused.reshape(B * S, H),
                            params["lm_head_wT"]).reshape(B, S, -1)
    return logits, final_rel, final_conf


if __name__ == "__main__":
    # Small, module-consistent shapes.
    B, S, H = 2, 16, 128
    NUM_LAYERS, NUM_HEADS, VOCAB = 4, 4, 256
    # passage_boundaries: q_end=4, passages (4,8), (8,12), (12,16)  -> P = 3
    boundaries = [[4, 8, 12, 16], [4, 8, 12, 16]]
    bounds = jnp.asarray(boundaries, dtype=jnp.int32)               # (B, P+1)

    key = jax.random.PRNGKey(0)
    k_hs, k_par = jax.random.split(key)
    hidden_states = jax.random.normal(k_hs, (NUM_LAYERS + 1, B, S, H),
                                      jnp.float32)
    params = init_params(k_par, H, VOCAB, NUM_HEADS)

    # est_block_rows=12 caps the layer-block at 2 layers so the demo exercises
    # the multi-step in-kernel mean accumulation path (production default 256).
    fwd = jax.jit(functools.partial(llm_open_qa_forward, num_heads=NUM_HEADS,
                                    est_block_rows=12))
    logits, final_rel, final_conf = fwd(hidden_states, bounds, params)
    jax.block_until_ready((logits, final_rel, final_conf))

    P = bounds.shape[1] - 1
    assert logits.shape == (B, S, VOCAB)
    assert final_rel.shape == (B, P, H)
    assert final_conf.shape == (B, P, H)
    print("KERNEL_OK")
</pallas_src>

<mosaic_0001>
module attributes {stable_mosaic.version = 11 : i64} {
  func.func @_estimator_kernel(%arg0: i32, %arg1: memref<1x12x128xbf16, #tpu.memory_space<vmem>>, %arg2: memref<128x128xbf16, #tpu.memory_space<vmem>>, %arg3: memref<128x128xbf16, #tpu.memory_space<vmem>>, %arg4: memref<1x128xf32, #tpu.memory_space<vmem>>, %arg5: memref<128x768xbf16, #tpu.memory_space<vmem>>, %arg6: memref<1x768xf32, #tpu.memory_space<vmem>>, %arg7: memref<128x128xbf16, #tpu.memory_space<vmem>>, %arg8: memref<1x128xf32, #tpu.memory_space<vmem>>, %arg9: memref<128x128xbf16, #tpu.memory_space<vmem>>, %arg10: memref<1x128xf32, #tpu.memory_space<vmem>>, %arg11: memref<6x128xf32, #tpu.memory_space<vmem>>, %arg12: memref<6x128xf32, #tpu.memory_space<vmem>>, %arg13: memref<6x128xf32, #tpu.memory_space<vmem>>, %arg14: memref<6x128xf32, #tpu.memory_space<vmem>>, %arg15: memref<6x128xf32, #tpu.memory_space<vmem>>) attributes {dimension_semantics = [#tpu.dimension_semantics<arbitrary>], iteration_bounds = array<i64: 2>, scalar_prefetch = 0 : i64, scratch_operands = 2 : i64, tpu.core_type = #tpu.core_type<tc>, window_params = [{transform_indices = @transform_0, window_bounds = array<i64: 1, 12, 128>}, {pipeline_mode = #tpu.pipeline_mode<synchronous>, transform_indices = @transform_1, window_bounds = array<i64: 128, 128>}, {pipeline_mode = #tpu.pipeline_mode<synchronous>, transform_indices = @transform_2, window_bounds = array<i64: 128, 128>}, {pipeline_mode = #tpu.pipeline_mode<synchronous>, transform_indices = @transform_3, window_bounds = array<i64: 1, 128>}, {pipeline_mode = #tpu.pipeline_mode<synchronous>, transform_indices = @transform_4, window_bounds = array<i64: 128, 768>}, {pipeline_mode = #tpu.pipeline_mode<synchronous>, transform_indices = @transform_5, window_bounds = array<i64: 1, 768>}, {pipeline_mode = #tpu.pipeline_mode<synchronous>, transform_indices = @transform_6, window_bounds = array<i64: 128, 128>}, {pipeline_mode = #tpu.pipeline_mode<synchronous>, transform_indices = @transform_7, window_bounds = array<i64: 1, 128>}, {pipeline_mode = #tpu.pipeline_mode<synchronous>, transform_indices = @transform_8, window_bounds = array<i64: 128, 128>}, {pipeline_mode = #tpu.pipeline_mode<synchronous>, transform_indices = @transform_9, window_bounds = array<i64: 1, 128>}, {pipeline_mode = #tpu.pipeline_mode<synchronous>, transform_indices = @transform_10, window_bounds = array<i64: 6, 128>}, {pipeline_mode = #tpu.pipeline_mode<synchronous>, transform_indices = @transform_11, window_bounds = array<i64: 6, 128>}, {pipeline_mode = #tpu.pipeline_mode<synchronous>, transform_indices = @transform_12, window_bounds = array<i64: 6, 128>}]} {
    %c0_i32 = arith.constant 0 : i32
    %0 = arith.cmpi eq, %arg0, %c0_i32 : i32
    %1 = arith.extui %0 : i1 to i32
    %c0_i32_0 = arith.constant 0 : i32
    %2 = arith.cmpi ne, %1, %c0_i32_0 : i32
    scf.if %2 {
      %cst_74 = arith.constant 0.000000e+00 : f32
      %150 = vector.broadcast %cst_74 : f32 to vector<6x128xf32>
      %c0_75 = arith.constant 0 : index
      %c0_76 = arith.constant 0 : index
      %151 = vector.load %arg14[%c0_75, %c0_76] : memref<6x128xf32, #tpu.memory_space<vmem>>, vector<6x128xf32>
      tpu.vector_store %arg14[%c0_75, %c0_76], %150 {strides = array<i32>} : memref<6x128xf32, #tpu.memory_space<vmem>>, vector<6x128xf32>,
      %cst_77 = arith.constant 0.000000e+00 : f32
      %152 = vector.broadcast %cst_77 : f32 to vector<6x128xf32>
      %c0_78 = arith.constant 0 : index
      %c0_79 = arith.constant 0 : index
      %153 = vector.load %arg15[%c0_78, %c0_79] : memref<6x128xf32, #tpu.memory_space<vmem>>, vector<6x128xf32>
      tpu.vector_store %arg15[%c0_78, %c0_79], %152 {strides = array<i32>} : memref<6x128xf32, #tpu.memory_space<vmem>>, vector<6x128xf32>,
    } else {
    }
    %c0 = arith.constant 0 : index
    %c0_1 = arith.constant 0 : index
    %c0_2 = arith.constant 0 : index
    %3 = vector.load %arg1[%c0, %c0_1, %c0_2] : memref<1x12x128xbf16, #tpu.memory_space<vmem>>, vector<1x12x128xbf16>
    %4 = vector.shape_cast %3 : vector<1x12x128xbf16> to vector<12x128xbf16>
    %c0_3 = arith.constant 0 : index
    %c0_4 = arith.constant 0 : index
    %5 = vector.load %arg2[%c0_3, %c0_4] : memref<128x128xbf16, #tpu.memory_space<vmem>>, vector<128x128xbf16>
    %cst = arith.constant dense<0.000000e+00> : vector<12x128xf32>
    %6 = tpu.matmul %4, %5, %cst {dimension_numbers = #tpu.dot_dimension_numbers<[1], [0], [0], [1], [0, 0, 1, 1], [], []>} : vector<12x128xbf16>, vector<128x128xbf16>, vector<12x128xf32> -> vector<12x128xf32>
    %7 = arith.truncf %6 : vector<12x128xf32> to vector<12x128xbf16>
    %c0_5 = arith.constant 0 : index
    %c0_6 = arith.constant 0 : index
    %8 = vector.load %arg3[%c0_5, %c0_6] : memref<128x128xbf16, #tpu.memory_space<vmem>>, vector<128x128xbf16>
    %cst_7 = arith.constant dense<0.000000e+00> : vector<12x128xf32>
    %9 = tpu.matmul %7, %8, %cst_7 {dimension_numbers = #tpu.dot_dimension_numbers<[1], [0], [0], [1], [0, 0, 1, 1], [], []>} : vector<12x128xbf16>, vector<128x128xbf16>, vector<12x128xf32> -> vector<12x128xf32>
    %c0_8 = arith.constant 0 : index
    %c0_9 = arith.constant 0 : index
    %10 = vector.load %arg4[%c0_8, %c0_9] : memref<1x128xf32, #tpu.memory_space<vmem>>, vector<1x128xf32>
    %11 = vector.broadcast %10 : vector<1x128xf32> to vector<12x128xf32>
    %12 = arith.addf %9, %11 : vector<12x128xf32>
    %13 = arith.truncf %12 : vector<12x128xf32> to vector<12x128xbf16>
    %c0_10 = arith.constant 0 : index
    %c0_11 = arith.constant 0 : index
    %14 = vector.load %arg5[%c0_10, %c0_11] : memref<128x768xbf16, #tpu.memory_space<vmem>>, vector<128x768xbf16>
    %cst_12 = arith.constant dense<0.000000e+00> : vector<12x768xf32>
    %15 = tpu.matmul %13, %14, %cst_12 {dimension_numbers = #tpu.dot_dimension_numbers<[1], [0], [0], [1], [0, 0, 1, 1], [], []>} : vector<12x128xbf16>, vector<128x768xbf16>, vector<12x768xf32> -> vector<12x768xf32>
    %c0_13 = arith.constant 0 : index
    %c0_14 = arith.constant 0 : index
    %16 = vector.load %arg6[%c0_13, %c0_14] : memref<1x768xf32, #tpu.memory_space<vmem>>, vector<1x768xf32>
    %17 = vector.broadcast %16 : vector<1x768xf32> to vector<12x768xf32>
    %18 = arith.addf %15, %17 : vector<12x768xf32>
    %19 = arith.truncf %18 : vector<12x768xf32> to vector<12x768xbf16>
    %20 = tpu.iota {dimensions = array<i32: 0>} : vector<12x1xi32>
    %21 = tpu.iota {dimensions = array<i32: 1>} : vector<1x12xi32>
    %c0_i32_15 = arith.constant 0 : i32
    %22 = vector.broadcast %c0_i32_15 : i32 to vector<12x1xi32>
    %c0_i32_16 = arith.constant 0 : i32
    %23 = vector.broadcast %c0_i32_16 : i32 to vector<1x12xi32>
    %c2_i32 = arith.constant 2 : i32
    %24 = vector.broadcast %c2_i32 : i32 to vector<12x1xi32>
    %25 = arith.cmpi sge, %20, %24 : vector<12x1xi32>
    %c1_i32 = arith.constant 1 : i32
    %26 = vector.broadcast %c1_i32 : i32 to vector<12x1xi32>
    %27 = arith.select %25, %26, %22 : vector<12x1xi1>, vector<12x1xi32>
    %c2_i32_17 = arith.constant 2 : i32
    %28 = vector.broadcast %c2_i32_17 : i32 to vector<1x12xi32>
    %29 = arith.cmpi sge, %21, %28 : vector<1x12xi32>
    %c1_i32_18 = arith.constant 1 : i32
    %30 = vector.broadcast %c1_i32_18 : i32 to vector<1x12xi32>
    %31 = arith.select %29, %30, %23 : vector<1x12xi1>, vector<1x12xi32>
    %c4_i32 = arith.constant 4 : i32
    %32 = vector.broadcast %c4_i32 : i32 to vector<12x1xi32>
    %33 = arith.cmpi sge, %20, %32 : vector<12x1xi32>
    %c2_i32_19 = arith.constant 2 : i32
    %34 = vector.broadcast %c2_i32_19 : i32 to vector<12x1xi32>
    %35 = arith.select %33, %34, %27 : vector<12x1xi1>, vector<12x1xi32>
    %c4_i32_20 = arith.constant 4 : i32
    %36 = vector.broadcast %c4_i32_20 : i32 to vector<1x12xi32>
    %37 = arith.cmpi sge, %21, %36 : vector<1x12xi32>
    %c2_i32_21 = arith.constant 2 : i32
    %38 = vector.broadcast %c2_i32_21 : i32 to vector<1x12xi32>
    %39 = arith.select %37, %38, %31 : vector<1x12xi1>, vector<1x12xi32>
    %c6_i32 = arith.constant 6 : i32
    %40 = vector.broadcast %c6_i32 : i32 to vector<12x1xi32>
    %41 = arith.cmpi sge, %20, %40 : vector<12x1xi32>
    %c3_i32 = arith.constant 3 : i32
    %42 = vector.broadcast %c3_i32 : i32 to vector<12x1xi32>
    %43 = arith.select %41, %42, %35 : vector<12x1xi1>, vector<12x1xi32>
    %c6_i32_22 = arith.constant 6 : i32
    %44 = vector.broadcast %c6_i32_22 : i32 to vector<1x12xi32>
    %45 = arith.cmpi sge, %21, %44 : vector<1x12xi32>
    %c3_i32_23 = arith.constant 3 : i32
    %46 = vector.broadcast %c3_i32_23 : i32 to vector<1x12xi32>
    %47 = arith.select %45, %46, %39 : vector<1x12xi1>, vector<1x12xi32>
    %c8_i32 = arith.constant 8 : i32
    %48 = vector.broadcast %c8_i32 : i32 to vector<12x1xi32>
    %49 = arith.cmpi sge, %20, %48 : vector<12x1xi32>
    %c4_i32_24 = arith.constant 4 : i32
    %50 = vector.broadcast %c4_i32_24 : i32 to vector<12x1xi32>
    %51 = arith.select %49, %50, %43 : vector<12x1xi1>, vector<12x1xi32>
    %c8_i32_25 = arith.constant 8 : i32
    %52 = vector.broadcast %c8_i32_25 : i32 to vector<1x12xi32>
    %53 = arith.cmpi sge, %21, %52 : vector<1x12xi32>
    %c4_i32_26 = arith.constant 4 : i32
    %54 = vector.broadcast %c4_i32_26 : i32 to vector<1x12xi32>
    %55 = arith.select %53, %54, %47 : vector<1x12xi1>, vector<1x12xi32>
    %c10_i32 = arith.constant 10 : i32
    %56 = vector.broadcast %c10_i32 : i32 to vector<12x1xi32>
    %57 = arith.cmpi sge, %20, %56 : vector<12x1xi32>
    %c5_i32 = arith.constant 5 : i32
    %58 = vector.broadcast %c5_i32 : i32 to vector<12x1xi32>
    %59 = arith.select %57, %58, %51 : vector<12x1xi1>, vector<12x1xi32>
    %c10_i32_27 = arith.constant 10 : i32
    %60 = vector.broadcast %c10_i32_27 : i32 to vector<1x12xi32>
    %61 = arith.cmpi sge, %21, %60 : vector<1x12xi32>
    %c5_i32_28 = arith.constant 5 : i32
    %62 = vector.broadcast %c5_i32_28 : i32 to vector<1x12xi32>
    %63 = arith.select %61, %62, %55 : vector<1x12xi1>, vector<1x12xi32>
    %64 = vector.broadcast %59 : vector<12x1xi32> to vector<12x12xi32>
    %65 = vector.broadcast %63 : vector<1x12xi32> to vector<12x12xi32>
    %66 = arith.cmpi eq, %64, %65 : vector<12x12xi32>
    %cst_29 = arith.constant 0.000000e+00 : f32
    %cst_30 = arith.constant -1.000000e+30 : f32
    %67 = vector.broadcast %cst_29 : f32 to vector<12x12xf32>
    %68 = vector.broadcast %cst_30 : f32 to vector<12x12xf32>
    %69 = arith.select %66, %67, %68 : vector<12x12xi1>, vector<12x12xf32>
    %70 = vector.extract_strided_slice %19 {offsets = [0, 0], sizes = [12, 128], strides = [1, 1]} : vector<12x768xbf16> to vector<12x128xbf16>
    %71 = vector.extract_strided_slice %19 {offsets = [0, 128], sizes = [12, 128], strides = [1, 1]} : vector<12x768xbf16> to vector<12x128xbf16>
    %72 = vector.extract_strided_slice %19 {offsets = [0, 256], sizes = [12, 128], strides = [1, 1]} : vector<12x768xbf16> to vector<12x128xbf16>
    %cst_31 = arith.constant dense<0.000000e+00> : vector<12x12xf32>
    %73 = tpu.matmul %70, %71, %cst_31 {dimension_numbers = #tpu.dot_dimension_numbers<[1], [1], [0], [0], [0, 0, 1, 0], [], []>} : vector<12x128xbf16>, vector<12x128xbf16>, vector<12x12xf32> -> vector<12x12xf32>
    %74 = arith.addf %73, %69 : vector<12x12xf32>
    %cst_32 = arith.constant dense<0xFF800000> : vector<12xf32>
    %75 = vector.multi_reduction <maximumf>, %74, %cst_32 [1] : vector<12x12xf32> to vector<12xf32>
    %cst_33 = arith.constant 0xFF800000 : f32
    %76 = vector.broadcast %cst_33 : f32 to vector<12xf32>
    %77 = arith.maximumf %76, %75 : vector<12xf32>
    %78 = vector.shape_cast %77 : vector<12xf32> to vector<12x1xf32>
    %79 = vector.broadcast %78 : vector<12x1xf32> to vector<12x12xf32>
    %80 = arith.subf %74, %79 : vector<12x12xf32>
    %81 = math.exp %80 : vector<12x12xf32>
    %cst_34 = arith.constant dense<0.000000e+00> : vector<12xf32>
    %82 = vector.multi_reduction <add>, %81, %cst_34 [1] : vector<12x12xf32> to vector<12xf32>
    %83 = vector.shape_cast %82 : vector<12xf32> to vector<12x1xf32>
    %84 = vector.broadcast %83 : vector<12x1xf32> to vector<12x12xf32>
    %85 = arith.divf %81, %84 : vector<12x12xf32>
    %86 = arith.truncf %85 : vector<12x12xf32> to vector<12x12xbf16>
    %cst_35 = arith.constant dense<0.000000e+00> : vector<12x128xf32>
    %87 = tpu.matmul %86, %72, %cst_35 {dimension_numbers = #tpu.dot_dimension_numbers<[1], [0], [0], [1], [0, 0, 1, 1], [], []>} : vector<12x12xbf16>, vector<12x128xbf16>, vector<12x128xf32> -> vector<12x128xf32>
    %88 = arith.truncf %87 : vector<12x128xf32> to vector<12x128xbf16>
    %c0_36 = arith.constant 0 : index
    %c0_37 = arith.constant 0 : index
    %89 = vector.load %arg7[%c0_36, %c0_37] : memref<128x128xbf16, #tpu.memory_space<vmem>>, vector<128x128xbf16>
    %cst_38 = arith.constant dense<0.000000e+00> : vector<12x128xf32>
    %90 = tpu.matmul %88, %89, %cst_38 {dimension_numbers = #tpu.dot_dimension_numbers<[1], [0], [0], [1], [0, 0, 1, 1], [], []>} : vector<12x128xbf16>, vector<128x128xbf16>, vector<12x128xf32> -> vector<12x128xf32>
    %c0_39 = arith.constant 0 : index
    %c0_40 = arith.constant 0 : index
    %91 = vector.load %arg8[%c0_39, %c0_40] : memref<1x128xf32, #tpu.memory_space<vmem>>, vector<1x128xf32>
    %92 = vector.broadcast %91 : vector<1x128xf32> to vector<12x128xf32>
    %93 = arith.addf %90, %92 : vector<12x128xf32>
    %94 = vector.extract_strided_slice %19 {offsets = [0, 384], sizes = [12, 128], strides = [1, 1]} : vector<12x768xbf16> to vector<12x128xbf16>
    %95 = vector.extract_strided_slice %19 {offsets = [0, 512], sizes = [12, 128], strides = [1, 1]} : vector<12x768xbf16> to vector<12x128xbf16>
    %96 = vector.extract_strided_slice %19 {offsets = [0, 640], sizes = [12, 128], strides = [1, 1]} : vector<12x768xbf16> to vector<12x128xbf16>
    %cst_41 = arith.constant dense<0.000000e+00> : vector<12x12xf32>
    %97 = tpu.matmul %94, %95, %cst_41 {dimension_numbers = #tpu.dot_dimension_numbers<[1], [1], [0], [0], [0, 0, 1, 0], [], []>} : vector<12x128xbf16>, vector<12x128xbf16>, vector<12x12xf32> -> vector<12x12xf32>
    %98 = arith.addf %97, %69 : vector<12x12xf32>
    %cst_42 = arith.constant dense<0xFF800000> : vector<12xf32>
    %99 = vector.multi_reduction <maximumf>, %98, %cst_42 [1] : vector<12x12xf32> to vector<12xf32>
    %cst_43 = arith.constant 0xFF800000 : f32
    %100 = vector.broadcast %cst_43 : f32 to vector<12xf32>
    %101 = arith.maximumf %100, %99 : vector<12xf32>
    %102 = vector.shape_cast %101 : vector<12xf32> to vector<12x1xf32>
    %103 = vector.broadcast %102 : vector<12x1xf32> to vector<12x12xf32>
    %104 = arith.subf %98, %103 : vector<12x12xf32>
    %105 = math.exp %104 : vector<12x12xf32>
    %cst_44 = arith.constant dense<0.000000e+00> : vector<12xf32>
    %106 = vector.multi_reduction <add>, %105, %cst_44 [1] : vector<12x12xf32> to vector<12xf32>
    %107 = vector.shape_cast %106 : vector<12xf32> to vector<12x1xf32>
    %108 = vector.broadcast %107 : vector<12x1xf32> to vector<12x12xf32>
    %109 = arith.divf %105, %108 : vector<12x12xf32>
    %110 = arith.truncf %109 : vector<12x12xf32> to vector<12x12xbf16>
    %cst_45 = arith.constant dense<0.000000e+00> : vector<12x128xf32>
    %111 = tpu.matmul %110, %96, %cst_45 {dimension_numbers = #tpu.dot_dimension_numbers<[1], [0], [0], [1], [0, 0, 1, 1], [], []>} : vector<12x12xbf16>, vector<12x128xbf16>, vector<12x128xf32> -> vector<12x128xf32>
    %112 = arith.truncf %111 : vector<12x128xf32> to vector<12x128xbf16>
    %c0_46 = arith.constant 0 : index
    %c0_47 = arith.constant 0 : index
    %113 = vector.load %arg9[%c0_46, %c0_47] : memref<128x128xbf16, #tpu.memory_space<vmem>>, vector<128x128xbf16>
    %cst_48 = arith.constant dense<0.000000e+00> : vector<12x128xf32>
    %114 = tpu.matmul %112, %113, %cst_48 {dimension_numbers = #tpu.dot_dimension_numbers<[1], [0], [0], [1], [0, 0, 1, 1], [], []>} : vector<12x128xbf16>, vector<128x128xbf16>, vector<12x128xf32> -> vector<12x128xf32>
    %c0_49 = arith.constant 0 : index
    %c0_50 = arith.constant 0 : index
    %115 = vector.load %arg10[%c0_49, %c0_50] : memref<1x128xf32, #tpu.memory_space<vmem>>, vector<1x128xf32>
    %116 = vector.broadcast %115 : vector<1x128xf32> to vector<12x128xf32>
    %117 = arith.addf %114, %116 : vector<12x128xf32>
    %118 = tpu.iota {dimensions = array<i32: 0>} : vector<6x12xi32>
    %119 = tpu.iota {dimensions = array<i32: 1>} : vector<6x12xi32>
    %cst_51 = arith.constant 0.000000e+00 : f32
    %120 = vector.broadcast %cst_51 : f32 to vector<6x12xf32>
    %c0_i32_52 = arith.constant 0 : i32
    %121 = vector.broadcast %c0_i32_52 : i32 to vector<6x12xi32>
    %122 = arith.addi %118, %121 : vector<6x12xi32>
    %123 = arith.cmpi eq, %119, %122 : vector<6x12xi32>
    %cst_53 = arith.constant 1.000000e+00 : f32
    %124 = vector.broadcast %cst_53 : f32 to vector<6x12xf32>
    %125 = arith.select %123, %124, %120 : vector<6x12xi1>, vector<6x12xf32>
    %c6_i32_54 = arith.constant 6 : i32
    %126 = vector.broadcast %c6_i32_54 : i32 to vector<6x12xi32>
    %127 = arith.addi %118, %126 : vector<6x12xi32>
    %128 = arith.cmpi eq, %119, %127 : vector<6x12xi32>
    %cst_55 = arith.constant 1.000000e+00 : f32
    %129 = vector.broadcast %cst_55 : f32 to vector<6x12xf32>
    %130 = arith.select %128, %129, %125 : vector<6x12xi1>, vector<6x12xf32>
    %c0_56 = arith.constant 0 : index
    %c0_57 = arith.constant 0 : index
    %131 = vector.load %arg14[%c0_56, %c0_57] : memref<6x128xf32, #tpu.memory_space<vmem>>, vector<6x128xf32>
    %cst_58 = arith.constant dense<0.000000e+00> : vector<6x128xf32>
    %132 = tpu.matmul %130, %93, %cst_58 {dimension_numbers = #tpu.dot_dimension_numbers<[1], [0], [0], [1], [0, 0, 1, 1], [], []>} : vector<6x12xf32>, vector<12x128xf32>, vector<6x128xf32> -> vector<6x128xf32>
    %133 = arith.addf %131, %132 : vector<6x128xf32>
    %c0_59 = arith.constant 0 : index
    %c0_60 = arith.constant 0 : index
    %134 = vector.load %arg14[%c0_59, %c0_60] : memref<6x128xf32, #tpu.memory_space<vmem>>, vector<6x128xf32>
    tpu.vector_store %arg14[%c0_59, %c0_60], %133 {strides = array<i32>} : memref<6x128xf32, #tpu.memory_space<vmem>>, vector<6x128xf32>,
    %c0_61 = arith.constant 0 : index
    %c0_62 = arith.constant 0 : index
    %135 = vector.load %arg15[%c0_61, %c0_62] : memref<6x128xf32, #tpu.memory_space<vmem>>, vector<6x128xf32>
    %cst_63 = arith.constant dense<0.000000e+00> : vector<6x128xf32>
    %136 = tpu.matmul %130, %117, %cst_63 {dimension_numbers = #tpu.dot_dimension_numbers<[1], [0], [0], [1], [0, 0, 1, 1], [], []>} : vector<6x12xf32>, vector<12x128xf32>, vector<6x128xf32> -> vector<6x128xf32>
    %137 = arith.addf %135, %136 : vector<6x128xf32>
    %c0_64 = arith.constant 0 : index
    %c0_65 = arith.constant 0 : index
    %138 = vector.load %arg15[%c0_64, %c0_65] : memref<6x128xf32, #tpu.memory_space<vmem>>, vector<6x128xf32>
    tpu.vector_store %arg15[%c0_64, %c0_65], %137 {strides = array<i32>} : memref<6x128xf32, #tpu.memory_space<vmem>>, vector<6x128xf32>,
    %c6_i32_66 = arith.constant 6 : i32
    %139 = vector.broadcast %c6_i32_66 : i32 to vector<6x12xi32>
    %140 = arith.addi %118, %139 : vector<6x12xi32>
    %141 = arith.cmpi eq, %119, %140 : vector<6x12xi32>
    %cst_67 = arith.constant 0.000000e+00 : f32
    %142 = vector.broadcast %cst_67 : f32 to vector<6x12xf32>
    %cst_68 = arith.constant 1.000000e+00 : f32
    %143 = vector.broadcast %cst_68 : f32 to vector<6x12xf32>
    %144 = arith.select %141, %143, %142 : vector<6x12xi1>, vector<6x12xf32>
    %cst_69 = arith.constant dense<0.000000e+00> : vector<6x128xf32>
    %145 = tpu.matmul %144, %93, %cst_69 {dimension_numbers = #tpu.dot_dimension_numbers<[1], [0], [0], [1], [0, 0, 1, 1], [], []>} : vector<6x12xf32>, vector<12x128xf32>, vector<6x128xf32> -> vector<6x128xf32>
    %c0_70 = arith.constant 0 : index
    %c0_71 = arith.constant 0 : index
    %146 = vector.load %arg13[%c0_70, %c0_71] : memref<6x128xf32, #tpu.memory_space<vmem>>, vector<6x128xf32>
    tpu.vector_store %arg13[%c0_70, %c0_71], %145 {strides = array<i32>} : memref<6x128xf32, #tpu.memory_space<vmem>>, vector<6x128xf32>,
    %c1_i32_72 = arith.constant 1 : i32
    %147 = arith.cmpi eq, %arg0, %c1_i32_72 : i32
    %148 = arith.extui %147 : i1 to i32
    %c0_i32_73 = arith.constant 0 : i32
    %149 = arith.cmpi ne, %148, %c0_i32_73 : i32
    scf.if %149 {
      %c0_74 = arith.constant 0 : index
      %c0_75 = arith.constant 0 : index
      %150 = vector.load %arg14[%c0_74, %c0_75] : memref<6x128xf32, #tpu.memory_space<vmem>>, vector<6x128xf32>
      %cst_76 = arith.constant 2.500000e-01 : f32
      %151 = vector.broadcast %cst_76 : f32 to vector<6x128xf32>
      %152 = arith.mulf %150, %151 : vector<6x128xf32>
      %c0_77 = arith.constant 0 : index
      %c0_78 = arith.constant 0 : index
      %153 = vector.load %arg11[%c0_77, %c0_78] : memref<6x128xf32, #tpu.memory_space<vmem>>, vector<6x128xf32>
      tpu.vector_store %arg11[%c0_77, %c0_78], %152 {strides = array<i32>} : memref<6x128xf32, #tpu.memory_space<vmem>>, vector<6x128xf32>,
      %c0_79 = arith.constant 0 : index
      %c0_80 = arith.constant 0 : index
      %154 = vector.load %arg15[%c0_79, %c0_80] : memref<6x128xf32, #tpu.memory_space<vmem>>, vector<6x128xf32>
      %cst_81 = arith.constant 2.500000e-01 : f32
      %155 = vector.broadcast %cst_81 : f32 to vector<6x128xf32>
      %156 = arith.mulf %154, %155 : vector<6x128xf32>
      %c0_82 = arith.constant 0 : index
      %c0_83 = arith.constant 0 : index
      %157 = vector.load %arg12[%c0_82, %c0_83] : memref<6x128xf32, #tpu.memory_space<vmem>>, vector<6x128xf32>
      tpu.vector_store %arg12[%c0_82, %c0_83], %156 {strides = array<i32>} : memref<6x128xf32, #tpu.memory_space<vmem>>, vector<6x128xf32>,
    } else {
    }
    return
  }
  func.func @transform_0(%arg0: i32) -> (i32, i32, i32) {
    %c0_i32 = arith.constant 0 : i32
    %c0_i32_0 = arith.constant 0 : i32
    %c0_i32_1 = arith.constant 0 : i32
    return %arg0, %c0_i32, %c0_i32_0 : i32, i32, i32
  }
  func.func @transform_1(%arg0: i32) -> (i32, i32) {
    %c0_i32 = arith.constant 0 : i32
    %c0_i32_0 = arith.constant 0 : i32
    %c0_i32_1 = arith.constant 0 : i32
    return %c0_i32, %c0_i32_0 : i32, i32
  }
  func.func @transform_2(%arg0: i32) -> (i32, i32) {
    %c0_i32 = arith.constant 0 : i32
    %c0_i32_0 = arith.constant 0 : i32
    %c0_i32_1 = arith.constant 0 : i32
    return %c0_i32, %c0_i32_0 : i32, i32
  }
  func.func @transform_3(%arg0: i32) -> (i32, i32) {
    %c0_i32 = arith.constant 0 : i32
    %c0_i32_0 = arith.constant 0 : i32
    %c0_i32_1 = arith.constant 0 : i32
    return %c0_i32, %c0_i32_0 : i32, i32
  }
  func.func @transform_4(%arg0: i32) -> (i32, i32) {
    %c0_i32 = arith.constant 0 : i32
    %c0_i32_0 = arith.constant 0 : i32
    %c0_i32_1 = arith.constant 0 : i32
    return %c0_i32, %c0_i32_0 : i32, i32
  }
  func.func @transform_5(%arg0: i32) -> (i32, i32) {
    %c0_i32 = arith.constant 0 : i32
    %c0_i32_0 = arith.constant 0 : i32
    %c0_i32_1 = arith.constant 0 : i32
    return %c0_i32, %c0_i32_0 : i32, i32
  }
  func.func @transform_6(%arg0: i32) -> (i32, i32) {
    %c0_i32 = arith.constant 0 : i32
    %c0_i32_0 = arith.constant 0 : i32
    %c0_i32_1 = arith.constant 0 : i32
    return %c0_i32, %c0_i32_0 : i32, i32
  }
  func.func @transform_7(%arg0: i32) -> (i32, i32) {
    %c0_i32 = arith.constant 0 : i32
    %c0_i32_0 = arith.constant 0 : i32
    %c0_i32_1 = arith.constant 0 : i32
    return %c0_i32, %c0_i32_0 : i32, i32
  }
  func.func @transform_8(%arg0: i32) -> (i32, i32) {
    %c0_i32 = arith.constant 0 : i32
    %c0_i32_0 = arith.constant 0 : i32
    %c0_i32_1 = arith.constant 0 : i32
    return %c0_i32, %c0_i32_0 : i32, i32
  }
  func.func @transform_9(%arg0: i32) -> (i32, i32) {
    %c0_i32 = arith.constant 0 : i32
    %c0_i32_0 = arith.constant 0 : i32
    %c0_i32_1 = arith.constant 0 : i32
    return %c0_i32, %c0_i32_0 : i32, i32
  }
  func.func @transform_10(%arg0: i32) -> (i32, i32) {
    %c0_i32 = arith.constant 0 : i32
    %c0_i32_0 = arith.constant 0 : i32
    %c0_i32_1 = arith.constant 0 : i32
    return %c0_i32, %c0_i32_0 : i32, i32
  }
  func.func @transform_11(%arg0: i32) -> (i32, i32) {
    %c0_i32 = arith.constant 0 : i32
    %c0_i32_0 = arith.constant 0 : i32
    %c0_i32_1 = arith.constant 0 : i32
    return %c0_i32, %c0_i32_0 : i32, i32
  }
  func.func @transform_12(%arg0: i32) -> (i32, i32) {
    %c0_i32 = arith.constant 0 : i32
    %c0_i32_0 = arith.constant 0 : i32
    %c0_i32_1 = arith.constant 0 : i32
    return %c0_i32, %c0_i32_0 : i32, i32
  }
}

module attributes {stable_mosaic.version = 11 : i64} {
  func.func @_matmul_kernel(%arg0: i32, %arg1: i32, %arg2: i32, %arg3: memref<32x128xbf16, #tpu.memory_space<vmem>>, %arg4: memref<128x256xbf16, #tpu.memory_space<vmem>>, %arg5: memref<32x256xf32, #tpu.memory_space<vmem>>, %arg6: memref<32x256xf32, #tpu.memory_space<vmem>>) attributes {dimension_semantics = [#tpu.dimension_semantics<parallel>, #tpu.dimension_semantics<parallel>, #tpu.dimension_semantics<arbitrary>], iteration_bounds = array<i64: 1, 1, 1>, scalar_prefetch = 0 : i64, scratch_operands = 1 : i64, tpu.core_type = #tpu.core_type<tc>, window_params = [{transform_indices = @transform_0, window_bounds = array<i64: 32, 128>}, {transform_indices = @transform_1, window_bounds = array<i64: 128, 256>}, {transform_indices = @transform_2, window_bounds = array<i64: 32, 256>}]} {
    %c0_i32 = arith.constant 0 : i32
    %0 = arith.cmpi eq, %arg2, %c0_i32 : i32
    %1 = arith.extui %0 : i1 to i32
    %c0_i32_0 = arith.constant 0 : i32
    %2 = arith.cmpi ne, %1, %c0_i32_0 : i32
    scf.if %2 {
      %cst_10 = arith.constant 0.000000e+00 : f32
      %12 = vector.broadcast %cst_10 : f32 to vector<32x256xf32>
      %c0_11 = arith.constant 0 : index
      %c0_12 = arith.constant 0 : index
      %13 = vector.load %arg6[%c0_11, %c0_12] : memref<32x256xf32, #tpu.memory_space<vmem>>, vector<32x256xf32>
      tpu.vector_store %arg6[%c0_11, %c0_12], %12 {strides = array<i32>} : memref<32x256xf32, #tpu.memory_space<vmem>>, vector<32x256xf32>,
    } else {
    }
    %c0 = arith.constant 0 : index
    %c0_1 = arith.constant 0 : index
    %3 = vector.load %arg6[%c0, %c0_1] : memref<32x256xf32, #tpu.memory_space<vmem>>, vector<32x256xf32>
    %c0_2 = arith.constant 0 : index
    %c0_3 = arith.constant 0 : index
    %4 = vector.load %arg3[%c0_2, %c0_3] : memref<32x128xbf16, #tpu.memory_space<vmem>>, vector<32x128xbf16>
    %c0_4 = arith.constant 0 : index
    %c0_5 = arith.constant 0 : index
    %5 = vector.load %arg4[%c0_4, %c0_5] : memref<128x256xbf16, #tpu.memory_space<vmem>>, vector<128x256xbf16>
    %cst = arith.constant dense<0.000000e+00> : vector<32x256xf32>
    %6 = tpu.matmul %4, %5, %cst {dimension_numbers = #tpu.dot_dimension_numbers<[1], [0], [0], [1], [0, 0, 1, 1], [], []>} : vector<32x128xbf16>, vector<128x256xbf16>, vector<32x256xf32> -> vector<32x256xf32>
    %7 = arith.addf %3, %6 : vector<32x256xf32>
    %c0_6 = arith.constant 0 : index
    %c0_7 = arith.constant 0 : index
    %8 = vector.load %arg6[%c0_6, %c0_7] : memref<32x256xf32, #tpu.memory_space<vmem>>, vector<32x256xf32>
    tpu.vector_store %arg6[%c0_6, %c0_7], %7 {strides = array<i32>} : memref<32x256xf32, #tpu.memory_space<vmem>>, vector<32x256xf32>,
    %c0_i32_8 = arith.constant 0 : i32
    %9 = arith.cmpi eq, %arg2, %c0_i32_8 : i32
    %10 = arith.extui %9 : i1 to i32
    %c0_i32_9 = arith.constant 0 : i32
    %11 = arith.cmpi ne, %10, %c0_i32_9 : i32
    scf.if %11 {
      %c0_10 = arith.constant 0 : index
      %c0_11 = arith.constant 0 : index
      %12 = vector.load %arg6[%c0_10, %c0_11] : memref<32x256xf32, #tpu.memory_space<vmem>>, vector<32x256xf32>
      %c0_12 = arith.constant 0 : index
      %c0_13 = arith.constant 0 : index
      %13 = vector.load %arg5[%c0_12, %c0_13] : memref<32x256xf32, #tpu.memory_space<vmem>>, vector<32x256xf32>
      tpu.vector_store %arg5[%c0_12, %c0_13], %12 {strides = array<i32>} : memref<32x256xf32, #tpu.memory_space<vmem>>, vector<32x256xf32>,
    } else {
    }
    return
  }
  func.func @transform_0(%arg0: i32, %arg1: i32, %arg2: i32) -> (i32, i32) {
    %c0_i32 = arith.constant 0 : i32
    return %arg0, %arg2 : i32, i32
  }
  func.func @transform_1(%arg0: i32, %arg1: i32, %arg2: i32) -> (i32, i32) {
    %c0_i32 = arith.constant 0 : i32
    return %arg2, %arg1 : i32, i32
  }
  func.func @transform_2(%arg0: i32, %arg1: i32, %arg2: i32) -> (i32, i32) {
    %c0_i32 = arith.constant 0 : i32
    return %arg0, %arg1 : i32, i32
  }
}

module attributes {stable_mosaic.version = 11 : i64} {
  func.func @_fusion_kernel(%arg0: i32, %arg1: memref<1x16x1xi32, #tpu.memory_space<vmem>>, %arg2: memref<1x16x1xi32, #tpu.memory_space<vmem>>, %arg3: memref<1x1x16xi32, #tpu.memory_space<vmem>>, %arg4: memref<1x1x16xf32, #tpu.memory_space<vmem>>, %arg5: memref<1x16x128xbf16, #tpu.memory_space<vmem>>, %arg6: memref<128x384xbf16, #tpu.memory_space<vmem>>, %arg7: memref<1x384xf32, #tpu.memory_space<vmem>>, %arg8: memref<128x128xbf16, #tpu.memory_space<vmem>>, %arg9: memref<1x128xf32, #tpu.memory_space<vmem>>, %arg10: memref<1x16x128xbf16, #tpu.memory_space<vmem>>, %arg11: memref<16x384xbf16, #tpu.memory_space<vmem>>, %arg12: memref<16x128xbf16, #tpu.memory_space<vmem>>) attributes {dimension_semantics = [#tpu.dimension_semantics<parallel>], iteration_bounds = array<i64: 2>, scalar_prefetch = 0 : i64, scratch_operands = 2 : i64, tpu.core_type = #tpu.core_type<tc>, window_params = [{transform_indices = @transform_0, window_bounds = array<i64: 1, 16, 1>}, {transform_indices = @transform_1, window_bounds = array<i64: 1, 16, 1>}, {transform_indices = @transform_2, window_bounds = array<i64: 1, 1, 16>}, {transform_indices = @transform_3, window_bounds = array<i64: 1, 1, 16>}, {transform_indices = @transform_4, window_bounds = array<i64: 1, 16, 128>}, {pipeline_mode = #tpu.pipeline_mode<synchronous>, transform_indices = @transform_5, window_bounds = array<i64: 128, 384>}, {pipeline_mode = #tpu.pipeline_mode<synchronous>, transform_indices = @transform_6, window_bounds = array<i64: 1, 384>}, {pipeline_mode = #tpu.pipeline_mode<synchronous>, transform_indices = @transform_7, window_bounds = array<i64: 128, 128>}, {pipeline_mode = #tpu.pipeline_mode<synchronous>, transform_indices = @transform_8, window_bounds = array<i64: 1, 128>}, {transform_indices = @transform_9, window_bounds = array<i64: 1, 16, 128>}]} {
    %c0 = arith.constant 0 : index
    %c0_0 = arith.constant 0 : index
    %c0_1 = arith.constant 0 : index
    %0 = vector.load %arg5[%c0, %c0_0, %c0_1] : memref<1x16x128xbf16, #tpu.memory_space<vmem>>, vector<1x16x128xbf16>
    %1 = vector.shape_cast %0 : vector<1x16x128xbf16> to vector<16x128xbf16>
    %c0_2 = arith.constant 0 : index
    %c0_3 = arith.constant 0 : index
    %2 = vector.load %arg6[%c0_2, %c0_3] : memref<128x384xbf16, #tpu.memory_space<vmem>>, vector<128x384xbf16>
    %cst = arith.constant dense<0.000000e+00> : vector<16x384xf32>
    %3 = tpu.matmul %1, %2, %cst {dimension_numbers = #tpu.dot_dimension_numbers<[1], [0], [0], [1], [0, 0, 1, 1], [], []>} : vector<16x128xbf16>, vector<128x384xbf16>, vector<16x384xf32> -> vector<16x384xf32>
    %c0_4 = arith.constant 0 : index
    %c0_5 = arith.constant 0 : index
    %4 = vector.load %arg7[%c0_4, %c0_5] : memref<1x384xf32, #tpu.memory_space<vmem>>, vector<1x384xf32>
    %5 = vector.broadcast %4 : vector<1x384xf32> to vector<16x384xf32>
    %6 = arith.addf %3, %5 : vector<16x384xf32>
    %7 = arith.truncf %6 : vector<16x384xf32> to vector<16x384xbf16>
    %c0_6 = arith.constant 0 : index
    %c0_7 = arith.constant 0 : index
    %8 = vector.load %arg11[%c0_6, %c0_7] : memref<16x384xbf16, #tpu.memory_space<vmem>>, vector<16x384xbf16>
    tpu.vector_store %arg11[%c0_6, %c0_7], %7 {strides = array<i32>} : memref<16x384xbf16, #tpu.memory_space<vmem>>, vector<16x384xbf16>,
    %c0_8 = arith.constant 0 : index
    %c0_9 = arith.constant 0 : index
    %c0_10 = arith.constant 0 : index
    %9 = vector.load %arg1[%c0_8, %c0_9, %c0_10] : memref<1x16x1xi32, #tpu.memory_space<vmem>>, vector<1x16x1xi32>
    %10 = vector.shape_cast %9 : vector<1x16x1xi32> to vector<16x1xi32>
    %c0_11 = arith.constant 0 : index
    %c0_12 = arith.constant 0 : index
    %c0_13 = arith.constant 0 : index
    %11 = vector.load %arg2[%c0_11, %c0_12, %c0_13] : memref<1x16x1xi32, #tpu.memory_space<vmem>>, vector<1x16x1xi32>
    %12 = vector.shape_cast %11 : vector<1x16x1xi32> to vector<16x1xi32>
    %c0_14 = arith.constant 0 : index
    %c0_15 = arith.constant 0 : index
    %c0_16 = arith.constant 0 : index
    %13 = vector.load %arg3[%c0_14, %c0_15, %c0_16] : memref<1x1x16xi32, #tpu.memory_space<vmem>>, vector<1x1x16xi32>
    %14 = vector.shape_cast %13 : vector<1x1x16xi32> to vector<1x16xi32>
    %c0_17 = arith.constant 0 : index
    %c0_18 = arith.constant 0 : index
    %c0_19 = arith.constant 0 : index
    %15 = vector.load %arg4[%c0_17, %c0_18, %c0_19] : memref<1x1x16xf32, #tpu.memory_space<vmem>>, vector<1x1x16xf32>
    %16 = vector.shape_cast %15 : vector<1x1x16xf32> to vector<1x16xf32>
    %17 = vector.broadcast %10 : vector<16x1xi32> to vector<16x16xi32>
    %18 = vector.broadcast %14 : vector<1x16xi32> to vector<16x16xi32>
    %19 = arith.cmpi eq, %17, %18 : vector<16x16xi32>
    %c0_i32 = arith.constant 0 : i32
    %20 = vector.broadcast %c0_i32 : i32 to vector<16x1xi32>
    %21 = arith.cmpi sge, %10, %20 : vector<16x1xi32>
    %22 = vector.broadcast %21 : vector<16x1xi1> to vector<16x16xi1>
    %23 = arith.andi %19, %22 : vector<16x16xi1>
    %cst_20 = arith.constant 1.000000e+00 : f32
    %cst_21 = arith.constant 0.000000e+00 : f32
    %24 = vector.broadcast %cst_20 : f32 to vector<16x16xf32>
    %25 = vector.broadcast %cst_21 : f32 to vector<16x16xf32>
    %26 = arith.select %23, %24, %25 : vector<16x16xi1>, vector<16x16xf32>
    %c0_i32_22 = arith.constant 0 : i32
    %27 = vector.broadcast %c0_i32_22 : i32 to vector<16x1xi32>
    %28 = arith.cmpi ne, %12, %27 : vector<16x1xi32>
    %29 = vector.shape_cast %28 : vector<16x1xi1> to vector<16x1xi1>
    %30 = vector.broadcast %29 : vector<16x1xi1> to vector<16x16xi1>
    %31 = vector.shape_cast %16 : vector<1x16xf32> to vector<1x16xf32>
    %32 = vector.broadcast %31 : vector<1x16xf32> to vector<16x16xf32>
    %33 = arith.select %30, %32, %26 : vector<16x16xi1>, vector<16x16xf32>
    %c0_23 = arith.constant 0 : index
    %c0_24 = arith.constant 0 : index
    %34 = vector.load %arg11[%c0_23, %c0_24] : memref<16x384xbf16, #tpu.memory_space<vmem>>, vector<16x32xbf16>
    %c0_25 = arith.constant 0 : index
    %c128 = arith.constant 128 : index
    %35 = vector.load %arg11[%c0_25, %c128] : memref<16x384xbf16, #tpu.memory_space<vmem>>, vector<16x32xbf16>
    %c0_26 = arith.constant 0 : index
    %c256 = arith.constant 256 : index
    %36 = vector.load %arg11[%c0_26, %c256] : memref<16x384xbf16, #tpu.memory_space<vmem>>, vector<16x32xbf16>
    %cst_27 = arith.constant dense<0.000000e+00> : vector<16x16xf32>
    %37 = tpu.matmul %34, %35, %cst_27 {dimension_numbers = #tpu.dot_dimension_numbers<[1], [1], [0], [0], [0, 0, 1, 0], [], []>} : vector<16x32xbf16>, vector<16x32xbf16>, vector<16x16xf32> -> vector<16x16xf32>
    %38 = arith.addf %37, %33 : vector<16x16xf32>
    %cst_28 = arith.constant dense<0xFF800000> : vector<16xf32>
    %39 = vector.multi_reduction <maximumf>, %38, %cst_28 [1] : vector<16x16xf32> to vector<16xf32>
    %cst_29 = arith.constant 0xFF800000 : f32
    %40 = vector.broadcast %cst_29 : f32 to vector<16xf32>
    %41 = arith.maximumf %40, %39 : vector<16xf32>
    %42 = vector.shape_cast %41 : vector<16xf32> to vector<16x1xf32>
    %43 = vector.broadcast %42 : vector<16x1xf32> to vector<16x16xf32>
    %44 = arith.subf %38, %43 : vector<16x16xf32>
    %45 = math.exp %44 : vector<16x16xf32>
    %cst_30 = arith.constant dense<0.000000e+00> : vector<16xf32>
    %46 = vector.multi_reduction <add>, %45, %cst_30 [1] : vector<16x16xf32> to vector<16xf32>
    %47 = vector.shape_cast %46 : vector<16xf32> to vector<16x1xf32>
    %48 = vector.broadcast %47 : vector<16x1xf32> to vector<16x16xf32>
    %49 = arith.divf %45, %48 : vector<16x16xf32>
    %50 = arith.truncf %49 : vector<16x16xf32> to vector<16x16xbf16>
    %cst_31 = arith.constant dense<0.000000e+00> : vector<16x32xf32>
    %51 = tpu.matmul %50, %36, %cst_31 {dimension_numbers = #tpu.dot_dimension_numbers<[1], [0], [0], [1], [0, 0, 1, 1], [], []>} : vector<16x16xbf16>, vector<16x32xbf16>, vector<16x32xf32> -> vector<16x32xf32>
    %52 = arith.truncf %51 : vector<16x32xf32> to vector<16x32xbf16>
    %c0_32 = arith.constant 0 : index
    %c0_33 = arith.constant 0 : index
    %53 = vector.load %arg12[%c0_32, %c0_33] : memref<16x128xbf16, #tpu.memory_space<vmem>>, vector<16x32xbf16>
    tpu.vector_store %arg12[%c0_32, %c0_33], %52 {strides = array<i32>} : memref<16x128xbf16, #tpu.memory_space<vmem>>, vector<16x32xbf16>,
    %c0_34 = arith.constant 0 : index
    %c32 = arith.constant 32 : index
    %54 = vector.load %arg11[%c0_34, %c32] : memref<16x384xbf16, #tpu.memory_space<vmem>>, vector<16x32xbf16>
    %c0_35 = arith.constant 0 : index
    %c160 = arith.constant 160 : index
    %55 = vector.load %arg11[%c0_35, %c160] : memref<16x384xbf16, #tpu.memory_space<vmem>>, vector<16x32xbf16>
    %c0_36 = arith.constant 0 : index
    %c288 = arith.constant 288 : index
    %56 = vector.load %arg11[%c0_36, %c288] : memref<16x384xbf16, #tpu.memory_space<vmem>>, vector<16x32xbf16>
    %cst_37 = arith.constant dense<0.000000e+00> : vector<16x16xf32>
    %57 = tpu.matmul %54, %55, %cst_37 {dimension_numbers = #tpu.dot_dimension_numbers<[1], [1], [0], [0], [0, 0, 1, 0], [], []>} : vector<16x32xbf16>, vector<16x32xbf16>, vector<16x16xf32> -> vector<16x16xf32>
    %58 = arith.addf %57, %33 : vector<16x16xf32>
    %cst_38 = arith.constant dense<0xFF800000> : vector<16xf32>
    %59 = vector.multi_reduction <maximumf>, %58, %cst_38 [1] : vector<16x16xf32> to vector<16xf32>
    %cst_39 = arith.constant 0xFF800000 : f32
    %60 = vector.broadcast %cst_39 : f32 to vector<16xf32>
    %61 = arith.maximumf %60, %59 : vector<16xf32>
    %62 = vector.shape_cast %61 : vector<16xf32> to vector<16x1xf32>
    %63 = vector.broadcast %62 : vector<16x1xf32> to vector<16x16xf32>
    %64 = arith.subf %58, %63 : vector<16x16xf32>
    %65 = math.exp %64 : vector<16x16xf32>
    %cst_40 = arith.constant dense<0.000000e+00> : vector<16xf32>
    %66 = vector.multi_reduction <add>, %65, %cst_40 [1] : vector<16x16xf32> to vector<16xf32>
    %67 = vector.shape_cast %66 : vector<16xf32> to vector<16x1xf32>
    %68 = vector.broadcast %67 : vector<16x1xf32> to vector<16x16xf32>
    %69 = arith.divf %65, %68 : vector<16x16xf32>
    %70 = arith.truncf %69 : vector<16x16xf32> to vector<16x16xbf16>
    %cst_41 = arith.constant dense<0.000000e+00> : vector<16x32xf32>
    %71 = tpu.matmul %70, %56, %cst_41 {dimension_numbers = #tpu.dot_dimension_numbers<[1], [0], [0], [1], [0, 0, 1, 1], [], []>} : vector<16x16xbf16>, vector<16x32xbf16>, vector<16x32xf32> -> vector<16x32xf32>
    %72 = arith.truncf %71 : vector<16x32xf32> to vector<16x32xbf16>
    %c0_42 = arith.constant 0 : index
    %c32_43 = arith.constant 32 : index
    %73 = vector.load %arg12[%c0_42, %c32_43] : memref<16x128xbf16, #tpu.memory_space<vmem>>, vector<16x32xbf16>
    tpu.vector_store %arg12[%c0_42, %c32_43], %72 {strides = array<i32>} : memref<16x128xbf16, #tpu.memory_space<vmem>>, vector<16x32xbf16>,
    %c0_44 = arith.constant 0 : index
    %c64 = arith.constant 64 : index
    %74 = vector.load %arg11[%c0_44, %c64] : memref<16x384xbf16, #tpu.memory_space<vmem>>, vector<16x32xbf16>
    %c0_45 = arith.constant 0 : index
    %c192 = arith.constant 192 : index
    %75 = vector.load %arg11[%c0_45, %c192] : memref<16x384xbf16, #tpu.memory_space<vmem>>, vector<16x32xbf16>
    %c0_46 = arith.constant 0 : index
    %c320 = arith.constant 320 : index
    %76 = vector.load %arg11[%c0_46, %c320] : memref<16x384xbf16, #tpu.memory_space<vmem>>, vector<16x32xbf16>
    %cst_47 = arith.constant dense<0.000000e+00> : vector<16x16xf32>
    %77 = tpu.matmul %74, %75, %cst_47 {dimension_numbers = #tpu.dot_dimension_numbers<[1], [1], [0], [0], [0, 0, 1, 0], [], []>} : vector<16x32xbf16>, vector<16x32xbf16>, vector<16x16xf32> -> vector<16x16xf32>
    %78 = arith.addf %77, %33 : vector<16x16xf32>
    %cst_48 = arith.constant dense<0xFF800000> : vector<16xf32>
    %79 = vector.multi_reduction <maximumf>, %78, %cst_48 [1] : vector<16x16xf32> to vector<16xf32>
    %cst_49 = arith.constant 0xFF800000 : f32
    %80 = vector.broadcast %cst_49 : f32 to vector<16xf32>
    %81 = arith.maximumf %80, %79 : vector<16xf32>
    %82 = vector.shape_cast %81 : vector<16xf32> to vector<16x1xf32>
    %83 = vector.broadcast %82 : vector<16x1xf32> to vector<16x16xf32>
    %84 = arith.subf %78, %83 : vector<16x16xf32>
    %85 = math.exp %84 : vector<16x16xf32>
    %cst_50 = arith.constant dense<0.000000e+00> : vector<16xf32>
    %86 = vector.multi_reduction <add>, %85, %cst_50 [1] : vector<16x16xf32> to vector<16xf32>
    %87 = vector.shape_cast %86 : vector<16xf32> to vector<16x1xf32>
    %88 = vector.broadcast %87 : vector<16x1xf32> to vector<16x16xf32>
    %89 = arith.divf %85, %88 : vector<16x16xf32>
    %90 = arith.truncf %89 : vector<16x16xf32> to vector<16x16xbf16>
    %cst_51 = arith.constant dense<0.000000e+00> : vector<16x32xf32>
    %91 = tpu.matmul %90, %76, %cst_51 {dimension_numbers = #tpu.dot_dimension_numbers<[1], [0], [0], [1], [0, 0, 1, 1], [], []>} : vector<16x16xbf16>, vector<16x32xbf16>, vector<16x32xf32> -> vector<16x32xf32>
    %92 = arith.truncf %91 : vector<16x32xf32> to vector<16x32xbf16>
    %c0_52 = arith.constant 0 : index
    %c64_53 = arith.constant 64 : index
    %93 = vector.load %arg12[%c0_52, %c64_53] : memref<16x128xbf16, #tpu.memory_space<vmem>>, vector<16x32xbf16>
    tpu.vector_store %arg12[%c0_52, %c64_53], %92 {strides = array<i32>} : memref<16x128xbf16, #tpu.memory_space<vmem>>, vector<16x32xbf16>,
    %c0_54 = arith.constant 0 : index
    %c96 = arith.constant 96 : index
    %94 = vector.load %arg11[%c0_54, %c96] : memref<16x384xbf16, #tpu.memory_space<vmem>>, vector<16x32xbf16>
    %c0_55 = arith.constant 0 : index
    %c224 = arith.constant 224 : index
    %95 = vector.load %arg11[%c0_55, %c224] : memref<16x384xbf16, #tpu.memory_space<vmem>>, vector<16x32xbf16>
    %c0_56 = arith.constant 0 : index
    %c352 = arith.constant 352 : index
    %96 = vector.load %arg11[%c0_56, %c352] : memref<16x384xbf16, #tpu.memory_space<vmem>>, vector<16x32xbf16>
    %cst_57 = arith.constant dense<0.000000e+00> : vector<16x16xf32>
    %97 = tpu.matmul %94, %95, %cst_57 {dimension_numbers = #tpu.dot_dimension_numbers<[1], [1], [0], [0], [0, 0, 1, 0], [], []>} : vector<16x32xbf16>, vector<16x32xbf16>, vector<16x16xf32> -> vector<16x16xf32>
    %98 = arith.addf %97, %33 : vector<16x16xf32>
    %cst_58 = arith.constant dense<0xFF800000> : vector<16xf32>
    %99 = vector.multi_reduction <maximumf>, %98, %cst_58 [1] : vector<16x16xf32> to vector<16xf32>
    %cst_59 = arith.constant 0xFF800000 : f32
    %100 = vector.broadcast %cst_59 : f32 to vector<16xf32>
    %101 = arith.maximumf %100, %99 : vector<16xf32>
    %102 = vector.shape_cast %101 : vector<16xf32> to vector<16x1xf32>
    %103 = vector.broadcast %102 : vector<16x1xf32> to vector<16x16xf32>
    %104 = arith.subf %98, %103 : vector<16x16xf32>
    %105 = math.exp %104 : vector<16x16xf32>
    %cst_60 = arith.constant dense<0.000000e+00> : vector<16xf32>
    %106 = vector.multi_reduction <add>, %105, %cst_60 [1] : vector<16x16xf32> to vector<16xf32>
    %107 = vector.shape_cast %106 : vector<16xf32> to vector<16x1xf32>
    %108 = vector.broadcast %107 : vector<16x1xf32> to vector<16x16xf32>
    %109 = arith.divf %105, %108 : vector<16x16xf32>
    %110 = arith.truncf %109 : vector<16x16xf32> to vector<16x16xbf16>
    %cst_61 = arith.constant dense<0.000000e+00> : vector<16x32xf32>
    %111 = tpu.matmul %110, %96, %cst_61 {dimension_numbers = #tpu.dot_dimension_numbers<[1], [0], [0], [1], [0, 0, 1, 1], [], []>} : vector<16x16xbf16>, vector<16x32xbf16>, vector<16x32xf32> -> vector<16x32xf32>
    %112 = arith.truncf %111 : vector<16x32xf32> to vector<16x32xbf16>
    %c0_62 = arith.constant 0 : index
    %c96_63 = arith.constant 96 : index
    %113 = vector.load %arg12[%c0_62, %c96_63] : memref<16x128xbf16, #tpu.memory_space<vmem>>, vector<16x32xbf16>
    tpu.vector_store %arg12[%c0_62, %c96_63], %112 {strides = array<i32>} : memref<16x128xbf16, #tpu.memory_space<vmem>>, vector<16x32xbf16>,
    %c0_64 = arith.constant 0 : index
    %c0_65 = arith.constant 0 : index
    %114 = vector.load %arg12[%c0_64, %c0_65] : memref<16x128xbf16, #tpu.memory_space<vmem>>, vector<16x128xbf16>
    %c0_66 = arith.constant 0 : index
    %c0_67 = arith.constant 0 : index
    %115 = vector.load %arg8[%c0_66, %c0_67] : memref<128x128xbf16, #tpu.memory_space<vmem>>, vector<128x128xbf16>
    %cst_68 = arith.constant dense<0.000000e+00> : vector<16x128xf32>
    %116 = tpu.matmul %114, %115, %cst_68 {dimension_numbers = #tpu.dot_dimension_numbers<[1], [0], [0], [1], [0, 0, 1, 1], [], []>} : vector<16x128xbf16>, vector<128x128xbf16>, vector<16x128xf32> -> vector<16x128xf32>
    %c0_69 = arith.constant 0 : index
    %c0_70 = arith.constant 0 : index
    %117 = vector.load %arg9[%c0_69, %c0_70] : memref<1x128xf32, #tpu.memory_space<vmem>>, vector<1x128xf32>
    %118 = vector.broadcast %117 : vector<1x128xf32> to vector<16x128xf32>
    %119 = arith.addf %116, %118 : vector<16x128xf32>
    %120 = arith.truncf %119 : vector<16x128xf32> to vector<16x128xbf16>
    %c0_71 = arith.constant 0 : index
    %c0_72 = arith.constant 0 : index
    %c0_73 = arith.constant 0 : index
    %121 = vector.load %arg10[%c0_71, %c0_72, %c0_73] : memref<1x16x128xbf16, #tpu.memory_space<vmem>>, vector<1x16x128xbf16>
    %122 = vector.shape_cast %121 : vector<1x16x128xbf16> to vector<16x128xbf16>
    %123 = vector.shape_cast %120 : vector<16x128xbf16> to vector<1x16x128xbf16>
    tpu.vector_store %arg10[%c0_71, %c0_72, %c0_73], %123 {strides = array<i32>} : memref<1x16x128xbf16, #tpu.memory_space<vmem>>, vector<1x16x128xbf16>,
    return
  }
  func.func @transform_0(%arg0: i32) -> (i32, i32, i32) {
    %c0_i32 = arith.constant 0 : i32
    %c0_i32_0 = arith.constant 0 : i32
    %c0_i32_1 = arith.constant 0 : i32
    return %arg0, %c0_i32, %c0_i32_0 : i32, i32, i32
  }
  func.func @transform_1(%arg0: i32) -> (i32, i32, i32) {
    %c0_i32 = arith.constant 0 : i32
    %c0_i32_0 = arith.constant 0 : i32
    %c0_i32_1 = arith.constant 0 : i32
    return %arg0, %c0_i32, %c0_i32_0 : i32, i32, i32
  }
  func.func @transform_2(%arg0: i32) -> (i32, i32, i32) {
    %c0_i32 = arith.constant 0 : i32
    %c0_i32_0 = arith.constant 0 : i32
    %c0_i32_1 = arith.constant 0 : i32
    return %arg0, %c0_i32, %c0_i32_0 : i32, i32, i32
  }
  func.func @transform_3(%arg0: i32) -> (i32, i32, i32) {
    %c0_i32 = arith.constant 0 : i32
    %c0_i32_0 = arith.constant 0 : i32
    %c0_i32_1 = arith.constant 0 : i32
    return %arg0, %c0_i32, %c0_i32_0 : i32, i32, i32
  }
  func.func @transform_4(%arg0: i32) -> (i32, i32, i32) {
    %c0_i32 = arith.constant 0 : i32
    %c0_i32_0 = arith.constant 0 : i32
    %c0_i32_1 = arith.constant 0 : i32
    return %arg0, %c0_i32, %c0_i32_0 : i32, i32, i32
  }
  func.func @transform_5(%arg0: i32) -> (i32, i32) {
    %c0_i32 = arith.constant 0 : i32
    %c0_i32_0 = arith.constant 0 : i32
    %c0_i32_1 = arith.constant 0 : i32
    return %c0_i32, %c0_i32_0 : i32, i32
  }
  func.func @transform_6(%arg0: i32) -> (i32, i32) {
    %c0_i32 = arith.constant 0 : i32
    %c0_i32_0 = arith.constant 0 : i32
    %c0_i32_1 = arith.constant 0 : i32
    return %c0_i32, %c0_i32_0 : i32, i32
  }
  func.func @transform_7(%arg0: i32) -> (i32, i32) {
    %c0_i32 = arith.constant 0 : i32
    %c0_i32_0 = arith.constant 0 : i32
    %c0_i32_1 = arith.constant 0 : i32
    return %c0_i32, %c0_i32_0 : i32, i32
  }
  func.func @transform_8(%arg0: i32) -> (i32, i32) {
    %c0_i32 = arith.constant 0 : i32
    %c0_i32_0 = arith.constant 0 : i32
    %c0_i32_1 = arith.constant 0 : i32
    return %c0_i32, %c0_i32_0 : i32, i32
  }
  func.func @transform_9(%arg0: i32) -> (i32, i32, i32) {
    %c0_i32 = arith.constant 0 : i32
    %c0_i32_0 = arith.constant 0 : i32
    %c0_i32_1 = arith.constant 0 : i32
    return %arg0, %c0_i32, %c0_i32_0 : i32, i32, i32
  }
}

</mosaic_0001>

<llo_original>
// kernel: llm_open_qa_forward.5
$region0: #{llm_open_qa_forward.5}
  #allocation0 [shape = 'u32[]', space=smem, size = 0x4, offset = 0x4, fixed_abs, tag = 'smem constant byte address 0x4 - core index']
  #allocation1 [shape = 'u32[144,128]{1,0:T(1,128)}', space=vmem, size = 0x12000, scoped, tag = 'internal scratch']
  #allocation2 [shape = 'f32[32,256]{1,0:T(8,128)}', space=vmem, size = 0x8000, scoped, tag = 'scratch operand']
  %s0 = inlined_call_operand.vmem [shape: bf16[32,128], index: 0, kind: input, shape index: {}]
  %s1 = inlined_call_operand.vmem [shape: bf16[128,256], index: 1, kind: input, shape index: {}]
  %s2 = inlined_call_operand.hbm [shape: f32[32,256], index: 2, kind: output, shape index: {}]
  %s3 = sld [smem:[#allocation0]]
  $region26: #{llm_open_qa_forward.5} parent=0
    _
  %s5 = ssub.s32 1, %s3
  %s6 = scalar_select 0, %s5, %s3
  $region1: #{llm_open_qa_forward.5} parent=0
    #allocation3 [shape = 'u8[32768]{0}', space=vmem, size = 0x8000, scoped, tag = 'output window, operand 0, single buffered']
    #allocation4 [shape = 's32[1]{0}', space=sflag, size = 0x4, scoped, tag = 'scoped memory for llm_open_qa_forward.5']
    %7 = vsyncpa [#allocation4], 0
    // Predicated region
    $region2: #{llm_open_qa_forward.5} parent=1 // pred_check
      _
    $region3: #{llm_open_qa_forward.5} parent=1 // pred_check_branch
      %9 = sbr.rel (0) target = $region5
    $region4: #{llm_open_qa_forward.5} parent=1 // pred_region
      _
    $region5: #{llm_open_qa_forward.5} parent=1 // pred_fallthru
      _
    // Predicated region
    $region6: #{llm_open_qa_forward.5} parent=1 // pred_check
      _
    $region7: #{llm_open_qa_forward.5} parent=1 // pred_check_branch
      %11 = sbr.rel (0) target = $region9
    $region8: #{llm_open_qa_forward.5} parent=1 // pred_region
      _
    $region9: #{llm_open_qa_forward.5} parent=1 // pred_fallthru
      _
    %p13 = scmp.eq.s32.totalorder 0, 0
    // Predicated region
    $region10: #{llm_open_qa_forward.5} parent=1 // pred_check
      %p14 = pneg %p13
    $region11: #{llm_open_qa_forward.5} parent=1 // pred_check_branch
      %16 = sbr.rel (%p14) target = $region13
    $region12: #{llm_open_qa_forward.5} parent=1 // pred_region
      %17 = vst [vmem:[#allocation2] sm:$0xff] 0.0
      %18 = vst [vmem:[#allocation2 + $0x8] sm:$0xff] 0.0
      %19 = vst [vmem:[#allocation2 + $0x10] sm:$0xff] 0.0
      %20 = vst [vmem:[#allocation2 + $0x18] sm:$0xff] 0.0
      %21 = vst [vmem:[#allocation2 + $0x20] sm:$0xff] 0.0
      %22 = vst [vmem:[#allocation2 + $0x28] sm:$0xff] 0.0
      %23 = vst [vmem:[#allocation2 + $0x30] sm:$0xff] 0.0
      %24 = vst [vmem:[#allocation2 + $0x38] sm:$0xff] 0.0
    $region13: #{llm_open_qa_forward.5} parent=1 // pred_fallthru
      _
    %v25 = vld [vmem:[#allocation2] sm:$0xff]
    %v26 = vld [vmem:[#allocation2 + $0x8] sm:$0xff]
    %v27 = vld [vmem:[#allocation2 + $0x10] sm:$0xff]
    %v28 = vld [vmem:[#allocation2 + $0x18] sm:$0xff]
    %v29 = vld [vmem:[#allocation2 + $0x20] sm:$0xff]
    %v30 = vld [vmem:[#allocation2 + $0x28] sm:$0xff]
    %v31 = vld [vmem:[#allocation2 + $0x30] sm:$0xff]
    %v32 = vld [vmem:[#allocation2 + $0x38] sm:$0xff]
    %v33 = vld [vmem:[%s0] sm:$0xf]
    %v34 = vld [vmem:[%s0 + $0x4] sm:$0xf]
    %v35 = vld [vmem:[%s0 + $0x8] sm:$0xf]
    %v36 = vld [vmem:[%s0 + $0xc] sm:$0xf]
    %v37 = vld [vmem:[%s1] sm:$0xff]
    %v38 = vld [vmem:[%s1 + $0x8] sm:$0xff]
    %v39 = vld [vmem:[%s1 + $0x10] sm:$0xff]
    %v40 = vld [vmem:[%s1 + $0x18] sm:$0xff]
    %v41 = vld [vmem:[%s1 + $0x20] sm:$0xff]
    %v42 = vld [vmem:[%s1 + $0x28] sm:$0xff]
    %v43 = vld [vmem:[%s1 + $0x30] sm:$0xff]
    %v44 = vld [vmem:[%s1 + $0x38] sm:$0xff]
    %v45 = vld [vmem:[%s1 + $0x40] sm:$0xff]
    %v46 = vld [vmem:[%s1 + $0x48] sm:$0xff]
    %v47 = vld [vmem:[%s1 + $0x50] sm:$0xff]
    %v48 = vld [vmem:[%s1 + $0x58] sm:$0xff]
    %v49 = vld [vmem:[%s1 + $0x60] sm:$0xff]
    %v50 = vld [vmem:[%s1 + $0x68] sm:$0xff]
    %v51 = vld [vmem:[%s1 + $0x70] sm:$0xff]
    %v52 = vld [vmem:[%s1 + $0x78] sm:$0xff]
    %v57 = vunpack.c.l.b16 %v33
    %v58 = vunpack.c.l.b16 %v34
    %v59 = vunpack.c.l.b16 %v35
    %v60 = vunpack.c.l.b16 %v36
    %v61 = vpack.c.b16 %v58, %v57
    %v62 = vpack.c.b16 %v60, %v59
    %v81 = vunpack.c.l.b16 %v37
    %v82 = vunpack.c.h.b16 %v37
    %v83 = vunpack.c.l.b16 %v38
    %v84 = vunpack.c.h.b16 %v38
    %v85 = vunpack.c.l.b16 %v39
    %v86 = vunpack.c.h.b16 %v39
    %v87 = vunpack.c.l.b16 %v40
    %v88 = vunpack.c.h.b16 %v40
    %v89 = vunpack.c.l.b16 %v41
    %v90 = vunpack.c.h.b16 %v41
    %v91 = vunpack.c.l.b16 %v42
    %v92 = vunpack.c.h.b16 %v42
    %v93 = vunpack.c.l.b16 %v43
    %v94 = vunpack.c.h.b16 %v43
    %v95 = vunpack.c.l.b16 %v44
    %v96 = vunpack.c.h.b16 %v44
    %v97 = vunpack.c.l.b16 %v45
    %v98 = vunpack.c.h.b16 %v45
    %v99 = vunpack.c.l.b16 %v46
    %v100 = vunpack.c.h.b16 %v46
    %v101 = vunpack.c.l.b16 %v47
    %v102 = vunpack.c.h.b16 %v47
    %v103 = vunpack.c.l.b16 %v48
    %v104 = vunpack.c.h.b16 %v48
    %v105 = vunpack.c.l.b16 %v49
    %v106 = vunpack.c.h.b16 %v49
    %v107 = vunpack.c.l.b16 %v50
    %v108 = vunpack.c.h.b16 %v50
    %v109 = vunpack.c.l.b16 %v51
    %v110 = vunpack.c.h.b16 %v51
    %v111 = vunpack.c.l.b16 %v52
    %v112 = vunpack.c.h.b16 %v52
    %v113 = vpack.c.b16 %v83, %v81
    %v114 = vpack.c.b16 %v84, %v82
    %v115 = vpack.c.b16 %v87, %v85
    %v116 = vpack.c.b16 %v88, %v86
    %v117 = vpack.c.b16 %v91, %v89
    %v118 = vpack.c.b16 %v92, %v90
    %v119 = vpack.c.b16 %v95, %v93
    %v120 = vpack.c.b16 %v96, %v94
    %v121 = vpack.c.b16 %v99, %v97
    %v122 = vpack.c.b16 %v100, %v98
    %v123 = vpack.c.b16 %v103, %v101
    %v124 = vpack.c.b16 %v104, %v102
    %v125 = vpack.c.b16 %v107, %v105
    %v126 = vpack.c.b16 %v108, %v106
    %v127 = vpack.c.b16 %v111, %v109
    %v128 = vpack.c.b16 %v112, %v110
    %145 = vmatprep.subr.bf16.mxu0 %v114
    %146 = vmatpush1.bf16.msra.mxu0 %v113
    %147 = vmatprep.subr.bf16.mxu0 %v116
    %148 = vmatpush1.bf16.msra.mxu0 %v115
    %149 = vmatprep.subr.bf16.mxu0 %v118
    %150 = vmatpush1.bf16.msra.mxu0 %v117
    %151 = vmatprep.subr.bf16.mxu0 %v120
    %152 = vmatpush1.bf16.msra.mxu0 %v119
    %153 = vmatprep.subr.bf16.mxu0 %v122
    %154 = vmatpush1.bf16.msra.mxu0 %v121
    %155 = vmatprep.subr.bf16.mxu0 %v124
    %156 = vmatpush1.bf16.msra.mxu0 %v123
    %157 = vmatprep.subr.bf16.mxu0 %v126
    %158 = vmatpush1.bf16.msra.mxu0 %v125
    %159 = vmatprep.subr.bf16.mxu0 %v128
    %160 = vmatpush1.bf16.msra.mxu0 %v127
    %161 = vmatprep.subr.bf16.mxu0 0
    %162 = vmatpush1.bf16.msra.mxu0 0
    %163 = vmatprep.subr.bf16.mxu0 0
    %164 = vmatpush1.bf16.msra.mxu0 0
    %165 = vmatprep.subr.bf16.mxu0 0
    %166 = vmatpush1.bf16.msra.mxu0 0
    %167 = vmatprep.subr.bf16.mxu0 0
    %168 = vmatpush1.bf16.msra.mxu0 0
    %169 = vmatprep.subr.bf16.mxu0 0
    %170 = vmatpush1.bf16.msra.mxu0 0
    %171 = vmatprep.subr.bf16.mxu0 0
    %172 = vmatpush1.bf16.msra.mxu0 0
    %173 = vmatprep.subr.bf16.mxu0 0
    %174 = vmatpush1.bf16.msra.mxu0 0
    %175 = vmatprep.subr.bf16.mxu0 0
    %176 = vmatpush1.bf16.msra.mxu0 0
    %177 = vmatprep.mubr.bf16.mxu0 0
    %178 = vmatmul.mubr.bf16.gmra.mrb[0].mxu0 %v61
    %v179 = vpop.f32.mrb[0].mxu0
    %v180 = vadd.f32 0.0, %v179
    %v181 = vpop.f32.mrb[0].mxu0
    %v182 = vadd.f32 0.0, %v181
    %v183 = vpop.f32.mrb[0].mxu0
    %v184 = vadd.f32 0.0, %v183
    %v185 = vpop.f32.mrb[0].mxu0
    %v186 = vadd.f32 0.0, %v185
    %187 = vmatprep.mubr.bf16.mxu0 0
    %188 = vmatmul.mubr.bf16.gmra.mrb[0].mxu0 %v62
    %v189 = vpop.f32.mrb[0].mxu0
    %v190 = vadd.f32 0.0, %v189
    %v191 = vpop.f32.mrb[0].mxu0
    %v192 = vadd.f32 0.0, %v191
    %v193 = vpop.f32.mrb[0].mxu0
    %v194 = vadd.f32 0.0, %v193
    %v195 = vpop.f32.mrb[0].mxu0
    %v196 = vadd.f32 0.0, %v195
    %197 = vdwg.mxu0
    %v198 = vadd.f32 %v25, %v180
    %v199 = vadd.f32 %v26, %v182
    %v200 = vadd.f32 %v27, %v184
    %v201 = vadd.f32 %v28, %v186
    %v202 = vadd.f32 %v29, %v190
    %v203 = vadd.f32 %v30, %v192
    %v204 = vadd.f32 %v31, %v194
    %v205 = vadd.f32 %v32, %v196
    %206 = vst [vmem:[#allocation2] sm:$0xff] %v198
    %207 = vst [vmem:[#allocation2 + $0x8] sm:$0xff] %v199
    %208 = vst [vmem:[#allocation2 + $0x10] sm:$0xff] %v200
    %209 = vst [vmem:[#allocation2 + $0x18] sm:$0xff] %v201
    %210 = vst [vmem:[#allocation2 + $0x20] sm:$0xff] %v202
    %211 = vst [vmem:[#allocation2 + $0x28] sm:$0xff] %v203
    %212 = vst [vmem:[#allocation2 + $0x30] sm:$0xff] %v204
    %213 = vst [vmem:[#allocation2 + $0x38] sm:$0xff] %v205
    // Predicated region
    $region14: #{llm_open_qa_forward.5} parent=1 // pred_check
      %p214 = pneg %p13
    $region15: #{llm_open_qa_forward.5} parent=1 // pred_check_branch
      %216 = sbr.rel (%p214) target = $region17
    $region16: #{llm_open_qa_forward.5} parent=1 // pred_region
      %v217 = vld [vmem:[#allocation2] sm:$0xff]
      %v218 = vld [vmem:[#allocation2 + $0x8] sm:$0xff]
      %v219 = vld [vmem:[#allocation2 + $0x10] sm:$0xff]
      %v220 = vld [vmem:[#allocation2 + $0x18] sm:$0xff]
      %v221 = vld [vmem:[#allocation2 + $0x20] sm:$0xff]
      %v222 = vld [vmem:[#allocation2 + $0x28] sm:$0xff]
      %v223 = vld [vmem:[#allocation2 + $0x30] sm:$0xff]
      %v224 = vld [vmem:[#allocation2 + $0x38] sm:$0xff]
      %225 = vst [vmem:[#allocation3] sm:$0xff] %v217
      %226 = vst [vmem:[#allocation3 + $0x8] sm:$0xff] %v218
      %227 = vst [vmem:[#allocation3 + $0x10] sm:$0xff] %v219
      %228 = vst [vmem:[#allocation3 + $0x18] sm:$0xff] %v220
      %229 = vst [vmem:[#allocation3 + $0x20] sm:$0xff] %v221
      %230 = vst [vmem:[#allocation3 + $0x28] sm:$0xff] %v222
      %231 = vst [vmem:[#allocation3 + $0x30] sm:$0xff] %v223
      %232 = vst [vmem:[#allocation3 + $0x38] sm:$0xff] %v224
    $region17: #{llm_open_qa_forward.5} parent=1 // pred_fallthru
      _
    // Predicated region
    $region18: #{llm_open_qa_forward.5} parent=1 // pred_check
      _
    $region19: #{llm_open_qa_forward.5} parent=1 // pred_check_branch
      %234 = sbr.rel (0) target = $region21
    $region20: #{llm_open_qa_forward.5} parent=1 // pred_region
      %s236 = ssub.s32 1024, 1024
      %237 = vsyncadd [#allocation4], %s236
      %s238 = sshll.u32 [#allocation3], 4
      %s239 = int_to_ptr.vmem [resolvable:$true] %s238
      %244 = dma.vmem_to_hbm [thread:$0]  %s239, 1024, %s2, [#allocation4], 256, 256, 16
    $region21: #{llm_open_qa_forward.5} parent=1 // pred_fallthru
      _
    // Predicated region
    $region22: #{llm_open_qa_forward.5} parent=1 // pred_check
      _
    $region23: #{llm_open_qa_forward.5} parent=1 // pred_check_branch
      %246 = sbr.rel (0) target = $region25
    $region24: #{llm_open_qa_forward.5} parent=1 // pred_region
      %247 = dma.done [#allocation4], 1024
    $region25: #{llm_open_qa_forward.5} parent=1 // pred_fallthru
      _
    %248 = vsyncpa [#allocation4], 1

// kernel: llm_open_qa_forward.4
$region0: #{llm_open_qa_forward.4}
  #allocation0 [shape = 'u32[]', space=smem, size = 0x4, offset = 0x4, fixed_abs, tag = 'smem constant byte address 0x4 - core index']
  #allocation1 [shape = 'u32[144,128]{1,0:T(1,128)}', space=vmem, size = 0x12000, scoped, tag = 'internal scratch']
  #allocation2 [shape = 'bf16[16,384]{1,0:T(16,128)(2,1)}', space=vmem, size = 0x3000, scoped, tag = 'scratch operand']
  #allocation3 [shape = 'bf16[16,128]{1,0:T(16,128)(2,1)}', space=vmem, size = 0x1000, scoped, tag = 'scratch operand']
  %s0 = inlined_call_operand.vmem [shape: s32[2,16,1], index: 0, kind: input, shape index: {}]
  %s1 = inlined_call_operand.vmem [shape: s32[2,16,1], index: 1, kind: input, shape index: {}]
  %s2 = inlined_call_operand.vmem [shape: s32[2,1,16], index: 2, kind: input, shape index: {}]
  %s3 = inlined_call_operand.vmem [shape: f32[2,1,16], index: 3, kind: input, shape index: {}]
  %s4 = inlined_call_operand.vmem [shape: bf16[2,16,128], index: 4, kind: input, shape index: {}]
  %s5 = inlined_call_operand.vmem [shape: bf16[128,384], index: 5, kind: input, shape index: {}]
  %s6 = inlined_call_operand.vmem [shape: f32[1,384], index: 6, kind: input, shape index: {}]
  %s7 = inlined_call_operand.vmem [shape: bf16[128,128], index: 7, kind: input, shape index: {}]
  %s8 = inlined_call_operand.vmem [shape: f32[1,128], index: 8, kind: input, shape index: {}]
  %s9 = inlined_call_operand.vmem [shape: bf16[2,16,128], index: 9, kind: output, shape index: {}]
  %s10 = sld [smem:[#allocation0]]
  $region69: #{llm_open_qa_forward.4} parent=0
    _
  %s12 = ssub.s32 1, %s10
  %s13 = scalar_select 0, %s12, %s10
  loop: start=0, step=1, limit=4
  $region2: #{llm_open_qa_forward.4} parent=0 // loop_pre_header
    _
  $region3: #{llm_open_qa_forward.4} parent=0 // loop_header
    %s15 = sphi 0, %s19
    %p16 = scmp.ge.s32.totalorder %s15, 4
    %s25 = sphi 0, %s27
    %s28 = sphi 0, %s25
    %s29 = sphi 0, %s28
    %s45 = sphi 0, %s29
    %s51 = sphi 0, %s53
    %s54 = sphi 0, %s51
    %s55 = sphi 0, %s54
    %s71 = sphi 0, %s55
    %s77 = sphi 0, %s79
    %s80 = sphi 0, %s77
    %s81 = sphi 0, %s80
    %s97 = sphi 0, %s81
    %s103 = sphi 0, %s105
    %s106 = sphi 0, %s103
    %s107 = sphi 0, %s106
    %s123 = sphi 0, %s107
    %s129 = sphi 0, %s131
    %s132 = sphi 0, %s129
    %s133 = sphi 0, %s132
    %s149 = sphi 0, %s133
    %s153 = sphi 0, %s153
    %s155 = sphi 0, %s153
    %s156 = sphi 0, %s155
    %s170 = sphi 0, %s156
    %s174 = sphi 0, %s174
    %s176 = sphi 0, %s174
    %s177 = sphi 0, %s176
    %s191 = sphi 0, %s177
    %s195 = sphi 0, %s195
    %s197 = sphi 0, %s195
    %s198 = sphi 0, %s197
    %s212 = sphi 0, %s198
    %s216 = sphi 0, %s216
    %s218 = sphi 0, %s216
    %s219 = sphi 0, %s218
    %s233 = sphi 0, %s219
    %s239 = sphi 0, %s241
    %s242 = sphi 0, %s239
    %s243 = sphi 0, %s242
    %s259 = sphi 0, %s243
  $region4: #{llm_open_qa_forward.4} parent=0 // loop_header_branch
    %18 = sbr.rel (%p16) target = $region8
  $region5: #{llm_open_qa_forward.4} parent=0 // loop_body
    %s20 = ssub.s32 %s15, 1
    %s21 = ssub.s32 %s15, 2
    %s22 = sadd.s32 %s15, 1
    %s23 = ssub.s32 %s15, %s22
    %p24 = scmp.eq.s32.totalorder %s23, 0
    %s26 = sadd.s32 %s25, 1
    %s27 = scalar_select %p24, %s25, %s26
    %p30 = pneg %p24
    %p31 = scmp.eq.s32.totalorder %s15, 1
    %p32 = por %p30, %p31
    %p33 = scmp.ne.s32.totalorder %s25, %s28
    %p34 = scmp.eq.s32.totalorder %s15, 0
    %p35 = por %p33, %p34
    %p36 = scmp.ne.s32.totalorder %s25, %s28
    %p37 = scmp.eq.s32.totalorder %s20, 1
    %p38 = por %p36, %p37
    %p39 = scmp.ne.s32.totalorder %s28, %s29
    %p40 = scmp.eq.s32.totalorder %s20, 0
    %p41 = por %p39, %p40
    %p42 = scmp.ne.s32.totalorder %s28, %s29
    %p43 = scmp.eq.s32.totalorder %s21, 1
    %p44 = por %p42, %p43
    %p46 = scmp.ne.s32.totalorder %s29, %s45
    %p47 = scmp.eq.s32.totalorder %s21, 0
    %p48 = por %p46, %p47
    %s49 = ssub.s32 %s15, %s22
    %p50 = scmp.eq.s32.totalorder %s49, 0
    %s52 = sadd.s32 %s51, 1
    %s53 = scalar_select %p50, %s51, %s52
    %p56 = pneg %p50
    %p57 = scmp.eq.s32.totalorder %s15, 1
    %p58 = por %p56, %p57
    %p59 = scmp.ne.s32.totalorder %s51, %s54
    %p60 = scmp.eq.s32.totalorder %s15, 0
    %p61 = por %p59, %p60
    %p62 = scmp.ne.s32.totalorder %s51, %s54
    %p63 = scmp.eq.s32.totalorder %s20, 1
    %p64 = por %p62, %p63
    %p65 = scmp.ne.s32.totalorder %s54, %s55
    %p66 = scmp.eq.s32.totalorder %s20, 0
    %p67 = por %p65, %p66
    %p68 = scmp.ne.s32.totalorder %s54, %s55
    %p69 = scmp.eq.s32.totalorder %s21, 1
    %p70 = por %p68, %p69
    %p72 = scmp.ne.s32.totalorder %s55, %s71
    %p73 = scmp.eq.s32.totalorder %s21, 0
    %p74 = por %p72, %p73
    %s75 = ssub.s32 %s15, %s22
    %p76 = scmp.eq.s32.totalorder %s75, 0
    %s78 = sadd.s32 %s77, 1
    %s79 = scalar_select %p76, %s77, %s78
    %p82 = pneg %p76
    %p83 = scmp.eq.s32.totalorder %s15, 1
    %p84 = por %p82, %p83
    %p85 = scmp.ne.s32.totalorder %s77, %s80
    %p86 = scmp.eq.s32.totalorder %s15, 0
    %p87 = por %p85, %p86
    %p88 = scmp.ne.s32.totalorder %s77, %s80
    %p89 = scmp.eq.s32.totalorder %s20, 1
    %p90 = por %p88, %p89
    %p91 = scmp.ne.s32.totalorder %s80, %s81
    %p92 = scmp.eq.s32.totalorder %s20, 0
    %p93 = por %p91, %p92
    %p94 = scmp.ne.s32.totalorder %s80, %s81
    %p95 = scmp.eq.s32.totalorder %s21, 1
    %p96 = por %p94, %p95
    %p98 = scmp.ne.s32.totalorder %s81, %s97
    %p99 = scmp.eq.s32.totalorder %s21, 0
    %p100 = por %p98, %p99
    %s101 = ssub.s32 %s15, %s22
    %p102 = scmp.eq.s32.totalorder %s101, 0
    %s104 = sadd.s32 %s103, 1
    %s105 = scalar_select %p102, %s103, %s104
    %p108 = pneg %p102
    %p109 = scmp.eq.s32.totalorder %s15, 1
    %p110 = por %p108, %p109
    %p111 = scmp.ne.s32.totalorder %s103, %s106
    %p112 = scmp.eq.s32.totalorder %s15, 0
    %p113 = por %p111, %p112
    %p114 = scmp.ne.s32.totalorder %s103, %s106
    %p115 = scmp.eq.s32.totalorder %s20, 1
    %p116 = por %p114, %p115
    %p117 = scmp.ne.s32.totalorder %s106, %s107
    %p118 = scmp.eq.s32.totalorder %s20, 0
    %p119 = por %p117, %p118
    %p120 = scmp.ne.s32.totalorder %s106, %s107
    %p121 = scmp.eq.s32.totalorder %s21, 1
    %p122 = por %p120, %p121
    %p124 = scmp.ne.s32.totalorder %s107, %s123
    %p125 = scmp.eq.s32.totalorder %s21, 0
    %p126 = por %p124, %p125
    %s127 = ssub.s32 %s15, %s22
    %p128 = scmp.eq.s32.totalorder %s127, 0
    %s130 = sadd.s32 %s129, 1
    %s131 = scalar_select %p128, %s129, %s130
    %p134 = pneg %p128
    %p135 = scmp.eq.s32.totalorder %s15, 1
    %p136 = por %p134, %p135
    %p137 = scmp.ne.s32.totalorder %s129, %s132
    %p138 = scmp.eq.s32.totalorder %s15, 0
    %p139 = por %p137, %p138
    %p140 = scmp.ne.s32.totalorder %s129, %s132
    %p141 = scmp.eq.s32.totalorder %s20, 1
    %p142 = por %p140, %p141
    %p143 = scmp.ne.s32.totalorder %s132, %s133
    %p144 = scmp.eq.s32.totalorder %s20, 0
    %p145 = por %p143, %p144
    %p146 = scmp.ne.s32.totalorder %s132, %s133
    %p147 = scmp.eq.s32.totalorder %s21, 1
    %p148 = por %p146, %p147
    %p150 = scmp.ne.s32.totalorder %s133, %s149
    %p151 = scmp.eq.s32.totalorder %s21, 0
    %p152 = por %p150, %p151
    %s154 = sadd.s32 %s153, 1
    %p157 = scmp.eq.s32.totalorder %s15, 1
    %p158 = scmp.ne.s32.totalorder %s153, %s155
    %p159 = scmp.eq.s32.totalorder %s15, 0
    %p160 = por %p158, %p159
    %p161 = scmp.ne.s32.totalorder %s153, %s155
    %p162 = scmp.eq.s32.totalorder %s20, 1
    %p163 = por %p161, %p162
    %p164 = scmp.ne.s32.totalorder %s155, %s156
    %p165 = scmp.eq.s32.totalorder %s20, 0
    %p166 = por %p164, %p165
    %p167 = scmp.ne.s32.totalorder %s155, %s156
    %p168 = scmp.eq.s32.totalorder %s21, 1
    %p169 = por %p167, %p168
    %p171 = scmp.ne.s32.totalorder %s156, %s170
    %p172 = scmp.eq.s32.totalorder %s21, 0
    %p173 = por %p171, %p172
    %s175 = sadd.s32 %s174, 1
    %p178 = scmp.eq.s32.totalorder %s15, 1
    %p179 = scmp.ne.s32.totalorder %s174, %s176
    %p180 = scmp.eq.s32.totalorder %s15, 0
    %p181 = por %p179, %p180
    %p182 = scmp.ne.s32.totalorder %s174, %s176
    %p183 = scmp.eq.s32.totalorder %s20, 1
    %p184 = por %p182, %p183
    %p185 = scmp.ne.s32.totalorder %s176, %s177
    %p186 = scmp.eq.s32.totalorder %s20, 0
    %p187 = por %p185, %p186
    %p188 = scmp.ne.s32.totalorder %s176, %s177
    %p189 = scmp.eq.s32.totalorder %s21, 1
    %p190 = por %p188, %p189
    %p192 = scmp.ne.s32.totalorder %s177, %s191
    %p193 = scmp.eq.s32.totalorder %s21, 0
    %p194 = por %p192, %p193
    %s196 = sadd.s32 %s195, 1
    %p199 = scmp.eq.s32.totalorder %s15, 1
    %p200 = scmp.ne.s32.totalorder %s195, %s197
    %p201 = scmp.eq.s32.totalorder %s15, 0
    %p202 = por %p200, %p201
    %p203 = scmp.ne.s32.totalorder %s195, %s197
    %p204 = scmp.eq.s32.totalorder %s20, 1
    %p205 = por %p203, %p204
    %p206 = scmp.ne.s32.totalorder %s197, %s198
    %p207 = scmp.eq.s32.totalorder %s20, 0
    %p208 = por %p206, %p207
    %p209 = scmp.ne.s32.totalorder %s197, %s198
    %p210 = scmp.eq.s32.totalorder %s21, 1
    %p211 = por %p209, %p210
    %p213 = scmp.ne.s32.totalorder %s198, %s212
    %p214 = scmp.eq.s32.totalorder %s21, 0
    %p215 = por %p213, %p214
    %s217 = sadd.s32 %s216, 1
    %p220 = scmp.eq.s32.totalorder %s15, 1
    %p221 = scmp.ne.s32.totalorder %s216, %s218
    %p222 = scmp.eq.s32.totalorder %s15, 0
    %p223 = por %p221, %p222
    %p224 = scmp.ne.s32.totalorder %s216, %s218
    %p225 = scmp.eq.s32.totalorder %s20, 1
    %p226 = por %p224, %p225
    %p227 = scmp.ne.s32.totalorder %s218, %s219
    %p228 = scmp.eq.s32.totalorder %s20, 0
    %p229 = por %p227, %p228
    %p230 = scmp.ne.s32.totalorder %s218, %s219
    %p231 = scmp.eq.s32.totalorder %s21, 1
    %p232 = por %p230, %p231
    %p234 = scmp.ne.s32.totalorder %s219, %s233
    %p235 = scmp.eq.s32.totalorder %s21, 0
    %p236 = por %p234, %p235
    %s237 = ssub.s32 %s15, %s22
    %p238 = scmp.eq.s32.totalorder %s237, 0
    %s240 = sadd.s32 %s239, 1
    %s241 = scalar_select %p238, %s239, %s240
    %p244 = pneg %p238
    %p245 = scmp.eq.s32.totalorder %s15, 1
    %p246 = por %p244, %p245
    %p247 = scmp.ne.s32.totalorder %s239, %s242
    %p248 = scmp.eq.s32.totalorder %s15, 0
    %p249 = por %p247, %p248
    %p250 = scmp.ne.s32.totalorder %s239, %s242
    %p251 = scmp.eq.s32.totalorder %s20, 1
    %p252 = por %p250, %p251
    %p253 = scmp.ne.s32.totalorder %s242, %s243
    %p254 = scmp.eq.s32.totalorder %s20, 0
    %p255 = por %p253, %p254
    %p256 = scmp.ne.s32.totalorder %s242, %s243
    %p257 = scmp.eq.s32.totalorder %s21, 1
    %p258 = por %p256, %p257
    %p260 = scmp.ne.s32.totalorder %s243, %s259
    %p261 = scmp.eq.s32.totalorder %s21, 0
    %p262 = por %p260, %p261
    %p263 = scmp.le.s32.totalorder 1, %s15
    %p264 = scmp.lt.s32.totalorder %s15, 3
    %p265 = pnand %p263, %p264
    %p266 = pneg %p265
    // Predicated region
    $region9: #{llm_open_qa_forward.4} parent=5 // pred_check
      _
    $region10: #{llm_open_qa_forward.4} parent=5 // pred_check_branch
      %268 = sbr.rel (%p265) target = $region12
    $region11: #{llm_open_qa_forward.4} parent=5 // pred_region
      %s269 = ssub.s32 %s15, 1
      // Predicated region
      $region13: #{llm_open_qa_forward.4} parent=11 // pred_check
        %p270 = pneg %p166
      $region14: #{llm_open_qa_forward.4} parent=11 // pred_check_branch
        %272 = sbr.rel (%p270) target = $region16
      $region15: #{llm_open_qa_forward.4} parent=11 // pred_region
        _
      $region16: #{llm_open_qa_forward.4} parent=11 // pred_fallthru
        _
      // Predicated region
      $region17: #{llm_open_qa_forward.4} parent=11 // pred_check
        %p273 = pneg %p187
      $region18: #{llm_open_qa_forward.4} parent=11 // pred_check_branch
        %275 = sbr.rel (%p273) target = $region20
      $region19: #{llm_open_qa_forward.4} parent=11 // pred_region
        _
      $region20: #{llm_open_qa_forward.4} parent=11 // pred_fallthru
        _
      // Predicated region
      $region21: #{llm_open_qa_forward.4} parent=11 // pred_check
        %p276 = pneg %p208
      $region22: #{llm_open_qa_forward.4} parent=11 // pred_check_branch
        %278 = sbr.rel (%p276) target = $region24
      $region23: #{llm_open_qa_forward.4} parent=11 // pred_region
        _
      $region24: #{llm_open_qa_forward.4} parent=11 // pred_fallthru
        _
      // Predicated region
      $region25: #{llm_open_qa_forward.4} parent=11 // pred_check
        %p279 = pneg %p229
      $region26: #{llm_open_qa_forward.4} parent=11 // pred_check_branch
        %281 = sbr.rel (%p279) target = $region28
      $region27: #{llm_open_qa_forward.4} parent=11 // pred_region
        _
      $region28: #{llm_open_qa_forward.4} parent=11 // pred_fallthru
        _
    $region12: #{llm_open_qa_forward.4} parent=5 // pred_fallthru
      _
    %p282 = scmp.lt.s32.totalorder %s15, 2
    // Predicated region
    $region29: #{llm_open_qa_forward.4} parent=5 // pred_check
      %p283 = pneg %p282
    $region30: #{llm_open_qa_forward.4} parent=5 // pred_check_branch
      %285 = sbr.rel (%p283) target = $region32
    $region31: #{llm_open_qa_forward.4} parent=5 // pred_region
      // Predicated region
      $region33: #{llm_open_qa_forward.4} parent=31 // pred_check
        %p286 = pneg %p35
      $region34: #{llm_open_qa_forward.4} parent=31 // pred_check_branch
        %288 = sbr.rel (%p286) target = $region36
      $region35: #{llm_open_qa_forward.4} parent=31 // pred_region
        %p289 = scmp.lt.s32.totalorder %s15, 1
        %s290 = scalar_select %p289, %s15, 1
        %s291 = smul.addr %s290, 2
        %s292 = smul.addr %s291, 8
        %s293 = scalar_lea.vmem %s0, %s292
      $region36: #{llm_open_qa_forward.4} parent=31 // pred_fallthru
        _
      // Predicated region
      $region37: #{llm_open_qa_forward.4} parent=31 // pred_check
        %p294 = pneg %p61
      $region38: #{llm_open_qa_forward.4} parent=31 // pred_check_branch
        %296 = sbr.rel (%p294) target = $region40
      $region39: #{llm_open_qa_forward.4} parent=31 // pred_region
        %p297 = scmp.lt.s32.totalorder %s15, 1
        %s298 = scalar_select %p297, %s15, 1
        %s299 = smul.addr %s298, 2
        %s300 = smul.addr %s299, 8
        %s301 = scalar_lea.vmem %s1, %s300
      $region40: #{llm_open_qa_forward.4} parent=31 // pred_fallthru
        _
      // Predicated region
      $region41: #{llm_open_qa_forward.4} parent=31 // pred_check
        %p302 = pneg %p87
      $region42: #{llm_open_qa_forward.4} parent=31 // pred_check_branch
        %304 = sbr.rel (%p302) target = $region44
      $region43: #{llm_open_qa_forward.4} parent=31 // pred_region
        %p305 = scmp.lt.s32.totalorder %s15, 1
        %s306 = scalar_select %p305, %s15, 1
        %s307 = scalar_lea.vmem %s2, %s306
      $region44: #{llm_open_qa_forward.4} parent=31 // pred_fallthru
        _
      // Predicated region
      $region45: #{llm_open_qa_forward.4} parent=31 // pred_check
        %p308 = pneg %p113
      $region46: #{llm_open_qa_forward.4} parent=31 // pred_check_branch
        %310 = sbr.rel (%p308) target = $region48
      $region47: #{llm_open_qa_forward.4} parent=31 // pred_region
        %p311 = scmp.lt.s32.totalorder %s15, 1
        %s312 = scalar_select %p311, %s15, 1
        %s313 = scalar_lea.vmem %s3, %s312
      $region48: #{llm_open_qa_forward.4} parent=31 // pred_fallthru
        _
      // Predicated region
      $region49: #{llm_open_qa_forward.4} parent=31 // pred_check
        %p314 = pneg %p139
      $region50: #{llm_open_qa_forward.4} parent=31 // pred_check_branch
        %316 = sbr.rel (%p314) target = $region52
      $region51: #{llm_open_qa_forward.4} parent=31 // pred_region
        %p317 = scmp.lt.s32.totalorder %s15, 1
        %s318 = scalar_select %p317, %s15, 1
        %s319 = smul.addr %s318, 2
        %s320 = smul.addr %s319, 4
        %s321 = scalar_lea.vmem %s4, %s320
      $region52: #{llm_open_qa_forward.4} parent=31 // pred_fallthru
        _
    $region32: #{llm_open_qa_forward.4} parent=5 // pred_fallthru
      _
    %p322 = scmp.le.s32.totalorder 1, %s15
    %p323 = scmp.lt.s32.totalorder %s15, 3
    %p324 = pnand %p322, %p323
    %p325 = pneg %p324
    // Predicated region
    $region53: #{llm_open_qa_forward.4} parent=5 // pred_check
      _
    $region54: #{llm_open_qa_forward.4} parent=5 // pred_check_branch
      %327 = sbr.rel (%p324) target = $region56
    $region55: #{llm_open_qa_forward.4} parent=5 // pred_region
      %s328 = ssub.s32 %s15, 1
      %p329 = scmp.lt.s32.totalorder %s20, 1
      %s330 = scalar_select %p329, %s20, 1
      %s331 = smul.addr %s330, 2
      %s332 = smul.addr %s331, 8
      %s333 = scalar_lea.vmem %s0, %s332
      %p334 = pneg %p41
      %p335 = pneg %p38
      %p336 = scmp.lt.s32.totalorder %s20, 1
      %s337 = scalar_select %p336, %s20, 1
      %s338 = smul.addr %s337, 2
      %s339 = smul.addr %s338, 8
      %s340 = scalar_lea.vmem %s1, %s339
      %p341 = pneg %p67
      %p342 = pneg %p64
      %p343 = scmp.lt.s32.totalorder %s20, 1
      %s344 = scalar_select %p343, %s20, 1
      %s345 = scalar_lea.vmem %s2, %s344
      %p346 = pneg %p93
      %p347 = pneg %p90
      %p348 = scmp.lt.s32.totalorder %s20, 1
      %s349 = scalar_select %p348, %s20, 1
      %s350 = scalar_lea.vmem %s3, %s349
      %p351 = pneg %p119
      %p352 = pneg %p116
      %p353 = scmp.lt.s32.totalorder %s20, 1
      %s354 = scalar_select %p353, %s20, 1
      %s355 = smul.addr %s354, 2
      %s356 = smul.addr %s355, 4
      %s357 = scalar_lea.vmem %s4, %s356
      %p358 = pneg %p145
      %p359 = pneg %p142
      %p360 = pneg %p166
      %p361 = pneg %p163
      %p362 = pneg %p187
      %p363 = pneg %p184
      %p364 = pneg %p208
      %p365 = pneg %p205
      %p366 = pneg %p229
      %p367 = pneg %p226
      %p368 = pneg %p255
      %p369 = pneg %p252
      %p370 = scmp.lt.s32.totalorder %s20, 1
      %s371 = scalar_select %p370, %s20, 1
      %s372 = smul.addr %s371, 2
      %s373 = smul.addr %s372, 4
      %s374 = scalar_lea.vmem %s9, %s373
      %p375 = scmp.lt.s32.totalorder %s20, 1
      %s376 = scalar_select %p375, %s20, 1
      %s377 = smul.addr %s376, 2
      %s378 = smul.addr %s377, 8
      %s379 = scalar_lea.vmem %s0, %s378
      %p380 = scmp.lt.s32.totalorder %s20, 1
      %s381 = scalar_select %p380, %s20, 1
      %s382 = smul.addr %s381, 2
      %s383 = smul.addr %s382, 8
      %s384 = scalar_lea.vmem %s1, %s383
      %p385 = scmp.lt.s32.totalorder %s20, 1
      %s386 = scalar_select %p385, %s20, 1
      %s387 = scalar_lea.vmem %s2, %s386
      %p388 = scmp.lt.s32.totalorder %s20, 1
      %s389 = scalar_select %p388, %s20, 1
      %s390 = scalar_lea.vmem %s3, %s389
      %p391 = scmp.lt.s32.totalorder %s20, 1
      %s392 = scalar_select %p391, %s20, 1
      %s393 = smul.addr %s392, 2
      %s394 = smul.addr %s393, 4
      %s395 = scalar_lea.vmem %s4, %s394
      %p396 = scmp.lt.s32.totalorder %s20, 1
      %s397 = scalar_select %p396, %s20, 1
      %s398 = smul.addr %s397, 2
      %s399 = smul.addr %s398, 4
      %s400 = scalar_lea.vmem %s9, %s399
      %v402 = vld [vmem:[%s395] sm:$0xf]
      %v403 = vld [vmem:[%s395 + $0x4] sm:$0xf]
      %v404 = vld [vmem:[%s5] sm:$0xff]
      %v405 = vld [vmem:[%s5 + $0x8] sm:$0xf]
      %v406 = vld [vmem:[%s5 + $0xc] sm:$0xff]
      %v407 = vld [vmem:[%s5 + $0x14] sm:$0xf]
      %v408 = vld [vmem:[%s5 + $0x18] sm:$0xff]
      %v409 = vld [vmem:[%s5 + $0x20] sm:$0xf]
      %v410 = vld [vmem:[%s5 + $0x24] sm:$0xff]
      %v411 = vld [vmem:[%s5 + $0x2c] sm:$0xf]
      %v412 = vld [vmem:[%s5 + $0x30] sm:$0xff]
      %v413 = vld [vmem:[%s5 + $0x38] sm:$0xf]
      %v414 = vld [vmem:[%s5 + $0x3c] sm:$0xff]
      %v415 = vld [vmem:[%s5 + $0x44] sm:$0xf]
      %v416 = vld [vmem:[%s5 + $0x48] sm:$0xff]
      %v417 = vld [vmem:[%s5 + $0x50] sm:$0xf]
      %v418 = vld [vmem:[%s5 + $0x54] sm:$0xff]
      %v419 = vld [vmem:[%s5 + $0x5c] sm:$0xf]
      %v420 = vld [vmem:[%s5 + $0x60] sm:$0xff]
      %v421 = vld [vmem:[%s5 + $0x68] sm:$0xf]
      %v422 = vld [vmem:[%s5 + $0x6c] sm:$0xff]
      %v423 = vld [vmem:[%s5 + $0x74] sm:$0xf]
      %v424 = vld [vmem:[%s5 + $0x78] sm:$0xff]
      %v425 = vld [vmem:[%s5 + $0x80] sm:$0xf]
      %v426 = vld [vmem:[%s5 + $0x84] sm:$0xff]
      %v427 = vld [vmem:[%s5 + $0x8c] sm:$0xf]
      %v428 = vld [vmem:[%s5 + $0x90] sm:$0xff]
      %v429 = vld [vmem:[%s5 + $0x98] sm:$0xf]
      %v430 = vld [vmem:[%s5 + $0x9c] sm:$0xff]
      %v431 = vld [vmem:[%s5 + $0xa4] sm:$0xf]
      %v432 = vld [vmem:[%s5 + $0xa8] sm:$0xff]
      %v433 = vld [vmem:[%s5 + $0xb0] sm:$0xf]
      %v434 = vld [vmem:[%s5 + $0xb4] sm:$0xff]
      %v435 = vld [vmem:[%s5 + $0xbc] sm:$0xf]
      %v436 = vld [vmem:[%s6] sm:$0x7]
      %v438 = vlaneseq
      %v439 = vshrl.u32 %v438, 7
      %v440 = vsub.s32 0, %v439
      %v441 = vrot.slane %v436, %v440
      %v442 = vlaneseq
      %v443 = vshrl.u32 %v442, 7
      %v444 = vsub.s32 1, %v443
      %v445 = vrot.slane %v436, %v444
      %v446 = vlaneseq
      %v447 = vshrl.u32 %v446, 7
      %v448 = vsub.s32 2, %v447
      %v449 = vrot.slane %v436, %v448
      %v455 = vunpack.c.l.b16 %v402
      %v456 = vunpack.c.l.b16 %v403
      %v457 = vpack.c.b16 %v456, %v455
      %v491 = vunpack.c.l.b16 %v404
      %v492 = vunpack.c.h.b16 %v404
      %v493 = vunpack.c.l.b16 %v405
      %v494 = vunpack.c.l.b16 %v406
      %v495 = vunpack.c.h.b16 %v406
      %v496 = vunpack.c.l.b16 %v407
      %v497 = vunpack.c.l.b16 %v408
      %v498 = vunpack.c.h.b16 %v408
      %v499 = vunpack.c.l.b16 %v409
      %v500 = vunpack.c.l.b16 %v410
      %v501 = vunpack.c.h.b16 %v410
      %v502 = vunpack.c.l.b16 %v411
      %v503 = vunpack.c.l.b16 %v412
      %v504 = vunpack.c.h.b16 %v412
      %v505 = vunpack.c.l.b16 %v413
      %v506 = vunpack.c.l.b16 %v414
      %v507 = vunpack.c.h.b16 %v414
      %v508 = vunpack.c.l.b16 %v415
      %v509 = vunpack.c.l.b16 %v416
      %v510 = vunpack.c.h.b16 %v416
      %v511 = vunpack.c.l.b16 %v417
      %v512 = vunpack.c.l.b16 %v418
      %v513 = vunpack.c.h.b16 %v418
      %v514 = vunpack.c.l.b16 %v419
      %v515 = vunpack.c.l.b16 %v420
      %v516 = vunpack.c.h.b16 %v420
      %v517 = vunpack.c.l.b16 %v421
      %v518 = vunpack.c.l.b16 %v422
      %v519 = vunpack.c.h.b16 %v422
      %v520 = vunpack.c.l.b16 %v423
      %v521 = vunpack.c.l.b16 %v424
      %v522 = vunpack.c.h.b16 %v424
      %v523 = vunpack.c.l.b16 %v425
      %v524 = vunpack.c.l.b16 %v426
      %v525 = vunpack.c.h.b16 %v426
      %v526 = vunpack.c.l.b16 %v427
      %v527 = vunpack.c.l.b16 %v428
      %v528 = vunpack.c.h.b16 %v428
      %v529 = vunpack.c.l.b16 %v429
      %v530 = vunpack.c.l.b16 %v430
      %v531 = vunpack.c.h.b16 %v430
      %v532 = vunpack.c.l.b16 %v431
      %v533 = vunpack.c.l.b16 %v432
      %v534 = vunpack.c.h.b16 %v432
      %v535 = vunpack.c.l.b16 %v433
      %v536 = vunpack.c.l.b16 %v434
      %v537 = vunpack.c.h.b16 %v434
      %v538 = vunpack.c.l.b16 %v435
      %v539 = vpack.c.b16 %v494, %v491
      %v540 = vpack.c.b16 %v495, %v492
      %v541 = vpack.c.b16 %v496, %v493
      %v542 = vpack.c.b16 %v500, %v497
      %v543 = vpack.c.b16 %v501, %v498
      %v544 = vpack.c.b16 %v502, %v499
      %v545 = vpack.c.b16 %v506, %v503
      %v546 = vpack.c.b16 %v507, %v504
      %v547 = vpack.c.b16 %v508, %v505
      %v548 = vpack.c.b16 %v512, %v509
      %v549 = vpack.c.b16 %v513, %v510
      %v550 = vpack.c.b16 %v514, %v511
      %v551 = vpack.c.b16 %v518, %v515
      %v552 = vpack.c.b16 %v519, %v516
      %v553 = vpack.c.b16 %v520, %v517
      %v554 = vpack.c.b16 %v524, %v521
      %v555 = vpack.c.b16 %v525, %v522
      %v556 = vpack.c.b16 %v526, %v523
      %v557 = vpack.c.b16 %v530, %v527
      %v558 = vpack.c.b16 %v531, %v528
      %v559 = vpack.c.b16 %v532, %v529
      %v560 = vpack.c.b16 %v536, %v533
      %v561 = vpack.c.b16 %v537, %v534
      %v562 = vpack.c.b16 %v538, %v535
      %587 = vmatprep.subr.bf16.mxu0 %v540
      %588 = vmatpush1.bf16.msra.mxu0 %v539
      %589 = vmatprep.subr.bf16.mxu0 %v543
      %590 = vmatpush1.bf16.msra.mxu0 %v542
      %591 = vmatprep.subr.bf16.mxu0 %v546
      %592 = vmatpush1.bf16.msra.mxu0 %v545
      %593 = vmatprep.subr.bf16.mxu0 %v549
      %594 = vmatpush1.bf16.msra.mxu0 %v548
      %595 = vmatprep.subr.bf16.mxu0 %v552
      %596 = vmatpush1.bf16.msra.mxu0 %v551
      %597 = vmatprep.subr.bf16.mxu0 %v555
      %598 = vmatpush1.bf16.msra.mxu0 %v554
      %599 = vmatprep.subr.bf16.mxu0 %v558
      %600 = vmatpush1.bf16.msra.mxu0 %v557
      %601 = vmatprep.subr.bf16.mxu0 %v561
      %602 = vmatpush1.bf16.msra.mxu0 %v560
      %603 = vmatprep.subr.bf16.mxu0 0
      %604 = vmatpush1.bf16.msra.mxu0 0
      %605 = vmatprep.subr.bf16.mxu0 0
      %606 = vmatpush1.bf16.msra.mxu0 0
      %607 = vmatprep.subr.bf16.mxu0 0
      %608 = vmatpush1.bf16.msra.mxu0 0
      %609 = vmatprep.subr.bf16.mxu0 0
      %610 = vmatpush1.bf16.msra.mxu0 0
      %611 = vmatprep.subr.bf16.mxu0 0
      %612 = vmatpush1.bf16.msra.mxu0 0
      %613 = vmatprep.subr.bf16.mxu0 0
      %614 = vmatpush1.bf16.msra.mxu0 0
      %615 = vmatprep.subr.bf16.mxu0 0
      %616 = vmatpush1.bf16.msra.mxu0 0
      %617 = vmatprep.subr.bf16.mxu0 0
      %618 = vmatpush1.bf16.msra.mxu0 0
      %619 = vmatprep.mubr.bf16.mxu0 0
      %620 = vmatmul.mubr.bf16.gmra.mrb[0].mxu0 %v457
      %v621 = vpop.f32.mrb[0].mxu0
      %v622 = vadd.f32 %v441, %v621
      %v623 = vpop.f32.mrb[0].mxu0
      %v624 = vadd.f32 %v445, %v623
      %v625 = vpop.f32.mrb[0].mxu0
      %v626 = vadd.f32 %v441, %v625
      %v627 = vpop.f32.mrb[0].mxu0
      %v628 = vadd.f32 %v445, %v627
      %629 = vdwg.mxu0
      %630 = vmatprep.subr.bf16.mxu0 0
      %631 = vmatpush1.bf16.msra.mxu0 %v541
      %632 = vmatprep.subr.bf16.mxu0 0
      %633 = vmatpush1.bf16.msra.mxu0 %v544
      %634 = vmatprep.subr.bf16.mxu0 0
      %635 = vmatpush1.bf16.msra.mxu0 %v547
      %636 = vmatprep.subr.bf16.mxu0 0
      %637 = vmatpush1.bf16.msra.mxu0 %v550
      %638 = vmatprep.subr.bf16.mxu0 0
      %639 = vmatpush1.bf16.msra.mxu0 %v553
      %640 = vmatprep.subr.bf16.mxu0 0
      %641 = vmatpush1.bf16.msra.mxu0 %v556
      %642 = vmatprep.subr.bf16.mxu0 0
      %643 = vmatpush1.bf16.msra.mxu0 %v559
      %644 = vmatprep.subr.bf16.mxu0 0
      %645 = vmatpush1.bf16.msra.mxu0 %v562
      %646 = vmatprep.subr.bf16.mxu0 0
      %647 = vmatpush1.bf16.msra.mxu0 0
      %648 = vmatprep.subr.bf16.mxu0 0
      %649 = vmatpush1.bf16.msra.mxu0 0
      %650 = vmatprep.subr.bf16.mxu0 0
      %651 = vmatpush1.bf16.msra.mxu0 0
      %652 = vmatprep.subr.bf16.mxu0 0
      %653 = vmatpush1.bf16.msra.mxu0 0
      %654 = vmatprep.subr.bf16.mxu0 0
      %655 = vmatpush1.bf16.msra.mxu0 0
      %656 = vmatprep.subr.bf16.mxu0 0
      %657 = vmatpush1.bf16.msra.mxu0 0
      %658 = vmatprep.subr.bf16.mxu0 0
      %659 = vmatpush1.bf16.msra.mxu0 0
      %660 = vmatprep.subr.bf16.mxu0 0
      %661 = vmatpush1.bf16.msra.mxu0 0
      %662 = vmatprep.mubr.bf16.mxu0 0
      %663 = vmatmul.mubr.bf16.gmra.mrb[0].mxu0 %v457
      %v664 = vpop.f32.mrb[0].mxu0
      %v665 = vadd.f32 %v449, %v664
      %v666 = vpop.f32.mrb[0].mxu0
      %v667 = vpop.f32.mrb[0].mxu0
      %v668 = vadd.f32 %v449, %v667
      %v669 = vpop.f32.mrb[0].mxu0
      %670 = vdwg.mxu0
      %v671 = vpack.c.bf16 %v626, %v622
      %v672 = vpack.c.bf16 %v628, %v624
      %v673 = vpack.c.bf16 %v668, %v665
      %674 = vst [vmem:[#allocation2] sm:$0xff] %v671
      %675 = vst [vmem:[#allocation2 + $0x8] sm:$0xff] %v672
      %676 = vst [vmem:[#allocation2 + $0x10] sm:$0xff] %v673
      %v677 = vld [vmem:[%s379] sm:$0xff]
      %v678 = vld [vmem:[%s379 + $0x8] sm:$0xff]
      %v679 = vld [vmem:[%s384] sm:$0xff]
      %v680 = vld [vmem:[%s384 + $0x8] sm:$0xff]
      %v681 = vld [vmem:[%s387] sm:$0x1]
      %v682 = vld [vmem:[%s390] sm:$0x1]
      %683 = vset.pattern.permute.xlu0 0
      %684 = vperm.xlu0 %683, %v677
      %v685 = vpop.permute.xlu0 %684
      %686 = vset.pattern.permute.xlu0 0
      %687 = vperm.xlu0 %686, %v678
      %v688 = vpop.permute.xlu0 %687
      %v689 = vlaneseq
      %v690 = vshrl.u32 %v689, 7
      %v691 = vsub.s32 0, %v690
      %v692 = vrot.slane %v681, %v691
      %vm693 = vcmp.eq.s32.totalorder %v685, %v692
      %vm694 = vcmp.eq.s32.totalorder %v688, %v692
      %vm695 = vcmp.ge.s32.totalorder %v677, 0
      %vm696 = vcmp.ge.s32.totalorder %v678, 0
      %v697 = vsel %vm695, 1, 0
      %v698 = vsel %vm696, 1, 0
      %699 = vset.pattern.permute.xlu0 0
      %700 = vperm.xlu0 %699, %v697
      %v701 = vpop.permute.xlu0 %700
      %702 = vset.pattern.permute.xlu0 0
      %703 = vperm.xlu0 %702, %v698
      %v704 = vpop.permute.xlu0 %703
      %vm705 = vcmp.eq.s32.totalorder %v701, 1
      %vm706 = vcmp.eq.s32.totalorder %v704, 1
      %vm707 = vmand %vm693, %vm705
      %vm708 = vmand %vm694, %vm706
      %v709 = vsel %vm707, 1.0, 0.0
      %v710 = vsel %vm708, 1.0, 0.0
      %vm711 = vcmp.ne.s32.totalorder %v679, 0
      %vm712 = vcmp.ne.s32.totalorder %v680, 0
      %v713 = vsel %vm711, 1, 0
      %v714 = vsel %vm712, 1, 0
      %715 = vset.pattern.permute.xlu0 0
      %716 = vperm.xlu0 %715, %v713
      %v717 = vpop.permute.xlu0 %716
      %718 = vset.pattern.permute.xlu0 0
      %719 = vperm.xlu0 %718, %v714
      %v720 = vpop.permute.xlu0 %719
      %vm721 = vcmp.eq.s32.totalorder %v717, 1
      %vm722 = vcmp.eq.s32.totalorder %v720, 1
      %v724 = vlaneseq
      %v725 = vshrl.u32 %v724, 7
      %v726 = vsub.s32 0, %v725
      %v727 = vrot.slane %v682, %v726
      %v729 = vsel %vm721, %v727, %v709
      %v730 = vsel %vm722, %v727, %v710
      %v731 = vld [vmem:[#allocation2] sm:$0xff]
      %v732 = vld [vmem:[#allocation2 + $0x8] sm:$0xff]
      %v733 = vld [vmem:[#allocation2 + $0x10] sm:$0xff]
      %vm734 = vcmask 261120
      %v736 = vsel %vm734, %v731, 0
      %v739 = vsel %vm734, %v732, 0
      %741 = vmatprep.subr.bf16.mxu0 0
      %742 = vmatpush1.bf16.xpose.msra.mxu0 %v739
      %743 = vmatprep.subr.bf16.mxu0 0
      %744 = vmatpush1.bf16.xpose.msra.mxu0 0
      %745 = vmatprep.subr.bf16.mxu0 0
      %746 = vmatpush1.bf16.xpose.msra.mxu0 0
      %747 = vmatprep.subr.bf16.mxu0 0
      %748 = vmatpush1.bf16.xpose.msra.mxu0 0
      %749 = vmatprep.subr.bf16.mxu0 0
      %750 = vmatpush1.bf16.xpose.msra.mxu0 0
      %751 = vmatprep.subr.bf16.mxu0 0
      %752 = vmatpush1.bf16.xpose.msra.mxu0 0
      %753 = vmatprep.subr.bf16.mxu0 0
      %754 = vmatpush1.bf16.xpose.msra.mxu0 0
      %755 = vmatprep.subr.bf16.mxu0 0
      %756 = vmatpush1.bf16.xpose.msra.mxu0 0
      %757 = vmatprep.subr.bf16.mxu0 0
      %758 = vmatpush1.bf16.xpose.msra.mxu0 0
      %759 = vmatprep.subr.bf16.mxu0 0
      %760 = vmatpush1.bf16.xpose.msra.mxu0 0
      %761 = vmatprep.subr.bf16.mxu0 0
      %762 = vmatpush1.bf16.xpose.msra.mxu0 0
      %763 = vmatprep.subr.bf16.mxu0 0
      %764 = vmatpush1.bf16.xpose.msra.mxu0 0
      %765 = vmatprep.subr.bf16.mxu0 0
      %766 = vmatpush1.bf16.xpose.msra.mxu0 0
      %767 = vmatprep.subr.bf16.mxu0 0
      %768 = vmatpush1.bf16.xpose.msra.mxu0 0
      %769 = vmatprep.subr.bf16.mxu0 0
      %770 = vmatpush1.bf16.xpose.msra.mxu0 0
      %771 = vmatprep.subr.bf16.mxu0 0
      %772 = vmatpush1.bf16.xpose.msra.mxu0 0
      %773 = vmatprep.mubr.bf16.mxu0 0
      %774 = vmatmul.mubr.bf16.gmra.mrb[0].mxu0 %v736
      %v775 = vpop.f32.mrb[0].mxu0
      %v776 = vadd.f32 %v729, %v775
      %v777 = vpop.f32.mrb[0].mxu0
      %v778 = vpop.f32.mrb[0].mxu0
      %v779 = vadd.f32 %v730, %v778
      %v780 = vpop.f32.mrb[0].mxu0
      %781 = vdwg.mxu0
      %vm782 = vcmask 130048
      %v783 = vsel %vm782, %v776, -inf
      %784 = vmax.xlane.f32.xlu0 %v783
      %v785 = vpop.xlane.xlu0 %784
      %v786 = vsel %vm782, %v779, -inf
      %787 = vmax.xlane.f32.xlu0 %v786
      %v788 = vpop.xlane.xlu0 %787
      %v789 = vsub.f32 %v776, %v785
      %v790 = vsub.f32 %v779, %v788
      %v791 = vmul.f32 %v789, 1.442695
      %v792 = vpow.pop %v791
      %v793 = vmul.f32 %v790, 1.442695
      %v794 = vpow.pop %v793
      %v795 = vsel %vm782, %v792, 0.0
      %796 = vadd.xlane.f32.xlu0 %v795
      %v797 = vpop.xlane.xlu0 %796
      %v798 = vsel %vm782, %v794, 0.0
      %799 = vadd.xlane.f32.xlu0 %v798
      %v800 = vpop.xlane.xlu0 %799
      %v801 = vrcp.pop %v797
      %v802 = vmul.f32 %v792, %v801
      %v803 = vrcp.pop %v800
      %v804 = vmul.f32 %v794, %v803
      %v805 = vpack.c.bf16 %v804, %v802
      %v807 = vsel %vm782, %v805, 0
      %809 = vmatprep.subr.bf16.mxu0 0
      %810 = vmatpush1.bf16.msra.mxu0 %v733
      %811 = vmatprep.subr.bf16.mxu0 0
      %812 = vmatpush1.bf16.msra.mxu0 0
      %813 = vmatprep.subr.bf16.mxu0 0
      %814 = vmatpush1.bf16.msra.mxu0 0
      %815 = vmatprep.subr.bf16.mxu0 0
      %816 = vmatpush1.bf16.msra.mxu0 0
      %817 = vmatprep.subr.bf16.mxu0 0
      %818 = vmatpush1.bf16.msra.mxu0 0
      %819 = vmatprep.subr.bf16.mxu0 0
      %820 = vmatpush1.bf16.msra.mxu0 0
      %821 = vmatprep.subr.bf16.mxu0 0
      %822 = vmatpush1.bf16.msra.mxu0 0
      %823 = vmatprep.subr.bf16.mxu0 0
      %824 = vmatpush1.bf16.msra.mxu0 0
      %825 = vmatprep.subr.bf16.mxu0 0
      %826 = vmatpush1.bf16.msra.mxu0 0
      %827 = vmatprep.subr.bf16.mxu0 0
      %828 = vmatpush1.bf16.msra.mxu0 0
      %829 = vmatprep.subr.bf16.mxu0 0
      %830 = vmatpush1.bf16.msra.mxu0 0
      %831 = vmatprep.subr.bf16.mxu0 0
      %832 = vmatpush1.bf16.msra.mxu0 0
      %833 = vmatprep.subr.bf16.mxu0 0
      %834 = vmatpush1.bf16.msra.mxu0 0
      %835 = vmatprep.subr.bf16.mxu0 0
      %836 = vmatpush1.bf16.msra.mxu0 0
      %837 = vmatprep.subr.bf16.mxu0 0
      %838 = vmatpush1.bf16.msra.mxu0 0
      %839 = vmatprep.subr.bf16.mxu0 0
      %840 = vmatpush1.bf16.msra.mxu0 0
      %841 = vmatprep.mubr.bf16.mxu0 0
      %842 = vmatmul.mubr.bf16.gmra.mrb[0].mxu0 %v807
      %v843 = vpop.f32.mrb[0].mxu0
      %v844 = vadd.f32 0.0, %v843
      %v845 = vpop.f32.mrb[0].mxu0
      %v846 = vpop.f32.mrb[0].mxu0
      %v847 = vadd.f32 0.0, %v846
      %v848 = vpop.f32.mrb[0].mxu0
      %849 = vdwg.mxu0
      %v850 = vpack.c.bf16 %v847, %v844
      %851 = vst.msk [vmem:[#allocation3] sm:$0xff] %vm734, %v850
      %v852 = vld [vmem:[#allocation2] sm:$0xff]
      %v853 = vld [vmem:[#allocation2 + $0x8] sm:$0xff]
      %v854 = vld [vmem:[#allocation2 + $0x10] sm:$0xff]
      %856 = vrot.lane.b32.xlu0 %v852, 96
      %v857 = vpop.permute.xlu0 %856
      %859 = vrot.lane.b32.xlu0 %v853, 96
      %v860 = vpop.permute.xlu0 %859
      %v862 = vsel %vm734, %v857, 0
      %v865 = vsel %vm734, %v860, 0
      %867 = vmatprep.subr.bf16.mxu0 0
      %868 = vmatpush1.bf16.xpose.msra.mxu0 %v865
      %869 = vmatprep.subr.bf16.mxu0 0
      %870 = vmatpush1.bf16.xpose.msra.mxu0 0
      %871 = vmatprep.subr.bf16.mxu0 0
      %872 = vmatpush1.bf16.xpose.msra.mxu0 0
      %873 = vmatprep.subr.bf16.mxu0 0
      %874 = vmatpush1.bf16.xpose.msra.mxu0 0
      %875 = vmatprep.subr.bf16.mxu0 0
      %876 = vmatpush1.bf16.xpose.msra.mxu0 0
      %877 = vmatprep.subr.bf16.mxu0 0
      %878 = vmatpush1.bf16.xpose.msra.mxu0 0
      %879 = vmatprep.subr.bf16.mxu0 0
      %880 = vmatpush1.bf16.xpose.msra.mxu0 0
      %881 = vmatprep.subr.bf16.mxu0 0
      %882 = vmatpush1.bf16.xpose.msra.mxu0 0
      %883 = vmatprep.subr.bf16.mxu0 0
      %884 = vmatpush1.bf16.xpose.msra.mxu0 0
      %885 = vmatprep.subr.bf16.mxu0 0
      %886 = vmatpush1.bf16.xpose.msra.mxu0 0
      %887 = vmatprep.subr.bf16.mxu0 0
      %888 = vmatpush1.bf16.xpose.msra.mxu0 0
      %889 = vmatprep.subr.bf16.mxu0 0
      %890 = vmatpush1.bf16.xpose.msra.mxu0 0
      %891 = vmatprep.subr.bf16.mxu0 0
      %892 = vmatpush1.bf16.xpose.msra.mxu0 0
      %893 = vmatprep.subr.bf16.mxu0 0
      %894 = vmatpush1.bf16.xpose.msra.mxu0 0
      %895 = vmatprep.subr.bf16.mxu0 0
      %896 = vmatpush1.bf16.xpose.msra.mxu0 0
      %897 = vmatprep.subr.bf16.mxu0 0
      %898 = vmatpush1.bf16.xpose.msra.mxu0 0
      %899 = vmatprep.mubr.bf16.mxu0 0
      %900 = vmatmul.mubr.bf16.gmra.mrb[0].mxu0 %v862
      %v901 = vpop.f32.mrb[0].mxu0
      %v902 = vadd.f32 %v729, %v901
      %v903 = vpop.f32.mrb[0].mxu0
      %v904 = vpop.f32.mrb[0].mxu0
      %v905 = vadd.f32 %v730, %v904
      %v906 = vpop.f32.mrb[0].mxu0
      %907 = vdwg.mxu0
      %v908 = vsel %vm782, %v902, -inf
      %909 = vmax.xlane.f32.xlu0 %v908
      %v910 = vpop.xlane.xlu0 %909
      %v911 = vsel %vm782, %v905, -inf
      %912 = vmax.xlane.f32.xlu0 %v911
      %v913 = vpop.xlane.xlu0 %912
      %v914 = vsub.f32 %v902, %v910
      %v915 = vsub.f32 %v905, %v913
      %v916 = vmul.f32 %v914, 1.442695
      %v917 = vpow.pop %v916
      %v918 = vmul.f32 %v915, 1.442695
      %v919 = vpow.pop %v918
      %v920 = vsel %vm782, %v917, 0.0
      %921 = vadd.xlane.f32.xlu0 %v920
      %v922 = vpop.xlane.xlu0 %921
      %v923 = vsel %vm782, %v919, 0.0
      %924 = vadd.xlane.f32.xlu0 %v923
      %v925 = vpop.xlane.xlu0 %924
      %v926 = vrcp.pop %v922
      %v927 = vmul.f32 %v917, %v926
      %v928 = vrcp.pop %v925
      %v929 = vmul.f32 %v919, %v928
      %v930 = vpack.c.bf16 %v929, %v927
      %932 = vrot.lane.b32.xlu0 %v854, 96
      %v933 = vpop.permute.xlu0 %932
      %v936 = vsel %vm782, %v930, 0
      %938 = vmatprep.subr.bf16.mxu0 0
      %939 = vmatpush1.bf16.msra.mxu0 %v933
      %940 = vmatprep.subr.bf16.mxu0 0
      %941 = vmatpush1.bf16.msra.mxu0 0
      %942 = vmatprep.subr.bf16.mxu0 0
      %943 = vmatpush1.bf16.msra.mxu0 0
      %944 = vmatprep.subr.bf16.mxu0 0
      %945 = vmatpush1.bf16.msra.mxu0 0
      %946 = vmatprep.subr.bf16.mxu0 0
      %947 = vmatpush1.bf16.msra.mxu0 0
      %948 = vmatprep.subr.bf16.mxu0 0
      %949 = vmatpush1.bf16.msra.mxu0 0
      %950 = vmatprep.subr.bf16.mxu0 0
      %951 = vmatpush1.bf16.msra.mxu0 0
      %952 = vmatprep.subr.bf16.mxu0 0
      %953 = vmatpush1.bf16.msra.mxu0 0
      %954 = vmatprep.subr.bf16.mxu0 0
      %955 = vmatpush1.bf16.msra.mxu0 0
      %956 = vmatprep.subr.bf16.mxu0 0
      %957 = vmatpush1.bf16.msra.mxu0 0
      %958 = vmatprep.subr.bf16.mxu0 0
      %959 = vmatpush1.bf16.msra.mxu0 0
      %960 = vmatprep.subr.bf16.mxu0 0
      %961 = vmatpush1.bf16.msra.mxu0 0
      %962 = vmatprep.subr.bf16.mxu0 0
      %963 = vmatpush1.bf16.msra.mxu0 0
      %964 = vmatprep.subr.bf16.mxu0 0
      %965 = vmatpush1.bf16.msra.mxu0 0
      %966 = vmatprep.subr.bf16.mxu0 0
      %967 = vmatpush1.bf16.msra.mxu0 0
      %968 = vmatprep.subr.bf16.mxu0 0
      %969 = vmatpush1.bf16.msra.mxu0 0
      %970 = vmatprep.mubr.bf16.mxu0 0
      %971 = vmatmul.mubr.bf16.gmra.mrb[0].mxu0 %v936
      %v972 = vpop.f32.mrb[0].mxu0
      %v973 = vadd.f32 0.0, %v972
      %v974 = vpop.f32.mrb[0].mxu0
      %v975 = vpop.f32.mrb[0].mxu0
      %v976 = vadd.f32 0.0, %v975
      %v977 = vpop.f32.mrb[0].mxu0
      %978 = vdwg.mxu0
      %v979 = vpack.c.bf16 %v976, %v973
      %981 = vrot.lane.b32.xlu0 %v979, 32
      %v982 = vpop.permute.xlu0 %981
      %vm984 = vcmask 523520
      %985 = vst.msk [vmem:[#allocation3] sm:$0xff] %vm984, %v982
      %v986 = vld [vmem:[#allocation2] sm:$0xff]
      %v987 = vld [vmem:[#allocation2 + $0x8] sm:$0xff]
      %v988 = vld [vmem:[#allocation2 + $0x10] sm:$0xff]
      %990 = vrot.lane.b32.xlu0 %v986, 64
      %v991 = vpop.permute.xlu0 %990
      %993 = vrot.lane.b32.xlu0 %v987, 64
      %v994 = vpop.permute.xlu0 %993
      %v996 = vsel %vm734, %v991, 0
      %v999 = vsel %vm734, %v994, 0
      %1001 = vmatprep.subr.bf16.mxu0 0
      %1002 = vmatpush1.bf16.xpose.msra.mxu0 %v999
      %1003 = vmatprep.subr.bf16.mxu0 0
      %1004 = vmatpush1.bf16.xpose.msra.mxu0 0
      %1005 = vmatprep.subr.bf16.mxu0 0
      %1006 = vmatpush1.bf16.xpose.msra.mxu0 0
      %1007 = vmatprep.subr.bf16.mxu0 0
      %1008 = vmatpush1.bf16.xpose.msra.mxu0 0
      %1009 = vmatprep.subr.bf16.mxu0 0
      %1010 = vmatpush1.bf16.xpose.msra.mxu0 0
      %1011 = vmatprep.subr.bf16.mxu0 0
      %1012 = vmatpush1.bf16.xpose.msra.mxu0 0
      %1013 = vmatprep.subr.bf16.mxu0 0
      %1014 = vmatpush1.bf16.xpose.msra.mxu0 0
      %1015 = vmatprep.subr.bf16.mxu0 0
      %1016 = vmatpush1.bf16.xpose.msra.mxu0 0
      %1017 = vmatprep.subr.bf16.mxu0 0
      %1018 = vmatpush1.bf16.xpose.msra.mxu0 0
      %1019 = vmatprep.subr.bf16.mxu0 0
      %1020 = vmatpush1.bf16.xpose.msra.mxu0 0
      %1021 = vmatprep.subr.bf16.mxu0 0
      %1022 = vmatpush1.bf16.xpose.msra.mxu0 0
      %1023 = vmatprep.subr.bf16.mxu0 0
      %1024 = vmatpush1.bf16.xpose.msra.mxu0 0
      %1025 = vmatprep.subr.bf16.mxu0 0
      %1026 = vmatpush1.bf16.xpose.msra.mxu0 0
      %1027 = vmatprep.subr.bf16.mxu0 0
      %1028 = vmatpush1.bf16.xpose.msra.mxu0 0
      %1029 = vmatprep.subr.bf16.mxu0 0
      %1030 = vmatpush1.bf16.xpose.msra.mxu0 0
      %1031 = vmatprep.subr.bf16.mxu0 0
      %1032 = vmatpush1.bf16.xpose.msra.mxu0 0
      %1033 = vmatprep.mubr.bf16.mxu0 0
      %1034 = vmatmul.mubr.bf16.gmra.mrb[0].mxu0 %v996
      %v1035 = vpop.f32.mrb[0].mxu0
      %v1036 = vadd.f32 %v729, %v1035
      %v1037 = vpop.f32.mrb[0].mxu0
      %v1038 = vpop.f32.mrb[0].mxu0
      %v1039 = vadd.f32 %v730, %v1038
      %v1040 = vpop.f32.mrb[0].mxu0
      %1041 = vdwg.mxu0
      %v1042 = vsel %vm782, %v1036, -inf
      %1043 = vmax.xlane.f32.xlu0 %v1042
      %v1044 = vpop.xlane.xlu0 %1043
      %v1045 = vsel %vm782, %v1039, -inf
      %1046 = vmax.xlane.f32.xlu0 %v1045
      %v1047 = vpop.xlane.xlu0 %1046
      %v1048 = vsub.f32 %v1036, %v1044
      %v1049 = vsub.f32 %v1039, %v1047
      %v1050 = vmul.f32 %v1048, 1.442695
      %v1051 = vpow.pop %v1050
      %v1052 = vmul.f32 %v1049, 1.442695
      %v1053 = vpow.pop %v1052
      %v1054 = vsel %vm782, %v1051, 0.0
      %1055 = vadd.xlane.f32.xlu0 %v1054
      %v1056 = vpop.xlane.xlu0 %1055
      %v1057 = vsel %vm782, %v1053, 0.0
      %1058 = vadd.xlane.f32.xlu0 %v1057
      %v1059 = vpop.xlane.xlu0 %1058
      %v1060 = vrcp.pop %v1056
      %v1061 = vmul.f32 %v1051, %v1060
      %v1062 = vrcp.pop %v1059
      %v1063 = vmul.f32 %v1053, %v1062
      %v1064 = vpack.c.bf16 %v1063, %v1061
      %1066 = vrot.lane.b32.xlu0 %v988, 64
      %v1067 = vpop.permute.xlu0 %1066
      %v1070 = vsel %vm782, %v1064, 0
      %1072 = vmatprep.subr.bf16.mxu0 0
      %1073 = vmatpush1.bf16.msra.mxu0 %v1067
      %1074 = vmatprep.subr.bf16.mxu0 0
      %1075 = vmatpush1.bf16.msra.mxu0 0
      %1076 = vmatprep.subr.bf16.mxu0 0
      %1077 = vmatpush1.bf16.msra.mxu0 0
      %1078 = vmatprep.subr.bf16.mxu0 0
      %1079 = vmatpush1.bf16.msra.mxu0 0
      %1080 = vmatprep.subr.bf16.mxu0 0
      %1081 = vmatpush1.bf16.msra.mxu0 0
      %1082 = vmatprep.subr.bf16.mxu0 0
      %1083 = vmatpush1.bf16.msra.mxu0 0
      %1084 = vmatprep.subr.bf16.mxu0 0
      %1085 = vmatpush1.bf16.msra.mxu0 0
      %1086 = vmatprep.subr.bf16.mxu0 0
      %1087 = vmatpush1.bf16.msra.mxu0 0
      %1088 = vmatprep.subr.bf16.mxu0 0
      %1089 = vmatpush1.bf16.msra.mxu0 0
      %1090 = vmatprep.subr.bf16.mxu0 0
      %1091 = vmatpush1.bf16.msra.mxu0 0
      %1092 = vmatprep.subr.bf16.mxu0 0
      %1093 = vmatpush1.bf16.msra.mxu0 0
      %1094 = vmatprep.subr.bf16.mxu0 0
      %1095 = vmatpush1.bf16.msra.mxu0 0
      %1096 = vmatprep.subr.bf16.mxu0 0
      %1097 = vmatpush1.bf16.msra.mxu0 0
      %1098 = vmatprep.subr.bf16.mxu0 0
      %1099 = vmatpush1.bf16.msra.mxu0 0
      %1100 = vmatprep.subr.bf16.mxu0 0
      %1101 = vmatpush1.bf16.msra.mxu0 0
      %1102 = vmatprep.subr.bf16.mxu0 0
      %1103 = vmatpush1.bf16.msra.mxu0 0
      %1104 = vmatprep.mubr.bf16.mxu0 0
      %1105 = vmatmul.mubr.bf16.gmra.mrb[0].mxu0 %v1070
      %v1106 = vpop.f32.mrb[0].mxu0
      %v1107 = vadd.f32 0.0, %v1106
      %v1108 = vpop.f32.mrb[0].mxu0
      %v1109 = vpop.f32.mrb[0].mxu0
      %v1110 = vadd.f32 0.0, %v1109
      %v1111 = vpop.f32.mrb[0].mxu0
      %1112 = vdwg.mxu0
      %v1113 = vpack.c.bf16 %v1110, %v1107
      %1115 = vrot.lane.b32.xlu0 %v1113, 64
      %v1116 = vpop.permute.xlu0 %1115
      %vm1118 = vcmask 785920
      %1119 = vst.msk [vmem:[#allocation3] sm:$0xff] %vm1118, %v1116
      %v1120 = vld [vmem:[#allocation2] sm:$0xff]
      %v1121 = vld [vmem:[#allocation2 + $0x8] sm:$0xff]
      %v1122 = vld [vmem:[#allocation2 + $0x10] sm:$0xff]
      %1124 = vrot.lane.b32.xlu0 %v1120, 32
      %v1125 = vpop.permute.xlu0 %1124
      %1127 = vrot.lane.b32.xlu0 %v1121, 32
      %v1128 = vpop.permute.xlu0 %1127
      %v1130 = vsel %vm734, %v1125, 0
      %v1133 = vsel %vm734, %v1128, 0
      %1135 = vmatprep.subr.bf16.mxu0 0
      %1136 = vmatpush1.bf16.xpose.msra.mxu0 %v1133
      %1137 = vmatprep.subr.bf16.mxu0 0
      %1138 = vmatpush1.bf16.xpose.msra.mxu0 0
      %1139 = vmatprep.subr.bf16.mxu0 0
      %1140 = vmatpush1.bf16.xpose.msra.mxu0 0
      %1141 = vmatprep.subr.bf16.mxu0 0
      %1142 = vmatpush1.bf16.xpose.msra.mxu0 0
      %1143 = vmatprep.subr.bf16.mxu0 0
      %1144 = vmatpush1.bf16.xpose.msra.mxu0 0
      %1145 = vmatprep.subr.bf16.mxu0 0
      %1146 = vmatpush1.bf16.xpose.msra.mxu0 0
      %1147 = vmatprep.subr.bf16.mxu0 0
      %1148 = vmatpush1.bf16.xpose.msra.mxu0 0
      %1149 = vmatprep.subr.bf16.mxu0 0
      %1150 = vmatpush1.bf16.xpose.msra.mxu0 0
      %1151 = vmatprep.subr.bf16.mxu0 0
      %1152 = vmatpush1.bf16.xpose.msra.mxu0 0
      %1153 = vmatprep.subr.bf16.mxu0 0
      %1154 = vmatpush1.bf16.xpose.msra.mxu0 0
      %1155 = vmatprep.subr.bf16.mxu0 0
      %1156 = vmatpush1.bf16.xpose.msra.mxu0 0
      %1157 = vmatprep.subr.bf16.mxu0 0
      %1158 = vmatpush1.bf16.xpose.msra.mxu0 0
      %1159 = vmatprep.subr.bf16.mxu0 0
      %1160 = vmatpush1.bf16.xpose.msra.mxu0 0
      %1161 = vmatprep.subr.bf16.mxu0 0
      %1162 = vmatpush1.bf16.xpose.msra.mxu0 0
      %1163 = vmatprep.subr.bf16.mxu0 0
      %1164 = vmatpush1.bf16.xpose.msra.mxu0 0
      %1165 = vmatprep.subr.bf16.mxu0 0
      %1166 = vmatpush1.bf16.xpose.msra.mxu0 0
      %1167 = vmatprep.mubr.bf16.mxu0 0
      %1168 = vmatmul.mubr.bf16.gmra.mrb[0].mxu0 %v1130
      %v1169 = vpop.f32.mrb[0].mxu0
      %v1170 = vadd.f32 %v729, %v1169
      %v1171 = vpop.f32.mrb[0].mxu0
      %v1172 = vpop.f32.mrb[0].mxu0
      %v1173 = vadd.f32 %v730, %v1172
      %v1174 = vpop.f32.mrb[0].mxu0
      %1175 = vdwg.mxu0
      %v1176 = vsel %vm782, %v1170, -inf
      %1177 = vmax.xlane.f32.xlu0 %v1176
      %v1178 = vpop.xlane.xlu0 %1177
      %v1179 = vsel %vm782, %v1173, -inf
      %1180 = vmax.xlane.f32.xlu0 %v1179
      %v1181 = vpop.xlane.xlu0 %1180
      %v1182 = vsub.f32 %v1170, %v1178
      %v1183 = vsub.f32 %v1173, %v1181
      %v1184 = vmul.f32 %v1182, 1.442695
      %v1185 = vpow.pop %v1184
      %v1186 = vmul.f32 %v1183, 1.442695
      %v1187 = vpow.pop %v1186
      %v1188 = vsel %vm782, %v1185, 0.0
      %1189 = vadd.xlane.f32.xlu0 %v1188
      %v1190 = vpop.xlane.xlu0 %1189
      %v1191 = vsel %vm782, %v1187, 0.0
      %1192 = vadd.xlane.f32.xlu0 %v1191
      %v1193 = vpop.xlane.xlu0 %1192
      %v1194 = vrcp.pop %v1190
      %v1195 = vmul.f32 %v1185, %v1194
      %v1196 = vrcp.pop %v1193
      %v1197 = vmul.f32 %v1187, %v1196
      %v1198 = vpack.c.bf16 %v1197, %v1195
      %1200 = vrot.lane.b32.xlu0 %v1122, 32
      %v1201 = vpop.permute.xlu0 %1200
      %v1204 = vsel %vm782, %v1198, 0
      %1206 = vmatprep.subr.bf16.mxu0 0
      %1207 = vmatpush1.bf16.msra.mxu0 %v1201
      %1208 = vmatprep.subr.bf16.mxu0 0
      %1209 = vmatpush1.bf16.msra.mxu0 0
      %1210 = vmatprep.subr.bf16.mxu0 0
      %1211 = vmatpush1.bf16.msra.mxu0 0
      %1212 = vmatprep.subr.bf16.mxu0 0
      %1213 = vmatpush1.bf16.msra.mxu0 0
      %1214 = vmatprep.subr.bf16.mxu0 0
      %1215 = vmatpush1.bf16.msra.mxu0 0
      %1216 = vmatprep.subr.bf16.mxu0 0
      %1217 = vmatpush1.bf16.msra.mxu0 0
      %1218 = vmatprep.subr.bf16.mxu0 0
      %1219 = vmatpush1.bf16.msra.mxu0 0
      %1220 = vmatprep.subr.bf16.mxu0 0
      %1221 = vmatpush1.bf16.msra.mxu0 0
      %1222 = vmatprep.subr.bf16.mxu0 0
      %1223 = vmatpush1.bf16.msra.mxu0 0
      %1224 = vmatprep.subr.bf16.mxu0 0
      %1225 = vmatpush1.bf16.msra.mxu0 0
      %1226 = vmatprep.subr.bf16.mxu0 0
      %1227 = vmatpush1.bf16.msra.mxu0 0
      %1228 = vmatprep.subr.bf16.mxu0 0
      %1229 = vmatpush1.bf16.msra.mxu0 0
      %1230 = vmatprep.subr.bf16.mxu0 0
      %1231 = vmatpush1.bf16.msra.mxu0 0
      %1232 = vmatprep.subr.bf16.mxu0 0
      %1233 = vmatpush1.bf16.msra.mxu0 0
      %1234 = vmatprep.subr.bf16.mxu0 0
      %1235 = vmatpush1.bf16.msra.mxu0 0
      %1236 = vmatprep.subr.bf16.mxu0 0
      %1237 = vmatpush1.bf16.msra.mxu0 0
      %1238 = vmatprep.mubr.bf16.mxu0 0
      %1239 = vmatmul.mubr.bf16.gmra.mrb[0].mxu0 %v1204
      %v1240 = vpop.f32.mrb[0].mxu0
      %v1241 = vadd.f32 0.0, %v1240
      %v1242 = vpop.f32.mrb[0].mxu0
      %v1243 = vpop.f32.mrb[0].mxu0
      %v1244 = vadd.f32 0.0, %v1243
      %v1245 = vpop.f32.mrb[0].mxu0
      %1246 = vdwg.mxu0
      %v1247 = vpack.c.bf16 %v1244, %v1241
      %1249 = vrot.lane.b32.xlu0 %v1247, 96
      %v1250 = vpop.permute.xlu0 %1249
      %vm1252 = vcmask 1048320
      %1253 = vst.msk [vmem:[#allocation3] sm:$0xff] %vm1252, %v1250
      %v1254 = vld [vmem:[#allocation3] sm:$0xff]
      %v1255 = vld [vmem:[%s7] sm:$0xf]
      %v1256 = vld [vmem:[%s7 + $0x4] sm:$0xf]
      %v1257 = vld [vmem:[%s7 + $0x8] sm:$0xf]
      %v1258 = vld [vmem:[%s7 + $0xc] sm:$0xf]
      %v1259 = vld [vmem:[%s7 + $0x10] sm:$0xf]
      %v1260 = vld [vmem:[%s7 + $0x14] sm:$0xf]
      %v1261 = vld [vmem:[%s7 + $0x18] sm:$0xf]
      %v1262 = vld [vmem:[%s7 + $0x1c] sm:$0xf]
      %v1263 = vld [vmem:[%s7 + $0x20] sm:$0xf]
      %v1264 = vld [vmem:[%s7 + $0x24] sm:$0xf]
      %v1265 = vld [vmem:[%s7 + $0x28] sm:$0xf]
      %v1266 = vld [vmem:[%s7 + $0x2c] sm:$0xf]
      %v1267 = vld [vmem:[%s7 + $0x30] sm:$0xf]
      %v1268 = vld [vmem:[%s7 + $0x34] sm:$0xf]
      %v1269 = vld [vmem:[%s7 + $0x38] sm:$0xf]
      %v1270 = vld [vmem:[%s7 + $0x3c] sm:$0xf]
      %v1271 = vld [vmem:[%s8] sm:$0x1]
      %v1273 = vlaneseq
      %v1274 = vshrl.u32 %v1273, 7
      %v1275 = vsub.s32 0, %v1274
      %v1276 = vrot.slane %v1271, %v1275
      %v1294 = vunpack.c.l.b16 %v1255
      %v1295 = vunpack.c.l.b16 %v1256
      %v1296 = vunpack.c.l.b16 %v1257
      %v1297 = vunpack.c.l.b16 %v1258
      %v1298 = vunpack.c.l.b16 %v1259
      %v1299 = vunpack.c.l.b16 %v1260
      %v1300 = vunpack.c.l.b16 %v1261
      %v1301 = vunpack.c.l.b16 %v1262
      %v1302 = vunpack.c.l.b16 %v1263
      %v1303 = vunpack.c.l.b16 %v1264
      %v1304 = vunpack.c.l.b16 %v1265
      %v1305 = vunpack.c.l.b16 %v1266
      %v1306 = vunpack.c.l.b16 %v1267
      %v1307 = vunpack.c.l.b16 %v1268
      %v1308 = vunpack.c.l.b16 %v1269
      %v1309 = vunpack.c.l.b16 %v1270
      %v1310 = vpack.c.b16 %v1295, %v1294
      %v1311 = vpack.c.b16 %v1297, %v1296
      %v1312 = vpack.c.b16 %v1299, %v1298
      %v1313 = vpack.c.b16 %v1301, %v1300
      %v1314 = vpack.c.b16 %v1303, %v1302
      %v1315 = vpack.c.b16 %v1305, %v1304
      %v1316 = vpack.c.b16 %v1307, %v1306
      %v1317 = vpack.c.b16 %v1309, %v1308
      %1326 = vmatprep.subr.bf16.mxu0 0
      %1327 = vmatpush1.bf16.msra.mxu0 %v1310
      %1328 = vmatprep.subr.bf16.mxu0 0
      %1329 = vmatpush1.bf16.msra.mxu0 %v1311
      %1330 = vmatprep.subr.bf16.mxu0 0
      %1331 = vmatpush1.bf16.msra.mxu0 %v1312
      %1332 = vmatprep.subr.bf16.mxu0 0
      %1333 = vmatpush1.bf16.msra.mxu0 %v1313
      %1334 = vmatprep.subr.bf16.mxu0 0
      %1335 = vmatpush1.bf16.msra.mxu0 %v1314
      %1336 = vmatprep.subr.bf16.mxu0 0
      %1337 = vmatpush1.bf16.msra.mxu0 %v1315
      %1338 = vmatprep.subr.bf16.mxu0 0
      %1339 = vmatpush1.bf16.msra.mxu0 %v1316
      %1340 = vmatprep.subr.bf16.mxu0 0
      %1341 = vmatpush1.bf16.msra.mxu0 %v1317
      %1342 = vmatprep.subr.bf16.mxu0 0
      %1343 = vmatpush1.bf16.msra.mxu0 0
      %1344 = vmatprep.subr.bf16.mxu0 0
      %1345 = vmatpush1.bf16.msra.mxu0 0
      %1346 = vmatprep.subr.bf16.mxu0 0
      %1347 = vmatpush1.bf16.msra.mxu0 0
      %1348 = vmatprep.subr.bf16.mxu0 0
      %1349 = vmatpush1.bf16.msra.mxu0 0
      %1350 = vmatprep.subr.bf16.mxu0 0
      %1351 = vmatpush1.bf16.msra.mxu0 0
      %1352 = vmatprep.subr.bf16.mxu0 0
      %1353 = vmatpush1.bf16.msra.mxu0 0
      %1354 = vmatprep.subr.bf16.mxu0 0
      %1355 = vmatpush1.bf16.msra.mxu0 0
      %1356 = vmatprep.subr.bf16.mxu0 0
      %1357 = vmatpush1.bf16.msra.mxu0 0
      %1358 = vmatprep.mubr.bf16.mxu0 0
      %1359 = vmatmul.mubr.bf16.gmra.mrb[0].mxu0 %v1254
      %v1360 = vpop.f32.mrb[0].mxu0
      %v1361 = vadd.f32 %v1276, %v1360
      %v1362 = vpop.f32.mrb[0].mxu0
      %v1363 = vpop.f32.mrb[0].mxu0
      %v1364 = vadd.f32 %v1276, %v1363
      %v1365 = vpop.f32.mrb[0].mxu0
      %1366 = vdwg.mxu0
      %v1367 = vpack.c.bf16 %v1364, %v1361
      %v1369 = vunpack.c.l.b16 %v1367
      %v1370 = vunpack.c.h.b16 %v1367
      %v1371 = vpack.c.b16 %v1369, %v1369
      %v1372 = vpack.c.b16 %v1370, %v1370
      %1375 = vst [vmem:[%s400] sm:$0xf] %v1371
      %1376 = vst [vmem:[%s400 + $0x4] sm:$0xf] %v1372
      %p1377 = scmp.lt.s32.totalorder %s20, 1
      %s1378 = scalar_select %p1377, %s20, 1
      %s1379 = smul.addr %s1378, 2
      %s1380 = smul.addr %s1379, 4
      %s1381 = scalar_lea.vmem %s9, %s1380
      // Predicated region
      $region57: #{llm_open_qa_forward.4} parent=55 // pred_check
        %p1382 = pneg %p252
      $region58: #{llm_open_qa_forward.4} parent=55 // pred_check_branch
        %1384 = sbr.rel (%p1382) target = $region60
      $region59: #{llm_open_qa_forward.4} parent=55 // pred_region
        _
      $region60: #{llm_open_qa_forward.4} parent=55 // pred_fallthru
        _
    $region56: #{llm_open_qa_forward.4} parent=5 // pred_fallthru
      _
    %p1385 = scmp.le.s32.totalorder 2, %s15
    // Predicated region
    $region61: #{llm_open_qa_forward.4} parent=5 // pred_check
      %p1386 = pneg %p1385
    $region62: #{llm_open_qa_forward.4} parent=5 // pred_check_branch
      %1388 = sbr.rel (%p1386) target = $region64
    $region63: #{llm_open_qa_forward.4} parent=5 // pred_region
      %s1389 = ssub.s32 %s15, 2
      // Predicated region
      $region65: #{llm_open_qa_forward.4} parent=63 // pred_check
        %p1390 = pneg %p258
      $region66: #{llm_open_qa_forward.4} parent=63 // pred_check_branch
        %1392 = sbr.rel (%p1390) target = $region68
      $region67: #{llm_open_qa_forward.4} parent=63 // pred_region
        %p1393 = scmp.lt.s32.totalorder %s21, 1
        %s1394 = scalar_select %p1393, %s21, 1
        %s1395 = smul.addr %s1394, 2
        %s1396 = smul.addr %s1395, 4
        %s1397 = scalar_lea.vmem %s9, %s1396
      $region68: #{llm_open_qa_forward.4} parent=63 // pred_fallthru
        _
    $region64: #{llm_open_qa_forward.4} parent=5 // pred_fallthru
      _
  $region6: #{llm_open_qa_forward.4} parent=0 // loop_footer
    %s19 = sadd.s32 1, %s15
  $region7: #{llm_open_qa_forward.4} parent=0 // loop_footer_branch
    %14 = sbr.rel target = $region3
  $region8: #{llm_open_qa_forward.4} parent=0 // loop_exit
    _

// kernel: llm_open_qa_forward.3
$region0: #{llm_open_qa_forward.3}
  #allocation0 [shape = 'u32[]', space=smem, size = 0x4, offset = 0x4, fixed_abs, tag = 'smem constant byte address 0x4 - core index']
  #allocation1 [shape = 'u32[144,128]{1,0:T(1,128)}', space=vmem, size = 0x12000, scoped, tag = 'internal scratch']
  #allocation2 [shape = 'f32[6,128]{1,0:T(8,128)}', space=vmem, size = 0x1000, scoped, tag = 'scratch operand']
  #allocation3 [shape = 'f32[6,128]{1,0:T(8,128)}', space=vmem, size = 0x1000, scoped, tag = 'scratch operand']
  %s0 = inlined_call_operand.vmem [shape: bf16[2,12,128], index: 0, kind: input, shape index: {}]
  %s1 = inlined_call_operand.hbm [shape: bf16[128,128], index: 1, kind: input, shape index: {}]
  %s2 = inlined_call_operand.hbm [shape: bf16[128,128], index: 2, kind: input, shape index: {}]
  %s3 = inlined_call_operand.vmem [shape: f32[1,128], index: 3, kind: input, shape index: {}]
  %s4 = inlined_call_operand.vmem [shape: bf16[128,768], index: 4, kind: input, shape index: {}]
  %s5 = inlined_call_operand.hbm [shape: f32[1,768], index: 5, kind: input, shape index: {}]
  %s6 = inlined_call_operand.hbm [shape: bf16[128,128], index: 6, kind: input, shape index: {}]
  %s7 = inlined_call_operand.vmem [shape: f32[1,128], index: 7, kind: input, shape index: {}]
  %s8 = inlined_call_operand.hbm [shape: bf16[128,128], index: 8, kind: input, shape index: {}]
  %s9 = inlined_call_operand.vmem [shape: f32[1,128], index: 9, kind: input, shape index: {}]
  %s10 = inlined_call_operand.vmem [shape: f32[6,128], index: 10, kind: output, shape index: {0}]
  %s11 = inlined_call_operand.vmem [shape: f32[6,128], index: 11, kind: output, shape index: {1}]
  %s12 = inlined_call_operand.vmem [shape: f32[6,128], index: 12, kind: output, shape index: {2}]
  %13 = xla_tuple %s10, %s11, %s12
  %s14 = sld [smem:[#allocation0]]
  $region117: #{llm_open_qa_forward.3} parent=0
    _
  %s16 = ssub.s32 1, %s14
  %s17 = scalar_select 0, %s16, %s14
  $region1: #{llm_open_qa_forward.3} parent=0
    #allocation4 [shape = 'u8[32768]{0}', space=vmem, size = 0x8000, scoped, tag = 'input window, operand 1, single buffered']
    #allocation5 [shape = 's32[2]{0}', space=sflag, size = 0x8, scoped, tag = 'scoped memory for llm_open_qa_forward.3']
    #allocation6 [shape = 'u8[32768]{0}', space=vmem, size = 0x8000, scoped, tag = 'input window, operand 2, single buffered']
    #allocation7 [shape = 's32[1]{0}', space=sflag, size = 0x4, scoped, tag = 'scoped memory for llm_open_qa_forward.3']
    #allocation8 [shape = 'u8[3072]{0}', space=vmem, size = 0xc00, scoped, tag = 'input window, operand 5, single buffered']
    #allocation9 [shape = 'u8[32768]{0}', space=vmem, size = 0x8000, scoped, tag = 'input window, operand 6, single buffered']
    #allocation10 [shape = 's32[1]{0}', space=sflag, size = 0x4, scoped, tag = 'scoped memory for llm_open_qa_forward.3']
    #allocation11 [shape = 'u8[32768]{0}', space=vmem, size = 0x8000, scoped, tag = 'input window, operand 8, single buffered']
    %18 = vsyncpa [#allocation5], 0
    %19 = vsyncpa [#allocation7], 0
    %20 = vsyncpa [#allocation10], 0
    loop: start=0, step=1, limit=4
    $region2: #{llm_open_qa_forward.3} parent=1 // loop_pre_header
      _
    $region3: #{llm_open_qa_forward.3} parent=1 // loop_header
      %s22 = sphi 0, %s26
      %p23 = scmp.ge.s32.totalorder %s22, 4
      %s32 = sphi 0, %s34
      %s35 = sphi 0, %s32
      %s36 = sphi 0, %s35
      %s52 = sphi 0, %s36
      %s56 = sphi 0, %s56
      %s58 = sphi 0, %s56
      %s59 = sphi 0, %s58
      %s73 = sphi 0, %s59
      %s77 = sphi 0, %s77
      %s79 = sphi 0, %s77
      %s80 = sphi 0, %s79
      %s94 = sphi 0, %s80
      %s98 = sphi 0, %s98
      %s100 = sphi 0, %s98
      %s101 = sphi 0, %s100
      %s115 = sphi 0, %s101
      %s119 = sphi 0, %s119
      %s121 = sphi 0, %s119
      %s122 = sphi 0, %s121
      %s136 = sphi 0, %s122
      %s140 = sphi 0, %s140
      %s142 = sphi 0, %s140
      %s143 = sphi 0, %s142
      %s157 = sphi 0, %s143
      %s161 = sphi 0, %s161
      %s163 = sphi 0, %s161
      %s164 = sphi 0, %s163
      %s178 = sphi 0, %s164
      %s182 = sphi 0, %s182
      %s184 = sphi 0, %s182
      %s185 = sphi 0, %s184
      %s199 = sphi 0, %s185
      %s203 = sphi 0, %s203
      %s205 = sphi 0, %s203
      %s206 = sphi 0, %s205
      %s220 = sphi 0, %s206
      %s224 = sphi 0, %s224
      %s226 = sphi 0, %s224
      %s227 = sphi 0, %s226
      %s241 = sphi 0, %s227
      %s245 = sphi 0, %s245
      %s247 = sphi 0, %s245
      %s248 = sphi 0, %s247
      %s262 = sphi 0, %s248
      %s266 = sphi 0, %s266
      %s268 = sphi 0, %s266
      %s269 = sphi 0, %s268
      %s283 = sphi 0, %s269
      %s287 = sphi 0, %s287
      %s289 = sphi 0, %s287
      %s290 = sphi 0, %s289
      %s304 = sphi 0, %s290
    $region4: #{llm_open_qa_forward.3} parent=1 // loop_header_branch
      %25 = sbr.rel (%p23) target = $region8
    $region5: #{llm_open_qa_forward.3} parent=1 // loop_body
      %s27 = ssub.s32 %s22, 1
      %s28 = ssub.s32 %s22, 2
      %s29 = sadd.s32 %s22, 1
      %s30 = ssub.s32 %s22, %s29
      %p31 = scmp.eq.s32.totalorder %s30, 0
      %s33 = sadd.s32 %s32, 1
      %s34 = scalar_select %p31, %s32, %s33
      %p37 = pneg %p31
      %p38 = scmp.eq.s32.totalorder %s22, 1
      %p39 = por %p37, %p38
      %p40 = scmp.ne.s32.totalorder %s32, %s35
      %p41 = scmp.eq.s32.totalorder %s22, 0
      %p42 = por %p40, %p41
      %p43 = scmp.ne.s32.totalorder %s32, %s35
      %p44 = scmp.eq.s32.totalorder %s27, 1
      %p45 = por %p43, %p44
      %p46 = scmp.ne.s32.totalorder %s35, %s36
      %p47 = scmp.eq.s32.totalorder %s27, 0
      %p48 = por %p46, %p47
      %p49 = scmp.ne.s32.totalorder %s35, %s36
      %p50 = scmp.eq.s32.totalorder %s28, 1
      %p51 = por %p49, %p50
      %p53 = scmp.ne.s32.totalorder %s36, %s52
      %p54 = scmp.eq.s32.totalorder %s28, 0
      %p55 = por %p53, %p54
      %s57 = sadd.s32 %s56, 1
      %p60 = scmp.eq.s32.totalorder %s22, 1
      %p61 = scmp.ne.s32.totalorder %s56, %s58
      %p62 = scmp.eq.s32.totalorder %s22, 0
      %p63 = por %p61, %p62
      %p64 = scmp.ne.s32.totalorder %s56, %s58
      %p65 = scmp.eq.s32.totalorder %s27, 1
      %p66 = por %p64, %p65
      %p67 = scmp.ne.s32.totalorder %s58, %s59
      %p68 = scmp.eq.s32.totalorder %s27, 0
      %p69 = por %p67, %p68
      %p70 = scmp.ne.s32.totalorder %s58, %s59
      %p71 = scmp.eq.s32.totalorder %s28, 1
      %p72 = por %p70, %p71
      %p74 = scmp.ne.s32.totalorder %s59, %s73
      %p75 = scmp.eq.s32.totalorder %s28, 0
      %p76 = por %p74, %p75
      %s78 = sadd.s32 %s77, 1
      %p81 = scmp.eq.s32.totalorder %s22, 1
      %p82 = scmp.ne.s32.totalorder %s77, %s79
      %p83 = scmp.eq.s32.totalorder %s22, 0
      %p84 = por %p82, %p83
      %p85 = scmp.ne.s32.totalorder %s77, %s79
      %p86 = scmp.eq.s32.totalorder %s27, 1
      %p87 = por %p85, %p86
      %p88 = scmp.ne.s32.totalorder %s79, %s80
      %p89 = scmp.eq.s32.totalorder %s27, 0
      %p90 = por %p88, %p89
      %p91 = scmp.ne.s32.totalorder %s79, %s80
      %p92 = scmp.eq.s32.totalorder %s28, 1
      %p93 = por %p91, %p92
      %p95 = scmp.ne.s32.totalorder %s80, %s94
      %p96 = scmp.eq.s32.totalorder %s28, 0
      %p97 = por %p95, %p96
      %s99 = sadd.s32 %s98, 1
      %p102 = scmp.eq.s32.totalorder %s22, 1
      %p103 = scmp.ne.s32.totalorder %s98, %s100
      %p104 = scmp.eq.s32.totalorder %s22, 0
      %p105 = por %p103, %p104
      %p106 = scmp.ne.s32.totalorder %s98, %s100
      %p107 = scmp.eq.s32.totalorder %s27, 1
      %p108 = por %p106, %p107
      %p109 = scmp.ne.s32.totalorder %s100, %s101
      %p110 = scmp.eq.s32.totalorder %s27, 0
      %p111 = por %p109, %p110
      %p112 = scmp.ne.s32.totalorder %s100, %s101
      %p113 = scmp.eq.s32.totalorder %s28, 1
      %p114 = por %p112, %p113
      %p116 = scmp.ne.s32.totalorder %s101, %s115
      %p117 = scmp.eq.s32.totalorder %s28, 0
      %p118 = por %p116, %p117
      %s120 = sadd.s32 %s119, 1
      %p123 = scmp.eq.s32.totalorder %s22, 1
      %p124 = scmp.ne.s32.totalorder %s119, %s121
      %p125 = scmp.eq.s32.totalorder %s22, 0
      %p126 = por %p124, %p125
      %p127 = scmp.ne.s32.totalorder %s119, %s121
      %p128 = scmp.eq.s32.totalorder %s27, 1
      %p129 = por %p127, %p128
      %p130 = scmp.ne.s32.totalorder %s121, %s122
      %p131 = scmp.eq.s32.totalorder %s27, 0
      %p132 = por %p130, %p131
      %p133 = scmp.ne.s32.totalorder %s121, %s122
      %p134 = scmp.eq.s32.totalorder %s28, 1
      %p135 = por %p133, %p134
      %p137 = scmp.ne.s32.totalorder %s122, %s136
      %p138 = scmp.eq.s32.totalorder %s28, 0
      %p139 = por %p137, %p138
      %s141 = sadd.s32 %s140, 1
      %p144 = scmp.eq.s32.totalorder %s22, 1
      %p145 = scmp.ne.s32.totalorder %s140, %s142
      %p146 = scmp.eq.s32.totalorder %s22, 0
      %p147 = por %p145, %p146
      %p148 = scmp.ne.s32.totalorder %s140, %s142
      %p149 = scmp.eq.s32.totalorder %s27, 1
      %p150 = por %p148, %p149
      %p151 = scmp.ne.s32.totalorder %s142, %s143
      %p152 = scmp.eq.s32.totalorder %s27, 0
      %p153 = por %p151, %p152
      %p154 = scmp.ne.s32.totalorder %s142, %s143
      %p155 = scmp.eq.s32.totalorder %s28, 1
      %p156 = por %p154, %p155
      %p158 = scmp.ne.s32.totalorder %s143, %s157
      %p159 = scmp.eq.s32.totalorder %s28, 0
      %p160 = por %p158, %p159
      %s162 = sadd.s32 %s161, 1
      %p165 = scmp.eq.s32.totalorder %s22, 1
      %p166 = scmp.ne.s32.totalorder %s161, %s163
      %p167 = scmp.eq.s32.totalorder %s22, 0
      %p168 = por %p166, %p167
      %p169 = scmp.ne.s32.totalorder %s161, %s163
      %p170 = scmp.eq.s32.totalorder %s27, 1
      %p171 = por %p169, %p170
      %p172 = scmp.ne.s32.totalorder %s163, %s164
      %p173 = scmp.eq.s32.totalorder %s27, 0
      %p174 = por %p172, %p173
      %p175 = scmp.ne.s32.totalorder %s163, %s164
      %p176 = scmp.eq.s32.totalorder %s28, 1
      %p177 = por %p175, %p176
      %p179 = scmp.ne.s32.totalorder %s164, %s178
      %p180 = scmp.eq.s32.totalorder %s28, 0
      %p181 = por %p179, %p180
      %s183 = sadd.s32 %s182, 1
      %p186 = scmp.eq.s32.totalorder %s22, 1
      %p187 = scmp.ne.s32.totalorder %s182, %s184
      %p188 = scmp.eq.s32.totalorder %s22, 0
      %p189 = por %p187, %p188
      %p190 = scmp.ne.s32.totalorder %s182, %s184
      %p191 = scmp.eq.s32.totalorder %s27, 1
      %p192 = por %p190, %p191
      %p193 = scmp.ne.s32.totalorder %s184, %s185
      %p194 = scmp.eq.s32.totalorder %s27, 0
      %p195 = por %p193, %p194
      %p196 = scmp.ne.s32.totalorder %s184, %s185
      %p197 = scmp.eq.s32.totalorder %s28, 1
      %p198 = por %p196, %p197
      %p200 = scmp.ne.s32.totalorder %s185, %s199
      %p201 = scmp.eq.s32.totalorder %s28, 0
      %p202 = por %p200, %p201
      %s204 = sadd.s32 %s203, 1
      %p207 = scmp.eq.s32.totalorder %s22, 1
      %p208 = scmp.ne.s32.totalorder %s203, %s205
      %p209 = scmp.eq.s32.totalorder %s22, 0
      %p210 = por %p208, %p209
      %p211 = scmp.ne.s32.totalorder %s203, %s205
      %p212 = scmp.eq.s32.totalorder %s27, 1
      %p213 = por %p211, %p212
      %p214 = scmp.ne.s32.totalorder %s205, %s206
      %p215 = scmp.eq.s32.totalorder %s27, 0
      %p216 = por %p214, %p215
      %p217 = scmp.ne.s32.totalorder %s205, %s206
      %p218 = scmp.eq.s32.totalorder %s28, 1
      %p219 = por %p217, %p218
      %p221 = scmp.ne.s32.totalorder %s206, %s220
      %p222 = scmp.eq.s32.totalorder %s28, 0
      %p223 = por %p221, %p222
      %s225 = sadd.s32 %s224, 1
      %p228 = scmp.eq.s32.totalorder %s22, 1
      %p229 = scmp.ne.s32.totalorder %s224, %s226
      %p230 = scmp.eq.s32.totalorder %s22, 0
      %p231 = por %p229, %p230
      %p232 = scmp.ne.s32.totalorder %s224, %s226
      %p233 = scmp.eq.s32.totalorder %s27, 1
      %p234 = por %p232, %p233
      %p235 = scmp.ne.s32.totalorder %s226, %s227
      %p236 = scmp.eq.s32.totalorder %s27, 0
      %p237 = por %p235, %p236
      %p238 = scmp.ne.s32.totalorder %s226, %s227
      %p239 = scmp.eq.s32.totalorder %s28, 1
      %p240 = por %p238, %p239
      %p242 = scmp.ne.s32.totalorder %s227, %s241
      %p243 = scmp.eq.s32.totalorder %s28, 0
      %p244 = por %p242, %p243
      %s246 = sadd.s32 %s245, 1
      %p249 = scmp.eq.s32.totalorder %s22, 1
      %p250 = scmp.ne.s32.totalorder %s245, %s247
      %p251 = scmp.eq.s32.totalorder %s22, 0
      %p252 = por %p250, %p251
      %p253 = scmp.ne.s32.totalorder %s245, %s247
      %p254 = scmp.eq.s32.totalorder %s27, 1
      %p255 = por %p253, %p254
      %p256 = scmp.ne.s32.totalorder %s247, %s248
      %p257 = scmp.eq.s32.totalorder %s27, 0
      %p258 = por %p256, %p257
      %p259 = scmp.ne.s32.totalorder %s247, %s248
      %p260 = scmp.eq.s32.totalorder %s28, 1
      %p261 = por %p259, %p260
      %p263 = scmp.ne.s32.totalorder %s248, %s262
      %p264 = scmp.eq.s32.totalorder %s28, 0
      %p265 = por %p263, %p264
      %s267 = sadd.s32 %s266, 1
      %p270 = scmp.eq.s32.totalorder %s22, 1
      %p271 = scmp.ne.s32.totalorder %s266, %s268
      %p272 = scmp.eq.s32.totalorder %s22, 0
      %p273 = por %p271, %p272
      %p274 = scmp.ne.s32.totalorder %s266, %s268
      %p275 = scmp.eq.s32.totalorder %s27, 1
      %p276 = por %p274, %p275
      %p277 = scmp.ne.s32.totalorder %s268, %s269
      %p278 = scmp.eq.s32.totalorder %s27, 0
      %p279 = por %p277, %p278
      %p280 = scmp.ne.s32.totalorder %s268, %s269
      %p281 = scmp.eq.s32.totalorder %s28, 1
      %p282 = por %p280, %p281
      %p284 = scmp.ne.s32.totalorder %s269, %s283
      %p285 = scmp.eq.s32.totalorder %s28, 0
      %p286 = por %p284, %p285
      %s288 = sadd.s32 %s287, 1
      %p291 = scmp.eq.s32.totalorder %s22, 1
      %p292 = scmp.ne.s32.totalorder %s287, %s289
      %p293 = scmp.eq.s32.totalorder %s22, 0
      %p294 = por %p292, %p293
      %p295 = scmp.ne.s32.totalorder %s287, %s289
      %p296 = scmp.eq.s32.totalorder %s27, 1
      %p297 = por %p295, %p296
      %p298 = scmp.ne.s32.totalorder %s289, %s290
      %p299 = scmp.eq.s32.totalorder %s27, 0
      %p300 = por %p298, %p299
      %p301 = scmp.ne.s32.totalorder %s289, %s290
      %p302 = scmp.eq.s32.totalorder %s28, 1
      %p303 = por %p301, %p302
      %p305 = scmp.ne.s32.totalorder %s290, %s304
      %p306 = scmp.eq.s32.totalorder %s28, 0
      %p307 = por %p305, %p306
      %p308 = scmp.le.s32.totalorder 1, %s22
      %p309 = scmp.lt.s32.totalorder %s22, 3
      %p310 = pnand %p308, %p309
      %p311 = pneg %p310
      // Predicated region
      $region9: #{llm_open_qa_forward.3} parent=5 // pred_check
        _
      $region10: #{llm_open_qa_forward.3} parent=5 // pred_check_branch
        %313 = sbr.rel (%p310) target = $region12
      $region11: #{llm_open_qa_forward.3} parent=5 // pred_region
        %s314 = ssub.s32 %s22, 1
        // Predicated region
        $region13: #{llm_open_qa_forward.3} parent=11 // pred_check
          %p315 = pneg %p69
        $region14: #{llm_open_qa_forward.3} parent=11 // pred_check_branch
          %317 = sbr.rel (%p315) target = $region16
        $region15: #{llm_open_qa_forward.3} parent=11 // pred_region
          %s319 = ssub.s32 1024, 1024
          %320 = vsyncadd [#allocation5], %s319
          %s321 = sshll.u32 [#allocation4], 4
          %s322 = int_to_ptr.vmem [resolvable:$true] %s321
          %327 = dma.hbm_to_vmem [thread:$0]  %s1, 1024, %s322, [#allocation5], 64, 64, 4
        $region16: #{llm_open_qa_forward.3} parent=11 // pred_fallthru
          _
        // Predicated region
        $region17: #{llm_open_qa_forward.3} parent=11 // pred_check
          %p328 = pneg %p90
        $region18: #{llm_open_qa_forward.3} parent=11 // pred_check_branch
          %330 = sbr.rel (%p328) target = $region20
        $region19: #{llm_open_qa_forward.3} parent=11 // pred_region
          %s332 = ssub.s32 1024, 1024
          %333 = vsyncadd [#allocation7], %s332
          %s334 = sshll.u32 [#allocation6], 4
          %s335 = int_to_ptr.vmem [resolvable:$true] %s334
          %340 = dma.hbm_to_vmem [thread:$0]  %s2, 1024, %s335, [#allocation7], 64, 64, 4
        $region20: #{llm_open_qa_forward.3} parent=11 // pred_fallthru
          _
        // Predicated region
        $region21: #{llm_open_qa_forward.3} parent=11 // pred_check
          %p341 = pneg %p111
        $region22: #{llm_open_qa_forward.3} parent=11 // pred_check_branch
          %343 = sbr.rel (%p341) target = $region24
        $region23: #{llm_open_qa_forward.3} parent=11 // pred_region
          _
        $region24: #{llm_open_qa_forward.3} parent=11 // pred_fallthru
          _
        // Predicated region
        $region25: #{llm_open_qa_forward.3} parent=11 // pred_check
          %p344 = pneg %p132
        $region26: #{llm_open_qa_forward.3} parent=11 // pred_check_branch
          %346 = sbr.rel (%p344) target = $region28
        $region27: #{llm_open_qa_forward.3} parent=11 // pred_region
          _
        $region28: #{llm_open_qa_forward.3} parent=11 // pred_fallthru
          _
        // Predicated region
        $region29: #{llm_open_qa_forward.3} parent=11 // pred_check
          %p347 = pneg %p153
        $region30: #{llm_open_qa_forward.3} parent=11 // pred_check_branch
          %349 = sbr.rel (%p347) target = $region32
        $region31: #{llm_open_qa_forward.3} parent=11 // pred_region
          %s351 = ssub.s32 96, 96
          %352 = vsyncadd [#allocation7], %s351
          %s354 = sshll.u32 [#allocation8], 4
          %s355 = int_to_ptr.vmem [resolvable:$true] %s354
          %357 = dma.hbm_to_vmem [thread:$0]  %s5, 96, %s355, [#allocation7]
        $region32: #{llm_open_qa_forward.3} parent=11 // pred_fallthru
          _
        // Predicated region
        $region33: #{llm_open_qa_forward.3} parent=11 // pred_check
          %p358 = pneg %p174
        $region34: #{llm_open_qa_forward.3} parent=11 // pred_check_branch
          %360 = sbr.rel (%p358) target = $region36
        $region35: #{llm_open_qa_forward.3} parent=11 // pred_region
          %s362 = ssub.s32 1024, 1024
          %363 = vsyncadd [#allocation10], %s362
          %s364 = sshll.u32 [#allocation9], 4
          %s365 = int_to_ptr.vmem [resolvable:$true] %s364
          %370 = dma.hbm_to_vmem [thread:$0]  %s6, 1024, %s365, [#allocation10], 64, 64, 4
        $region36: #{llm_open_qa_forward.3} parent=11 // pred_fallthru
          _
        // Predicated region
        $region37: #{llm_open_qa_forward.3} parent=11 // pred_check
          %p371 = pneg %p195
        $region38: #{llm_open_qa_forward.3} parent=11 // pred_check_branch
          %373 = sbr.rel (%p371) target = $region40
        $region39: #{llm_open_qa_forward.3} parent=11 // pred_region
          _
        $region40: #{llm_open_qa_forward.3} parent=11 // pred_fallthru
          _
        // Predicated region
        $region41: #{llm_open_qa_forward.3} parent=11 // pred_check
          %p374 = pneg %p216
        $region42: #{llm_open_qa_forward.3} parent=11 // pred_check_branch
          %376 = sbr.rel (%p374) target = $region44
        $region43: #{llm_open_qa_forward.3} parent=11 // pred_region
          %s378 = ssub.s32 1024, 1024
          %379 = vsyncadd [#allocation10], %s378
          %s380 = sshll.u32 [#allocation11], 4
          %s381 = int_to_ptr.vmem [resolvable:$true] %s380
          %386 = dma.hbm_to_vmem [thread:$0]  %s8, 1024, %s381, [#allocation10], 64, 64, 4
        $region44: #{llm_open_qa_forward.3} parent=11 // pred_fallthru
          _
        // Predicated region
        $region45: #{llm_open_qa_forward.3} parent=11 // pred_check
          %p387 = pneg %p237
        $region46: #{llm_open_qa_forward.3} parent=11 // pred_check_branch
          %389 = sbr.rel (%p387) target = $region48
        $region47: #{llm_open_qa_forward.3} parent=11 // pred_region
          _
        $region48: #{llm_open_qa_forward.3} parent=11 // pred_fallthru
          _
      $region12: #{llm_open_qa_forward.3} parent=5 // pred_fallthru
        _
      %p390 = scmp.lt.s32.totalorder %s22, 2
      // Predicated region
      $region49: #{llm_open_qa_forward.3} parent=5 // pred_check
        %p391 = pneg %p390
      $region50: #{llm_open_qa_forward.3} parent=5 // pred_check_branch
        %393 = sbr.rel (%p391) target = $region52
      $region51: #{llm_open_qa_forward.3} parent=5 // pred_region
        // Predicated region
        $region53: #{llm_open_qa_forward.3} parent=51 // pred_check
          %p394 = pneg %p42
        $region54: #{llm_open_qa_forward.3} parent=51 // pred_check_branch
          %396 = sbr.rel (%p394) target = $region56
        $region55: #{llm_open_qa_forward.3} parent=51 // pred_region
          %p397 = scmp.lt.s32.totalorder %s22, 1
          %s398 = scalar_select %p397, %s22, 1
          %s399 = smul.addr %s398, 2
          %s400 = smul.addr %s399, 4
          %s401 = scalar_lea.vmem %s0, %s400
        $region56: #{llm_open_qa_forward.3} parent=51 // pred_fallthru
          _
      $region52: #{llm_open_qa_forward.3} parent=5 // pred_fallthru
        _
      %p402 = scmp.le.s32.totalorder 1, %s22
      %p403 = scmp.lt.s32.totalorder %s22, 3
      %p404 = pnand %p402, %p403
      %p405 = pneg %p404
      // Predicated region
      $region57: #{llm_open_qa_forward.3} parent=5 // pred_check
        _
      $region58: #{llm_open_qa_forward.3} parent=5 // pred_check_branch
        %407 = sbr.rel (%p404) target = $region60
      $region59: #{llm_open_qa_forward.3} parent=5 // pred_region
        %s408 = ssub.s32 %s22, 1
        // Predicated region
        $region61: #{llm_open_qa_forward.3} parent=59 // pred_check
          %p409 = pneg %p69
        $region62: #{llm_open_qa_forward.3} parent=59 // pred_check_branch
          %411 = sbr.rel (%p409) target = $region64
        $region63: #{llm_open_qa_forward.3} parent=59 // pred_region
          %412 = dma.done [#allocation5], 1024
        $region64: #{llm_open_qa_forward.3} parent=59 // pred_fallthru
          _
        // Predicated region
        $region65: #{llm_open_qa_forward.3} parent=59 // pred_check
          %p413 = pneg %p90
        $region66: #{llm_open_qa_forward.3} parent=59 // pred_check_branch
          %415 = sbr.rel (%p413) target = $region68
        $region67: #{llm_open_qa_forward.3} parent=59 // pred_region
          %416 = dma.done [#allocation7], 1024
        $region68: #{llm_open_qa_forward.3} parent=59 // pred_fallthru
          _
        // Predicated region
        $region69: #{llm_open_qa_forward.3} parent=59 // pred_check
          %p417 = pneg %p153
        $region70: #{llm_open_qa_forward.3} parent=59 // pred_check_branch
          %419 = sbr.rel (%p417) target = $region72
        $region71: #{llm_open_qa_forward.3} parent=59 // pred_region
          %420 = dma.done [#allocation7], 96
        $region72: #{llm_open_qa_forward.3} parent=59 // pred_fallthru
          _
        // Predicated region
        $region73: #{llm_open_qa_forward.3} parent=59 // pred_check
          %p421 = pneg %p174
        $region74: #{llm_open_qa_forward.3} parent=59 // pred_check_branch
          %423 = sbr.rel (%p421) target = $region76
        $region75: #{llm_open_qa_forward.3} parent=59 // pred_region
          %424 = dma.done [#allocation10], 1024
        $region76: #{llm_open_qa_forward.3} parent=59 // pred_fallthru
          _
        // Predicated region
        $region77: #{llm_open_qa_forward.3} parent=59 // pred_check
          %p425 = pneg %p216
        $region78: #{llm_open_qa_forward.3} parent=59 // pred_check_branch
          %427 = sbr.rel (%p425) target = $region80
        $region79: #{llm_open_qa_forward.3} parent=59 // pred_region
          %428 = dma.done [#allocation10], 1024
        $region80: #{llm_open_qa_forward.3} parent=59 // pred_fallthru
          _
        %p429 = scmp.lt.s32.totalorder %s27, 1
        %s430 = scalar_select %p429, %s27, 1
        %s431 = smul.addr %s430, 2
        %s432 = smul.addr %s431, 4
        %s433 = scalar_lea.vmem %s0, %s432
        %p434 = pneg %p48
        %p435 = pneg %p45
        %p436 = pneg %p69
        %p437 = pneg %p66
        %p438 = pneg %p90
        %p439 = pneg %p87
        %p440 = pneg %p111
        %p441 = pneg %p108
        %p442 = pneg %p132
        %p443 = pneg %p129
        %p444 = pneg %p153
        %p445 = pneg %p150
        %p446 = pneg %p174
        %p447 = pneg %p171
        %p448 = pneg %p195
        %p449 = pneg %p192
        %p450 = pneg %p216
        %p451 = pneg %p213
        %p452 = pneg %p237
        %p453 = pneg %p234
        %p454 = pneg %p258
        %p455 = pneg %p255
        %p456 = pneg %p279
        %p457 = pneg %p276
        %p458 = pneg %p300
        %p459 = pneg %p297
        %p460 = scmp.lt.s32.totalorder %s27, 1
        %s461 = scalar_select %p460, %s27, 1
        %s462 = smul.addr %s461, 2
        %s463 = smul.addr %s462, 4
        %s464 = scalar_lea.vmem %s0, %s463
        %p466 = scmp.eq.s32.totalorder %s27, 0
        // Predicated region
        $region81: #{llm_open_qa_forward.3} parent=59 // pred_check
          %p467 = pneg %p466
        $region82: #{llm_open_qa_forward.3} parent=59 // pred_check_branch
          %469 = sbr.rel (%p467) target = $region84
        $region83: #{llm_open_qa_forward.3} parent=59 // pred_region
          %470 = vst [vmem:[#allocation2] sm:$0x3f] 0.0
          %471 = vst [vmem:[#allocation3] sm:$0x3f] 0.0
        $region84: #{llm_open_qa_forward.3} parent=59 // pred_fallthru
          _
        %v472 = vld [vmem:[%s464] sm:$0xf]
        %v473 = vld [vmem:[%s464 + $0x4] sm:$0x3]
        %v474 = vld [vmem:[#allocation4] sm:$0xf]
        %v475 = vld [vmem:[#allocation4 + $0x4] sm:$0xf]
        %v476 = vld [vmem:[#allocation4 + $0x8] sm:$0xf]
        %v477 = vld [vmem:[#allocation4 + $0xc] sm:$0xf]
        %v478 = vld [vmem:[#allocation4 + $0x10] sm:$0xf]
        %v479 = vld [vmem:[#allocation4 + $0x14] sm:$0xf]
        %v480 = vld [vmem:[#allocation4 + $0x18] sm:$0xf]
        %v481 = vld [vmem:[#allocation4 + $0x1c] sm:$0xf]
        %v482 = vld [vmem:[#allocation4 + $0x20] sm:$0xf]
        %v483 = vld [vmem:[#allocation4 + $0x24] sm:$0xf]
        %v484 = vld [vmem:[#allocation4 + $0x28] sm:$0xf]
        %v485 = vld [vmem:[#allocation4 + $0x2c] sm:$0xf]
        %v486 = vld [vmem:[#allocation4 + $0x30] sm:$0xf]
        %v487 = vld [vmem:[#allocation4 + $0x34] sm:$0xf]
        %v488 = vld [vmem:[#allocation4 + $0x38] sm:$0xf]
        %v489 = vld [vmem:[#allocation4 + $0x3c] sm:$0xf]
        %v492 = vunpack.c.l.b16 %v472
        %v493 = vunpack.c.l.b16 %v473
        %v494 = vpack.c.b16 %v493, %v492
        %v512 = vunpack.c.l.b16 %v474
        %v513 = vunpack.c.l.b16 %v475
        %v514 = vunpack.c.l.b16 %v476
        %v515 = vunpack.c.l.b16 %v477
        %v516 = vunpack.c.l.b16 %v478
        %v517 = vunpack.c.l.b16 %v479
        %v518 = vunpack.c.l.b16 %v480
        %v519 = vunpack.c.l.b16 %v481
        %v520 = vunpack.c.l.b16 %v482
        %v521 = vunpack.c.l.b16 %v483
        %v522 = vunpack.c.l.b16 %v484
        %v523 = vunpack.c.l.b16 %v485
        %v524 = vunpack.c.l.b16 %v486
        %v525 = vunpack.c.l.b16 %v487
        %v526 = vunpack.c.l.b16 %v488
        %v527 = vunpack.c.l.b16 %v489
        %v528 = vpack.c.b16 %v513, %v512
        %v529 = vpack.c.b16 %v515, %v514
        %v530 = vpack.c.b16 %v517, %v516
        %v531 = vpack.c.b16 %v519, %v518
        %v532 = vpack.c.b16 %v521, %v520
        %v533 = vpack.c.b16 %v523, %v522
        %v534 = vpack.c.b16 %v525, %v524
        %v535 = vpack.c.b16 %v527, %v526
        %544 = vmatprep.subr.bf16.mxu0 0
        %545 = vmatpush1.bf16.msra.mxu0 %v528
        %546 = vmatprep.subr.bf16.mxu0 0
        %547 = vmatpush1.bf16.msra.mxu0 %v529
        %548 = vmatprep.subr.bf16.mxu0 0
        %549 = vmatpush1.bf16.msra.mxu0 %v530
        %550 = vmatprep.subr.bf16.mxu0 0
        %551 = vmatpush1.bf16.msra.mxu0 %v531
        %552 = vmatprep.subr.bf16.mxu0 0
        %553 = vmatpush1.bf16.msra.mxu0 %v532
        %554 = vmatprep.subr.bf16.mxu0 0
        %555 = vmatpush1.bf16.msra.mxu0 %v533
        %556 = vmatprep.subr.bf16.mxu0 0
        %557 = vmatpush1.bf16.msra.mxu0 %v534
        %558 = vmatprep.subr.bf16.mxu0 0
        %559 = vmatpush1.bf16.msra.mxu0 %v535
        %560 = vmatprep.subr.bf16.mxu0 0
        %561 = vmatpush1.bf16.msra.mxu0 0
        %562 = vmatprep.subr.bf16.mxu0 0
        %563 = vmatpush1.bf16.msra.mxu0 0
        %564 = vmatprep.subr.bf16.mxu0 0
        %565 = vmatpush1.bf16.msra.mxu0 0
        %566 = vmatprep.subr.bf16.mxu0 0
        %567 = vmatpush1.bf16.msra.mxu0 0
        %568 = vmatprep.subr.bf16.mxu0 0
        %569 = vmatpush1.bf16.msra.mxu0 0
        %570 = vmatprep.subr.bf16.mxu0 0
        %571 = vmatpush1.bf16.msra.mxu0 0
        %572 = vmatprep.subr.bf16.mxu0 0
        %573 = vmatpush1.bf16.msra.mxu0 0
        %574 = vmatprep.subr.bf16.mxu0 0
        %575 = vmatpush1.bf16.msra.mxu0 0
        %576 = vmatprep.mubr.bf16.mxu0 0
        %577 = vmatmul.mubr.bf16.gmra.mrb[0].mxu0 %v494
        %v578 = vpop.f32.mrb[0].mxu0
        %v579 = vadd.f32 0.0, %v578
        %v580 = vpop.f32.mrb[0].mxu0
        %v581 = vpop.f32.mrb[0].mxu0
        %v582 = vadd.f32 0.0, %v581
        %v583 = vpop.f32.mrb[0].mxu0
        %584 = vdwg.mxu0
        %v585 = vpack.c.bf16 %v582, %v579
        %v586 = vld [vmem:[#allocation6] sm:$0xf]
        %v587 = vld [vmem:[#allocation6 + $0x4] sm:$0xf]
        %v588 = vld [vmem:[#allocation6 + $0x8] sm:$0xf]
        %v589 = vld [vmem:[#allocation6 + $0xc] sm:$0xf]
        %v590 = vld [vmem:[#allocation6 + $0x10] sm:$0xf]
        %v591 = vld [vmem:[#allocation6 + $0x14] sm:$0xf]
        %v592 = vld [vmem:[#allocation6 + $0x18] sm:$0xf]
        %v593 = vld [vmem:[#allocation6 + $0x1c] sm:$0xf]
        %v594 = vld [vmem:[#allocation6 + $0x20] sm:$0xf]
        %v595 = vld [vmem:[#allocation6 + $0x24] sm:$0xf]
        %v596 = vld [vmem:[#allocation6 + $0x28] sm:$0xf]
        %v597 = vld [vmem:[#allocation6 + $0x2c] sm:$0xf]
        %v598 = vld [vmem:[#allocation6 + $0x30] sm:$0xf]
        %v599 = vld [vmem:[#allocation6 + $0x34] sm:$0xf]
        %v600 = vld [vmem:[#allocation6 + $0x38] sm:$0xf]
        %v601 = vld [vmem:[#allocation6 + $0x3c] sm:$0xf]
        %v602 = vld [vmem:[%s3] sm:$0x1]
        %v604 = vlaneseq
        %v605 = vshrl.u32 %v604, 7
        %v606 = vsub.s32 0, %v605
        %v607 = vrot.slane %v602, %v606
        %v625 = vunpack.c.l.b16 %v586
        %v626 = vunpack.c.l.b16 %v587
        %v627 = vunpack.c.l.b16 %v588
        %v628 = vunpack.c.l.b16 %v589
        %v629 = vunpack.c.l.b16 %v590
        %v630 = vunpack.c.l.b16 %v591
        %v631 = vunpack.c.l.b16 %v592
        %v632 = vunpack.c.l.b16 %v593
        %v633 = vunpack.c.l.b16 %v594
        %v634 = vunpack.c.l.b16 %v595
        %v635 = vunpack.c.l.b16 %v596
        %v636 = vunpack.c.l.b16 %v597
        %v637 = vunpack.c.l.b16 %v598
        %v638 = vunpack.c.l.b16 %v599
        %v639 = vunpack.c.l.b16 %v600
        %v640 = vunpack.c.l.b16 %v601
        %v641 = vpack.c.b16 %v626, %v625
        %v642 = vpack.c.b16 %v628, %v627
        %v643 = vpack.c.b16 %v630, %v629
        %v644 = vpack.c.b16 %v632, %v631
        %v645 = vpack.c.b16 %v634, %v633
        %v646 = vpack.c.b16 %v636, %v635
        %v647 = vpack.c.b16 %v638, %v637
        %v648 = vpack.c.b16 %v640, %v639
        %657 = vmatprep.subr.bf16.mxu0 0
        %658 = vmatpush1.bf16.msra.mxu0 %v641
        %659 = vmatprep.subr.bf16.mxu0 0
        %660 = vmatpush1.bf16.msra.mxu0 %v642
        %661 = vmatprep.subr.bf16.mxu0 0
        %662 = vmatpush1.bf16.msra.mxu0 %v643
        %663 = vmatprep.subr.bf16.mxu0 0
        %664 = vmatpush1.bf16.msra.mxu0 %v644
        %665 = vmatprep.subr.bf16.mxu0 0
        %666 = vmatpush1.bf16.msra.mxu0 %v645
        %667 = vmatprep.subr.bf16.mxu0 0
        %668 = vmatpush1.bf16.msra.mxu0 %v646
        %669 = vmatprep.subr.bf16.mxu0 0
        %670 = vmatpush1.bf16.msra.mxu0 %v647
        %671 = vmatprep.subr.bf16.mxu0 0
        %672 = vmatpush1.bf16.msra.mxu0 %v648
        %673 = vmatprep.subr.bf16.mxu0 0
        %674 = vmatpush1.bf16.msra.mxu0 0
        %675 = vmatprep.subr.bf16.mxu0 0
        %676 = vmatpush1.bf16.msra.mxu0 0
        %677 = vmatprep.subr.bf16.mxu0 0
        %678 = vmatpush1.bf16.msra.mxu0 0
        %679 = vmatprep.subr.bf16.mxu0 0
        %680 = vmatpush1.bf16.msra.mxu0 0
        %681 = vmatprep.subr.bf16.mxu0 0
        %682 = vmatpush1.bf16.msra.mxu0 0
        %683 = vmatprep.subr.bf16.mxu0 0
        %684 = vmatpush1.bf16.msra.mxu0 0
        %685 = vmatprep.subr.bf16.mxu0 0
        %686 = vmatpush1.bf16.msra.mxu0 0
        %687 = vmatprep.subr.bf16.mxu0 0
        %688 = vmatpush1.bf16.msra.mxu0 0
        %689 = vmatprep.mubr.bf16.mxu0 0
        %690 = vmatmul.mubr.bf16.gmra.mrb[0].mxu0 %v585
        %v691 = vpop.f32.mrb[0].mxu0
        %v692 = vadd.f32 %v607, %v691
        %v693 = vpop.f32.mrb[0].mxu0
        %v694 = vpop.f32.mrb[0].mxu0
        %v695 = vadd.f32 %v607, %v694
        %v696 = vpop.f32.mrb[0].mxu0
        %697 = vdwg.mxu0
        %v698 = vpack.c.bf16 %v695, %v692
        %v699 = vld [vmem:[%s4] sm:$0xff]
        %v700 = vld [vmem:[%s4 + $0x8] sm:$0xff]
        %v701 = vld [vmem:[%s4 + $0x10] sm:$0xff]
        %v702 = vld [vmem:[%s4 + $0x18] sm:$0xff]
        %v703 = vld [vmem:[%s4 + $0x20] sm:$0xff]
        %v704 = vld [vmem:[%s4 + $0x28] sm:$0xff]
        %v705 = vld [vmem:[%s4 + $0x30] sm:$0xff]
        %v706 = vld [vmem:[%s4 + $0x38] sm:$0xff]
        %v707 = vld [vmem:[%s4 + $0x40] sm:$0xff]
        %v708 = vld [vmem:[%s4 + $0x48] sm:$0xff]
        %v709 = vld [vmem:[%s4 + $0x50] sm:$0xff]
        %v710 = vld [vmem:[%s4 + $0x58] sm:$0xff]
        %v711 = vld [vmem:[%s4 + $0x60] sm:$0xff]
        %v712 = vld [vmem:[%s4 + $0x68] sm:$0xff]
        %v713 = vld [vmem:[%s4 + $0x70] sm:$0xff]
        %v714 = vld [vmem:[%s4 + $0x78] sm:$0xff]
        %v715 = vld [vmem:[%s4 + $0x80] sm:$0xff]
        %v716 = vld [vmem:[%s4 + $0x88] sm:$0xff]
        %v717 = vld [vmem:[%s4 + $0x90] sm:$0xff]
        %v718 = vld [vmem:[%s4 + $0x98] sm:$0xff]
        %v719 = vld [vmem:[%s4 + $0xa0] sm:$0xff]
        %v720 = vld [vmem:[%s4 + $0xa8] sm:$0xff]
        %v721 = vld [vmem:[%s4 + $0xb0] sm:$0xff]
        %v722 = vld [vmem:[%s4 + $0xb8] sm:$0xff]
        %v723 = vld [vmem:[%s4 + $0xc0] sm:$0xff]
        %v724 = vld [vmem:[%s4 + $0xc8] sm:$0xff]
        %v725 = vld [vmem:[%s4 + $0xd0] sm:$0xff]
        %v726 = vld [vmem:[%s4 + $0xd8] sm:$0xff]
        %v727 = vld [vmem:[%s4 + $0xe0] sm:$0xff]
        %v728 = vld [vmem:[%s4 + $0xe8] sm:$0xff]
        %v729 = vld [vmem:[%s4 + $0xf0] sm:$0xff]
        %v730 = vld [vmem:[%s4 + $0xf8] sm:$0xff]
        %v731 = vld [vmem:[%s4 + $0x100] sm:$0xff]
        %v732 = vld [vmem:[%s4 + $0x108] sm:$0xff]
        %v733 = vld [vmem:[%s4 + $0x110] sm:$0xff]
        %v734 = vld [vmem:[%s4 + $0x118] sm:$0xff]
        %v735 = vld [vmem:[%s4 + $0x120] sm:$0xff]
        %v736 = vld [vmem:[%s4 + $0x128] sm:$0xff]
        %v737 = vld [vmem:[%s4 + $0x130] sm:$0xff]
        %v738 = vld [vmem:[%s4 + $0x138] sm:$0xff]
        %v739 = vld [vmem:[%s4 + $0x140] sm:$0xff]
        %v740 = vld [vmem:[%s4 + $0x148] sm:$0xff]
        %v741 = vld [vmem:[%s4 + $0x150] sm:$0xff]
        %v742 = vld [vmem:[%s4 + $0x158] sm:$0xff]
        %v743 = vld [vmem:[%s4 + $0x160] sm:$0xff]
        %v744 = vld [vmem:[%s4 + $0x168] sm:$0xff]
        %v745 = vld [vmem:[%s4 + $0x170] sm:$0xff]
        %v746 = vld [vmem:[%s4 + $0x178] sm:$0xff]
        %v747 = vld [vmem:[#allocation8] sm:$0x3f]
        %v749 = vlaneseq
        %v750 = vshrl.u32 %v749, 7
        %v751 = vsub.s32 0, %v750
        %v752 = vrot.slane %v747, %v751
        %v753 = vlaneseq
        %v754 = vshrl.u32 %v753, 7
        %v755 = vsub.s32 1, %v754
        %v756 = vrot.slane %v747, %v755
        %v757 = vlaneseq
        %v758 = vshrl.u32 %v757, 7
        %v759 = vsub.s32 2, %v758
        %v760 = vrot.slane %v747, %v759
        %v761 = vlaneseq
        %v762 = vshrl.u32 %v761, 7
        %v763 = vsub.s32 3, %v762
        %v764 = vrot.slane %v747, %v763
        %v765 = vlaneseq
        %v766 = vshrl.u32 %v765, 7
        %v767 = vsub.s32 4, %v766
        %v768 = vrot.slane %v747, %v767
        %v769 = vlaneseq
        %v770 = vshrl.u32 %v769, 7
        %v771 = vsub.s32 5, %v770
        %v772 = vrot.slane %v747, %v771
        %v827 = vunpack.c.l.b16 %v699
        %v828 = vunpack.c.h.b16 %v699
        %v829 = vunpack.c.l.b16 %v700
        %v830 = vunpack.c.h.b16 %v700
        %v831 = vunpack.c.l.b16 %v701
        %v832 = vunpack.c.h.b16 %v701
        %v833 = vunpack.c.l.b16 %v702
        %v834 = vunpack.c.h.b16 %v702
        %v835 = vunpack.c.l.b16 %v703
        %v836 = vunpack.c.h.b16 %v703
        %v837 = vunpack.c.l.b16 %v704
        %v838 = vunpack.c.h.b16 %v704
        %v839 = vunpack.c.l.b16 %v705
        %v840 = vunpack.c.h.b16 %v705
        %v841 = vunpack.c.l.b16 %v706
        %v842 = vunpack.c.h.b16 %v706
        %v843 = vunpack.c.l.b16 %v707
        %v844 = vunpack.c.h.b16 %v707
        %v845 = vunpack.c.l.b16 %v708
        %v846 = vunpack.c.h.b16 %v708
        %v847 = vunpack.c.l.b16 %v709
        %v848 = vunpack.c.h.b16 %v709
        %v849 = vunpack.c.l.b16 %v710
        %v850 = vunpack.c.h.b16 %v710
        %v851 = vunpack.c.l.b16 %v711
        %v852 = vunpack.c.h.b16 %v711
        %v853 = vunpack.c.l.b16 %v712
        %v854 = vunpack.c.h.b16 %v712
        %v855 = vunpack.c.l.b16 %v713
        %v856 = vunpack.c.h.b16 %v713
        %v857 = vunpack.c.l.b16 %v714
        %v858 = vunpack.c.h.b16 %v714
        %v859 = vunpack.c.l.b16 %v715
        %v860 = vunpack.c.h.b16 %v715
        %v861 = vunpack.c.l.b16 %v716
        %v862 = vunpack.c.h.b16 %v716
        %v863 = vunpack.c.l.b16 %v717
        %v864 = vunpack.c.h.b16 %v717
        %v865 = vunpack.c.l.b16 %v718
        %v866 = vunpack.c.h.b16 %v718
        %v867 = vunpack.c.l.b16 %v719
        %v868 = vunpack.c.h.b16 %v719
        %v869 = vunpack.c.l.b16 %v720
        %v870 = vunpack.c.h.b16 %v720
        %v871 = vunpack.c.l.b16 %v721
        %v872 = vunpack.c.h.b16 %v721
        %v873 = vunpack.c.l.b16 %v722
        %v874 = vunpack.c.h.b16 %v722
        %v875 = vunpack.c.l.b16 %v723
        %v876 = vunpack.c.h.b16 %v723
        %v877 = vunpack.c.l.b16 %v724
        %v878 = vunpack.c.h.b16 %v724
        %v879 = vunpack.c.l.b16 %v725
        %v880 = vunpack.c.h.b16 %v725
        %v881 = vunpack.c.l.b16 %v726
        %v882 = vunpack.c.h.b16 %v726
        %v883 = vunpack.c.l.b16 %v727
        %v884 = vunpack.c.h.b16 %v727
        %v885 = vunpack.c.l.b16 %v728
        %v886 = vunpack.c.h.b16 %v728
        %v887 = vunpack.c.l.b16 %v729
        %v888 = vunpack.c.h.b16 %v729
        %v889 = vunpack.c.l.b16 %v730
        %v890 = vunpack.c.h.b16 %v730
        %v891 = vunpack.c.l.b16 %v731
        %v892 = vunpack.c.h.b16 %v731
        %v893 = vunpack.c.l.b16 %v732
        %v894 = vunpack.c.h.b16 %v732
        %v895 = vunpack.c.l.b16 %v733
        %v896 = vunpack.c.h.b16 %v733
        %v897 = vunpack.c.l.b16 %v734
        %v898 = vunpack.c.h.b16 %v734
        %v899 = vunpack.c.l.b16 %v735
        %v900 = vunpack.c.h.b16 %v735
        %v901 = vunpack.c.l.b16 %v736
        %v902 = vunpack.c.h.b16 %v736
        %v903 = vunpack.c.l.b16 %v737
        %v904 = vunpack.c.h.b16 %v737
        %v905 = vunpack.c.l.b16 %v738
        %v906 = vunpack.c.h.b16 %v738
        %v907 = vunpack.c.l.b16 %v739
        %v908 = vunpack.c.h.b16 %v739
        %v909 = vunpack.c.l.b16 %v740
        %v910 = vunpack.c.h.b16 %v740
        %v911 = vunpack.c.l.b16 %v741
        %v912 = vunpack.c.h.b16 %v741
        %v913 = vunpack.c.l.b16 %v742
        %v914 = vunpack.c.h.b16 %v742
        %v915 = vunpack.c.l.b16 %v743
        %v916 = vunpack.c.h.b16 %v743
        %v917 = vunpack.c.l.b16 %v744
        %v918 = vunpack.c.h.b16 %v744
        %v919 = vunpack.c.l.b16 %v745
        %v920 = vunpack.c.h.b16 %v745
        %v921 = vunpack.c.l.b16 %v746
        %v922 = vunpack.c.h.b16 %v746
        %v923 = vpack.c.b16 %v833, %v827
        %v924 = vpack.c.b16 %v834, %v828
        %v925 = vpack.c.b16 %v835, %v829
        %v926 = vpack.c.b16 %v836, %v830
        %v927 = vpack.c.b16 %v837, %v831
        %v928 = vpack.c.b16 %v838, %v832
        %v929 = vpack.c.b16 %v845, %v839
        %v930 = vpack.c.b16 %v846, %v840
        %v931 = vpack.c.b16 %v847, %v841
        %v932 = vpack.c.b16 %v848, %v842
        %v933 = vpack.c.b16 %v849, %v843
        %v934 = vpack.c.b16 %v850, %v844
        %v935 = vpack.c.b16 %v857, %v851
        %v936 = vpack.c.b16 %v858, %v852
        %v937 = vpack.c.b16 %v859, %v853
        %v938 = vpack.c.b16 %v860, %v854
        %v939 = vpack.c.b16 %v861, %v855
        %v940 = vpack.c.b16 %v862, %v856
        %v941 = vpack.c.b16 %v869, %v863
        %v942 = vpack.c.b16 %v870, %v864
        %v943 = vpack.c.b16 %v871, %v865
        %v944 = vpack.c.b16 %v872, %v866
        %v945 = vpack.c.b16 %v873, %v867
        %v946 = vpack.c.b16 %v874, %v868
        %v947 = vpack.c.b16 %v881, %v875
        %v948 = vpack.c.b16 %v882, %v876
        %v949 = vpack.c.b16 %v883, %v877
        %v950 = vpack.c.b16 %v884, %v878
        %v951 = vpack.c.b16 %v885, %v879
        %v952 = vpack.c.b16 %v886, %v880
        %v953 = vpack.c.b16 %v893, %v887
        %v954 = vpack.c.b16 %v894, %v888
        %v955 = vpack.c.b16 %v895, %v889
        %v956 = vpack.c.b16 %v896, %v890
        %v957 = vpack.c.b16 %v897, %v891
        %v958 = vpack.c.b16 %v898, %v892
        %v959 = vpack.c.b16 %v905, %v899
        %v960 = vpack.c.b16 %v906, %v900
        %v961 = vpack.c.b16 %v907, %v901
        %v962 = vpack.c.b16 %v908, %v902
        %v963 = vpack.c.b16 %v909, %v903
        %v964 = vpack.c.b16 %v910, %v904
        %v965 = vpack.c.b16 %v917, %v911
        %v966 = vpack.c.b16 %v918, %v912
        %v967 = vpack.c.b16 %v919, %v913
        %v968 = vpack.c.b16 %v920, %v914
        %v969 = vpack.c.b16 %v921, %v915
        %v970 = vpack.c.b16 %v922, %v916
        %1019 = vmatprep.subr.bf16.mxu0 %v924
        %1020 = vmatpush1.bf16.msra.mxu0 %v923
        %1021 = vmatprep.subr.bf16.mxu0 %v930
        %1022 = vmatpush1.bf16.msra.mxu0 %v929
        %1023 = vmatprep.subr.bf16.mxu0 %v936
        %1024 = vmatpush1.bf16.msra.mxu0 %v935
        %1025 = vmatprep.subr.bf16.mxu0 %v942
        %1026 = vmatpush1.bf16.msra.mxu0 %v941
        %1027 = vmatprep.subr.bf16.mxu0 %v948
        %1028 = vmatpush1.bf16.msra.mxu0 %v947
        %1029 = vmatprep.subr.bf16.mxu0 %v954
        %1030 = vmatpush1.bf16.msra.mxu0 %v953
        %1031 = vmatprep.subr.bf16.mxu0 %v960
        %1032 = vmatpush1.bf16.msra.mxu0 %v959
        %1033 = vmatprep.subr.bf16.mxu0 %v966
        %1034 = vmatpush1.bf16.msra.mxu0 %v965
        %1035 = vmatprep.subr.bf16.mxu0 0
        %1036 = vmatpush1.bf16.msra.mxu0 0
        %1037 = vmatprep.subr.bf16.mxu0 0
        %1038 = vmatpush1.bf16.msra.mxu0 0
        %1039 = vmatprep.subr.bf16.mxu0 0
        %1040 = vmatpush1.bf16.msra.mxu0 0
        %1041 = vmatprep.subr.bf16.mxu0 0
        %1042 = vmatpush1.bf16.msra.mxu0 0
        %1043 = vmatprep.subr.bf16.mxu0 0
        %1044 = vmatpush1.bf16.msra.mxu0 0
        %1045 = vmatprep.subr.bf16.mxu0 0
        %1046 = vmatpush1.bf16.msra.mxu0 0
        %1047 = vmatprep.subr.bf16.mxu0 0
        %1048 = vmatpush1.bf16.msra.mxu0 0
        %1049 = vmatprep.subr.bf16.mxu0 0
        %1050 = vmatpush1.bf16.msra.mxu0 0
        %1051 = vmatprep.mubr.bf16.mxu0 0
        %1052 = vmatmul.mubr.bf16.gmra.mrb[0].mxu0 %v698
        %v1053 = vpop.f32.mrb[0].mxu0
        %v1054 = vadd.f32 %v752, %v1053
        %v1055 = vpop.f32.mrb[0].mxu0
        %v1056 = vadd.f32 %v756, %v1055
        %v1057 = vpop.f32.mrb[0].mxu0
        %v1058 = vadd.f32 %v752, %v1057
        %v1059 = vpop.f32.mrb[0].mxu0
        %v1060 = vadd.f32 %v756, %v1059
        %1061 = vdwg.mxu0
        %1062 = vmatprep.subr.bf16.mxu0 %v926
        %1063 = vmatpush1.bf16.msra.mxu0 %v925
        %1064 = vmatprep.subr.bf16.mxu0 %v932
        %1065 = vmatpush1.bf16.msra.mxu0 %v931
        %1066 = vmatprep.subr.bf16.mxu0 %v938
        %1067 = vmatpush1.bf16.msra.mxu0 %v937
        %1068 = vmatprep.subr.bf16.mxu0 %v944
        %1069 = vmatpush1.bf16.msra.mxu0 %v943
        %1070 = vmatprep.subr.bf16.mxu0 %v950
        %1071 = vmatpush1.bf16.msra.mxu0 %v949
        %1072 = vmatprep.subr.bf16.mxu0 %v956
        %1073 = vmatpush1.bf16.msra.mxu0 %v955
        %1074 = vmatprep.subr.bf16.mxu0 %v962
        %1075 = vmatpush1.bf16.msra.mxu0 %v961
        %1076 = vmatprep.subr.bf16.mxu0 %v968
        %1077 = vmatpush1.bf16.msra.mxu0 %v967
        %1078 = vmatprep.subr.bf16.mxu0 0
        %1079 = vmatpush1.bf16.msra.mxu0 0
        %1080 = vmatprep.subr.bf16.mxu0 0
        %1081 = vmatpush1.bf16.msra.mxu0 0
        %1082 = vmatprep.subr.bf16.mxu0 0
        %1083 = vmatpush1.bf16.msra.mxu0 0
        %1084 = vmatprep.subr.bf16.mxu0 0
        %1085 = vmatpush1.bf16.msra.mxu0 0
        %1086 = vmatprep.subr.bf16.mxu0 0
        %1087 = vmatpush1.bf16.msra.mxu0 0
        %1088 = vmatprep.subr.bf16.mxu0 0
        %1089 = vmatpush1.bf16.msra.mxu0 0
        %1090 = vmatprep.subr.bf16.mxu0 0
        %1091 = vmatpush1.bf16.msra.mxu0 0
        %1092 = vmatprep.subr.bf16.mxu0 0
        %1093 = vmatpush1.bf16.msra.mxu0 0
        %1094 = vmatprep.mubr.bf16.mxu0 0
        %1095 = vmatmul.mubr.bf16.gmra.mrb[0].mxu0 %v698
        %v1096 = vpop.f32.mrb[0].mxu0
        %v1097 = vadd.f32 %v760, %v1096
        %v1098 = vpop.f32.mrb[0].mxu0
        %v1099 = vadd.f32 %v764, %v1098
        %v1100 = vpop.f32.mrb[0].mxu0
        %v1101 = vadd.f32 %v760, %v1100
        %v1102 = vpop.f32.mrb[0].mxu0
        %v1103 = vadd.f32 %v764, %v1102
        %1104 = vdwg.mxu0
        %1105 = vmatprep.subr.bf16.mxu0 %v928
        %1106 = vmatpush1.bf16.msra.mxu0 %v927
        %1107 = vmatprep.subr.bf16.mxu0 %v934
        %1108 = vmatpush1.bf16.msra.mxu0 %v933
        %1109 = vmatprep.subr.bf16.mxu0 %v940
        %1110 = vmatpush1.bf16.msra.mxu0 %v939
        %1111 = vmatprep.subr.bf16.mxu0 %v946
        %1112 = vmatpush1.bf16.msra.mxu0 %v945
        %1113 = vmatprep.subr.bf16.mxu0 %v952
        %1114 = vmatpush1.bf16.msra.mxu0 %v951
        %1115 = vmatprep.subr.bf16.mxu0 %v958
        %1116 = vmatpush1.bf16.msra.mxu0 %v957
        %1117 = vmatprep.subr.bf16.mxu0 %v964
        %1118 = vmatpush1.bf16.msra.mxu0 %v963
        %1119 = vmatprep.subr.bf16.mxu0 %v970
        %1120 = vmatpush1.bf16.msra.mxu0 %v969
        %1121 = vmatprep.subr.bf16.mxu0 0
        %1122 = vmatpush1.bf16.msra.mxu0 0
        %1123 = vmatprep.subr.bf16.mxu0 0
        %1124 = vmatpush1.bf16.msra.mxu0 0
        %1125 = vmatprep.subr.bf16.mxu0 0
        %1126 = vmatpush1.bf16.msra.mxu0 0
        %1127 = vmatprep.subr.bf16.mxu0 0
        %1128 = vmatpush1.bf16.msra.mxu0 0
        %1129 = vmatprep.subr.bf16.mxu0 0
        %1130 = vmatpush1.bf16.msra.mxu0 0
        %1131 = vmatprep.subr.bf16.mxu0 0
        %1132 = vmatpush1.bf16.msra.mxu0 0
        %1133 = vmatprep.subr.bf16.mxu0 0
        %1134 = vmatpush1.bf16.msra.mxu0 0
        %1135 = vmatprep.subr.bf16.mxu0 0
        %1136 = vmatpush1.bf16.msra.mxu0 0
        %1137 = vmatprep.mubr.bf16.mxu0 0
        %1138 = vmatmul.mubr.bf16.gmra.mrb[0].mxu0 %v698
        %v1139 = vpop.f32.mrb[0].mxu0
        %v1140 = vadd.f32 %v768, %v1139
        %v1141 = vpop.f32.mrb[0].mxu0
        %v1142 = vadd.f32 %v772, %v1141
        %v1143 = vpop.f32.mrb[0].mxu0
        %v1144 = vadd.f32 %v768, %v1143
        %v1145 = vpop.f32.mrb[0].mxu0
        %v1146 = vadd.f32 %v772, %v1145
        %1147 = vdwg.mxu0
        %v1148 = vpack.c.bf16 %v1058, %v1054
        %v1149 = vpack.c.bf16 %v1060, %v1056
        %v1150 = vpack.c.bf16 %v1101, %v1097
        %v1151 = vpack.c.bf16 %v1103, %v1099
        %v1152 = vpack.c.bf16 %v1144, %v1140
        %v1153 = vpack.c.bf16 %v1146, %v1142
        %v1154 = vlaneseq
        %v1155 = vshrl.u32 %v1154, 7
        %v1156 = vadd.s32 %v1155, 8
        %v1157 = vlaneseq
        %v1158 = vand.u32 %v1157, 127
        %vm1159 = vcmp.ge.s32.totalorder %v1155, 2
        %vm1160 = vcmp.ge.s32.totalorder %v1156, 2
        %v1161 = vsel %vm1159, 1, 0
        %v1162 = vsel %vm1160, 1, 0
        %vm1163 = vcmp.ge.s32.totalorder %v1158, 2
        %v1164 = vsel %vm1163, 1, 0
        %vm1165 = vcmp.ge.s32.totalorder %v1155, 4
        %vm1166 = vcmp.ge.s32.totalorder %v1156, 4
        %v1167 = vsel %vm1165, 2, %v1161
        %v1168 = vsel %vm1166, 2, %v1162
        %vm1169 = vcmp.ge.s32.totalorder %v1158, 4
        %v1170 = vsel %vm1169, 2, %v1164
        %vm1171 = vcmp.ge.s32.totalorder %v1155, 6
        %vm1172 = vcmp.ge.s32.totalorder %v1156, 6
        %v1173 = vsel %vm1171, 3, %v1167
        %v1174 = vsel %vm1172, 3, %v1168
        %vm1175 = vcmp.ge.s32.totalorder %v1158, 6
        %v1176 = vsel %vm1175, 3, %v1170
        %vm1177 = vcmp.ge.s32.totalorder %v1155, 8
        %vm1178 = vcmp.ge.s32.totalorder %v1156, 8
        %v1179 = vsel %vm1177, 4, %v1173
        %v1180 = vsel %vm1178, 4, %v1174
        %vm1181 = vcmp.ge.s32.totalorder %v1158, 8
        %v1182 = vsel %vm1181, 4, %v1176
        %vm1183 = vcmp.ge.s32.totalorder %v1155, 10
        %vm1184 = vcmp.ge.s32.totalorder %v1156, 10
        %v1185 = vsel %vm1183, 5, %v1179
        %v1186 = vsel %vm1184, 5, %v1180
        %vm1187 = vcmp.ge.s32.totalorder %v1158, 10
        %v1188 = vsel %vm1187, 5, %v1182
        %vm1189 = vcmp.eq.s32.totalorder %v1185, %v1188
        %vm1190 = vcmp.eq.s32.totalorder %v1186, %v1188
        %v1191 = vsel %vm1189, 0.0, -1e+30
        %v1192 = vsel %vm1190, 0.0, -1e+30
        %1193 = vmatprep.subr.bf16.mxu0 0
        %1194 = vmatpush1.bf16.xpose.msra.mxu0 %v1149
        %1195 = vmatprep.subr.bf16.mxu0 0
        %1196 = vmatpush1.bf16.xpose.msra.mxu0 0
        %1197 = vmatprep.subr.bf16.mxu0 0
        %1198 = vmatpush1.bf16.xpose.msra.mxu0 0
        %1199 = vmatprep.subr.bf16.mxu0 0
        %1200 = vmatpush1.bf16.xpose.msra.mxu0 0
        %1201 = vmatprep.subr.bf16.mxu0 0
        %1202 = vmatpush1.bf16.xpose.msra.mxu0 0
        %1203 = vmatprep.subr.bf16.mxu0 0
        %1204 = vmatpush1.bf16.xpose.msra.mxu0 0
        %1205 = vmatprep.subr.bf16.mxu0 0
        %1206 = vmatpush1.bf16.xpose.msra.mxu0 0
        %1207 = vmatprep.subr.bf16.mxu0 0
        %1208 = vmatpush1.bf16.xpose.msra.mxu0 0
        %1209 = vmatprep.subr.bf16.mxu0 0
        %1210 = vmatpush1.bf16.xpose.msra.mxu0 0
        %1211 = vmatprep.subr.bf16.mxu0 0
        %1212 = vmatpush1.bf16.xpose.msra.mxu0 0
        %1213 = vmatprep.subr.bf16.mxu0 0
        %1214 = vmatpush1.bf16.xpose.msra.mxu0 0
        %1215 = vmatprep.subr.bf16.mxu0 0
        %1216 = vmatpush1.bf16.xpose.msra.mxu0 0
        %1217 = vmatprep.subr.bf16.mxu0 0
        %1218 = vmatpush1.bf16.xpose.msra.mxu0 0
        %1219 = vmatprep.subr.bf16.mxu0 0
        %1220 = vmatpush1.bf16.xpose.msra.mxu0 0
        %1221 = vmatprep.subr.bf16.mxu0 0
        %1222 = vmatpush1.bf16.xpose.msra.mxu0 0
        %1223 = vmatprep.subr.bf16.mxu0 0
        %1224 = vmatpush1.bf16.xpose.msra.mxu0 0
        %1225 = vmatprep.mubr.bf16.mxu0 0
        %1226 = vmatmul.mubr.bf16.gmra.mrb[0].mxu0 %v1148
        %v1227 = vpop.f32.mrb[0].mxu0
        %v1228 = vadd.f32 %v1191, %v1227
        %v1229 = vpop.f32.mrb[0].mxu0
        %v1230 = vpop.f32.mrb[0].mxu0
        %v1231 = vadd.f32 %v1192, %v1230
        %v1232 = vpop.f32.mrb[0].mxu0
        %1233 = vdwg.mxu0
        %vm1234 = vcmask 97280
        %v1235 = vsel %vm1234, %v1228, -inf
        %1236 = vmax.xlane.f32.xlu0 %v1235
        %v1237 = vpop.xlane.xlu0 %1236
        %vm1238 = vcmask 93184
        %v1239 = vsel %vm1238, %v1231, -inf
        %1240 = vmax.xlane.f32.xlu0 %v1239
        %v1241 = vpop.xlane.xlu0 %1240
        %v1242 = vsub.f32 %v1228, %v1237
        %v1243 = vsub.f32 %v1231, %v1241
        %v1244 = vmul.f32 %v1242, 1.442695
        %v1245 = vpow.pop %v1244
        %v1246 = vmul.f32 %v1243, 1.442695
        %v1247 = vpow.pop %v1246
        %v1248 = vsel %vm1234, %v1245, 0.0
        %1249 = vadd.xlane.f32.xlu0 %v1248
        %v1250 = vpop.xlane.xlu0 %1249
        %v1251 = vsel %vm1238, %v1247, 0.0
        %1252 = vadd.xlane.f32.xlu0 %v1251
        %v1253 = vpop.xlane.xlu0 %1252
        %v1254 = vrcp.pop %v1250
        %v1255 = vmul.f32 %v1245, %v1254
        %v1256 = vrcp.pop %v1253
        %v1257 = vmul.f32 %v1247, %v1256
        %v1258 = vpack.c.bf16 %v1257, %v1255
        %v1260 = vsel %vm1234, %v1258, 0
        %vm1262 = vcmask 1045504
        %v1264 = vsel %vm1262, %v1150, 0
        %1266 = vmatprep.subr.bf16.mxu0 0
        %1267 = vmatpush1.bf16.msra.mxu0 %v1264
        %1268 = vmatprep.subr.bf16.mxu0 0
        %1269 = vmatpush1.bf16.msra.mxu0 0
        %1270 = vmatprep.subr.bf16.mxu0 0
        %1271 = vmatpush1.bf16.msra.mxu0 0
        %1272 = vmatprep.subr.bf16.mxu0 0
        %1273 = vmatpush1.bf16.msra.mxu0 0
        %1274 = vmatprep.subr.bf16.mxu0 0
        %1275 = vmatpush1.bf16.msra.mxu0 0
        %1276 = vmatprep.subr.bf16.mxu0 0
        %1277 = vmatpush1.bf16.msra.mxu0 0
        %1278 = vmatprep.subr.bf16.mxu0 0
        %1279 = vmatpush1.bf16.msra.mxu0 0
        %1280 = vmatprep.subr.bf16.mxu0 0
        %1281 = vmatpush1.bf16.msra.mxu0 0
        %1282 = vmatprep.subr.bf16.mxu0 0
        %1283 = vmatpush1.bf16.msra.mxu0 0
        %1284 = vmatprep.subr.bf16.mxu0 0
        %1285 = vmatpush1.bf16.msra.mxu0 0
        %1286 = vmatprep.subr.bf16.mxu0 0
        %1287 = vmatpush1.bf16.msra.mxu0 0
        %1288 = vmatprep.subr.bf16.mxu0 0
        %1289 = vmatpush1.bf16.msra.mxu0 0
        %1290 = vmatprep.subr.bf16.mxu0 0
        %1291 = vmatpush1.bf16.msra.mxu0 0
        %1292 = vmatprep.subr.bf16.mxu0 0
        %1293 = vmatpush1.bf16.msra.mxu0 0
        %1294 = vmatprep.subr.bf16.mxu0 0
        %1295 = vmatpush1.bf16.msra.mxu0 0
        %1296 = vmatprep.subr.bf16.mxu0 0
        %1297 = vmatpush1.bf16.msra.mxu0 0
        %1298 = vmatprep.mubr.bf16.mxu0 0
        %1299 = vmatmul.mubr.bf16.gmra.mrb[0].mxu0 %v1260
        %v1300 = vpop.f32.mrb[0].mxu0
        %v1301 = vadd.f32 0.0, %v1300
        %v1302 = vpop.f32.mrb[0].mxu0
        %v1303 = vpop.f32.mrb[0].mxu0
        %v1304 = vadd.f32 0.0, %v1303
        %v1305 = vpop.f32.mrb[0].mxu0
        %1306 = vdwg.mxu0
        %v1307 = vpack.c.bf16 %v1304, %v1301
        %v1308 = vld [vmem:[#allocation9] sm:$0xf]
        %v1309 = vld [vmem:[#allocation9 + $0x4] sm:$0xf]
        %v1310 = vld [vmem:[#allocation9 + $0x8] sm:$0xf]
        %v1311 = vld [vmem:[#allocation9 + $0xc] sm:$0xf]
        %v1312 = vld [vmem:[#allocation9 + $0x10] sm:$0xf]
        %v1313 = vld [vmem:[#allocation9 + $0x14] sm:$0xf]
        %v1314 = vld [vmem:[#allocation9 + $0x18] sm:$0xf]
        %v1315 = vld [vmem:[#allocation9 + $0x1c] sm:$0xf]
        %v1316 = vld [vmem:[#allocation9 + $0x20] sm:$0xf]
        %v1317 = vld [vmem:[#allocation9 + $0x24] sm:$0xf]
        %v1318 = vld [vmem:[#allocation9 + $0x28] sm:$0xf]
        %v1319 = vld [vmem:[#allocation9 + $0x2c] sm:$0xf]
        %v1320 = vld [vmem:[#allocation9 + $0x30] sm:$0xf]
        %v1321 = vld [vmem:[#allocation9 + $0x34] sm:$0xf]
        %v1322 = vld [vmem:[#allocation9 + $0x38] sm:$0xf]
        %v1323 = vld [vmem:[#allocation9 + $0x3c] sm:$0xf]
        %v1324 = vld [vmem:[%s7] sm:$0x1]
        %v1326 = vlaneseq
        %v1327 = vshrl.u32 %v1326, 7
        %v1328 = vsub.s32 0, %v1327
        %v1329 = vrot.slane %v1324, %v1328
        %v1347 = vunpack.c.l.b16 %v1308
        %v1348 = vunpack.c.l.b16 %v1309
        %v1349 = vunpack.c.l.b16 %v1310
        %v1350 = vunpack.c.l.b16 %v1311
        %v1351 = vunpack.c.l.b16 %v1312
        %v1352 = vunpack.c.l.b16 %v1313
        %v1353 = vunpack.c.l.b16 %v1314
        %v1354 = vunpack.c.l.b16 %v1315
        %v1355 = vunpack.c.l.b16 %v1316
        %v1356 = vunpack.c.l.b16 %v1317
        %v1357 = vunpack.c.l.b16 %v1318
        %v1358 = vunpack.c.l.b16 %v1319
        %v1359 = vunpack.c.l.b16 %v1320
        %v1360 = vunpack.c.l.b16 %v1321
        %v1361 = vunpack.c.l.b16 %v1322
        %v1362 = vunpack.c.l.b16 %v1323
        %v1363 = vpack.c.b16 %v1348, %v1347
        %v1364 = vpack.c.b16 %v1350, %v1349
        %v1365 = vpack.c.b16 %v1352, %v1351
        %v1366 = vpack.c.b16 %v1354, %v1353
        %v1367 = vpack.c.b16 %v1356, %v1355
        %v1368 = vpack.c.b16 %v1358, %v1357
        %v1369 = vpack.c.b16 %v1360, %v1359
        %v1370 = vpack.c.b16 %v1362, %v1361
        %1379 = vmatprep.subr.bf16.mxu0 0
        %1380 = vmatpush1.bf16.msra.mxu0 %v1363
        %1381 = vmatprep.subr.bf16.mxu0 0
        %1382 = vmatpush1.bf16.msra.mxu0 %v1364
        %1383 = vmatprep.subr.bf16.mxu0 0
        %1384 = vmatpush1.bf16.msra.mxu0 %v1365
        %1385 = vmatprep.subr.bf16.mxu0 0
        %1386 = vmatpush1.bf16.msra.mxu0 %v1366
        %1387 = vmatprep.subr.bf16.mxu0 0
        %1388 = vmatpush1.bf16.msra.mxu0 %v1367
        %1389 = vmatprep.subr.bf16.mxu0 0
        %1390 = vmatpush1.bf16.msra.mxu0 %v1368
        %1391 = vmatprep.subr.bf16.mxu0 0
        %1392 = vmatpush1.bf16.msra.mxu0 %v1369
        %1393 = vmatprep.subr.bf16.mxu0 0
        %1394 = vmatpush1.bf16.msra.mxu0 %v1370
        %1395 = vmatprep.subr.bf16.mxu0 0
        %1396 = vmatpush1.bf16.msra.mxu0 0
        %1397 = vmatprep.subr.bf16.mxu0 0
        %1398 = vmatpush1.bf16.msra.mxu0 0
        %1399 = vmatprep.subr.bf16.mxu0 0
        %1400 = vmatpush1.bf16.msra.mxu0 0
        %1401 = vmatprep.subr.bf16.mxu0 0
        %1402 = vmatpush1.bf16.msra.mxu0 0
        %1403 = vmatprep.subr.bf16.mxu0 0
        %1404 = vmatpush1.bf16.msra.mxu0 0
        %1405 = vmatprep.subr.bf16.mxu0 0
        %1406 = vmatpush1.bf16.msra.mxu0 0
        %1407 = vmatprep.subr.bf16.mxu0 0
        %1408 = vmatpush1.bf16.msra.mxu0 0
        %1409 = vmatprep.subr.bf16.mxu0 0
        %1410 = vmatpush1.bf16.msra.mxu0 0
        %1411 = vmatprep.mubr.bf16.mxu0 0
        %1412 = vmatmul.mubr.bf16.gmra.mrb[0].mxu0 %v1307
        %v1413 = vpop.f32.mrb[0].mxu0
        %v1414 = vadd.f32 %v1329, %v1413
        %v1415 = vpop.f32.mrb[0].mxu0
        %v1416 = vpop.f32.mrb[0].mxu0
        %v1417 = vadd.f32 %v1329, %v1416
        %v1418 = vpop.f32.mrb[0].mxu0
        %1419 = vdwg.mxu0
        %1420 = vmatprep.subr.bf16.mxu0 0
        %1421 = vmatpush1.bf16.xpose.msra.mxu0 %v1152
        %1422 = vmatprep.subr.bf16.mxu0 0
        %1423 = vmatpush1.bf16.xpose.msra.mxu0 0
        %1424 = vmatprep.subr.bf16.mxu0 0
        %1425 = vmatpush1.bf16.xpose.msra.mxu0 0
        %1426 = vmatprep.subr.bf16.mxu0 0
        %1427 = vmatpush1.bf16.xpose.msra.mxu0 0
        %1428 = vmatprep.subr.bf16.mxu0 0
        %1429 = vmatpush1.bf16.xpose.msra.mxu0 0
        %1430 = vmatprep.subr.bf16.mxu0 0
        %1431 = vmatpush1.bf16.xpose.msra.mxu0 0
        %1432 = vmatprep.subr.bf16.mxu0 0
        %1433 = vmatpush1.bf16.xpose.msra.mxu0 0
        %1434 = vmatprep.subr.bf16.mxu0 0
        %1435 = vmatpush1.bf16.xpose.msra.mxu0 0
        %1436 = vmatprep.subr.bf16.mxu0 0
        %1437 = vmatpush1.bf16.xpose.msra.mxu0 0
        %1438 = vmatprep.subr.bf16.mxu0 0
        %1439 = vmatpush1.bf16.xpose.msra.mxu0 0
        %1440 = vmatprep.subr.bf16.mxu0 0
        %1441 = vmatpush1.bf16.xpose.msra.mxu0 0
        %1442 = vmatprep.subr.bf16.mxu0 0
        %1443 = vmatpush1.bf16.xpose.msra.mxu0 0
        %1444 = vmatprep.subr.bf16.mxu0 0
        %1445 = vmatpush1.bf16.xpose.msra.mxu0 0
        %1446 = vmatprep.subr.bf16.mxu0 0
        %1447 = vmatpush1.bf16.xpose.msra.mxu0 0
        %1448 = vmatprep.subr.bf16.mxu0 0
        %1449 = vmatpush1.bf16.xpose.msra.mxu0 0
        %1450 = vmatprep.subr.bf16.mxu0 0
        %1451 = vmatpush1.bf16.xpose.msra.mxu0 0
        %1452 = vmatprep.mubr.bf16.mxu0 0
        %1453 = vmatmul.mubr.bf16.gmra.mrb[0].mxu0 %v1151
        %v1454 = vpop.f32.mrb[0].mxu0
        %v1455 = vadd.f32 %v1191, %v1454
        %v1456 = vpop.f32.mrb[0].mxu0
        %v1457 = vpop.f32.mrb[0].mxu0
        %v1458 = vadd.f32 %v1192, %v1457
        %v1459 = vpop.f32.mrb[0].mxu0
        %1460 = vdwg.mxu0
        %v1461 = vsel %vm1234, %v1455, -inf
        %1462 = vmax.xlane.f32.xlu0 %v1461
        %v1463 = vpop.xlane.xlu0 %1462
        %v1464 = vsel %vm1238, %v1458, -inf
        %1465 = vmax.xlane.f32.xlu0 %v1464
        %v1466 = vpop.xlane.xlu0 %1465
        %v1467 = vsub.f32 %v1455, %v1463
        %v1468 = vsub.f32 %v1458, %v1466
        %v1469 = vmul.f32 %v1467, 1.442695
        %v1470 = vpow.pop %v1469
        %v1471 = vmul.f32 %v1468, 1.442695
        %v1472 = vpow.pop %v1471
        %v1473 = vsel %vm1234, %v1470, 0.0
        %1474 = vadd.xlane.f32.xlu0 %v1473
        %v1475 = vpop.xlane.xlu0 %1474
        %v1476 = vsel %vm1238, %v1472, 0.0
        %1477 = vadd.xlane.f32.xlu0 %v1476
        %v1478 = vpop.xlane.xlu0 %1477
        %v1479 = vrcp.pop %v1475
        %v1480 = vmul.f32 %v1470, %v1479
        %v1481 = vrcp.pop %v1478
        %v1482 = vmul.f32 %v1472, %v1481
        %v1483 = vpack.c.bf16 %v1482, %v1480
        %v1485 = vsel %vm1234, %v1483, 0
        %v1488 = vsel %vm1262, %v1153, 0
        %1490 = vmatprep.subr.bf16.mxu0 0
        %1491 = vmatpush1.bf16.msra.mxu0 %v1488
        %1492 = vmatprep.subr.bf16.mxu0 0
        %1493 = vmatpush1.bf16.msra.mxu0 0
        %1494 = vmatprep.subr.bf16.mxu0 0
        %1495 = vmatpush1.bf16.msra.mxu0 0
        %1496 = vmatprep.subr.bf16.mxu0 0
        %1497 = vmatpush1.bf16.msra.mxu0 0
        %1498 = vmatprep.subr.bf16.mxu0 0
        %1499 = vmatpush1.bf16.msra.mxu0 0
        %1500 = vmatprep.subr.bf16.mxu0 0
        %1501 = vmatpush1.bf16.msra.mxu0 0
        %1502 = vmatprep.subr.bf16.mxu0 0
        %1503 = vmatpush1.bf16.msra.mxu0 0
        %1504 = vmatprep.subr.bf16.mxu0 0
        %1505 = vmatpush1.bf16.msra.mxu0 0
        %1506 = vmatprep.subr.bf16.mxu0 0
        %1507 = vmatpush1.bf16.msra.mxu0 0
        %1508 = vmatprep.subr.bf16.mxu0 0
        %1509 = vmatpush1.bf16.msra.mxu0 0
        %1510 = vmatprep.subr.bf16.mxu0 0
        %1511 = vmatpush1.bf16.msra.mxu0 0
        %1512 = vmatprep.subr.bf16.mxu0 0
        %1513 = vmatpush1.bf16.msra.mxu0 0
        %1514 = vmatprep.subr.bf16.mxu0 0
        %1515 = vmatpush1.bf16.msra.mxu0 0
        %1516 = vmatprep.subr.bf16.mxu0 0
        %1517 = vmatpush1.bf16.msra.mxu0 0
        %1518 = vmatprep.subr.bf16.mxu0 0
        %1519 = vmatpush1.bf16.msra.mxu0 0
        %1520 = vmatprep.subr.bf16.mxu0 0
        %1521 = vmatpush1.bf16.msra.mxu0 0
        %1522 = vmatprep.mubr.bf16.mxu0 0
        %1523 = vmatmul.mubr.bf16.gmra.mrb[0].mxu0 %v1485
        %v1524 = vpop.f32.mrb[0].mxu0
        %v1525 = vadd.f32 0.0, %v1524
        %v1526 = vpop.f32.mrb[0].mxu0
        %v1527 = vpop.f32.mrb[0].mxu0
        %v1528 = vadd.f32 0.0, %v1527
        %v1529 = vpop.f32.mrb[0].mxu0
        %1530 = vdwg.mxu0
        %v1531 = vpack.c.bf16 %v1528, %v1525
        %v1532 = vld [vmem:[#allocation11] sm:$0xf]
        %v1533 = vld [vmem:[#allocation11 + $0x4] sm:$0xf]
        %v1534 = vld [vmem:[#allocation11 + $0x8] sm:$0xf]
        %v1535 = vld [vmem:[#allocation11 + $0xc] sm:$0xf]
        %v1536 = vld [vmem:[#allocation11 + $0x10] sm:$0xf]
        %v1537 = vld [vmem:[#allocation11 + $0x14] sm:$0xf]
        %v1538 = vld [vmem:[#allocation11 + $0x18] sm:$0xf]
        %v1539 = vld [vmem:[#allocation11 + $0x1c] sm:$0xf]
        %v1540 = vld [vmem:[#allocation11 + $0x20] sm:$0xf]
        %v1541 = vld [vmem:[#allocation11 + $0x24] sm:$0xf]
        %v1542 = vld [vmem:[#allocation11 + $0x28] sm:$0xf]
        %v1543 = vld [vmem:[#allocation11 + $0x2c] sm:$0xf]
        %v1544 = vld [vmem:[#allocation11 + $0x30] sm:$0xf]
        %v1545 = vld [vmem:[#allocation11 + $0x34] sm:$0xf]
        %v1546 = vld [vmem:[#allocation11 + $0x38] sm:$0xf]
        %v1547 = vld [vmem:[#allocation11 + $0x3c] sm:$0xf]
        %v1548 = vld [vmem:[%s9] sm:$0x1]
        %v1550 = vlaneseq
        %v1551 = vshrl.u32 %v1550, 7
        %v1552 = vsub.s32 0, %v1551
        %v1553 = vrot.slane %v1548, %v1552
        %v1571 = vunpack.c.l.b16 %v1532
        %v1572 = vunpack.c.l.b16 %v1533
        %v1573 = vunpack.c.l.b16 %v1534
        %v1574 = vunpack.c.l.b16 %v1535
        %v1575 = vunpack.c.l.b16 %v1536
        %v1576 = vunpack.c.l.b16 %v1537
        %v1577 = vunpack.c.l.b16 %v1538
        %v1578 = vunpack.c.l.b16 %v1539
        %v1579 = vunpack.c.l.b16 %v1540
        %v1580 = vunpack.c.l.b16 %v1541
        %v1581 = vunpack.c.l.b16 %v1542
        %v1582 = vunpack.c.l.b16 %v1543
        %v1583 = vunpack.c.l.b16 %v1544
        %v1584 = vunpack.c.l.b16 %v1545
        %v1585 = vunpack.c.l.b16 %v1546
        %v1586 = vunpack.c.l.b16 %v1547
        %v1587 = vpack.c.b16 %v1572, %v1571
        %v1588 = vpack.c.b16 %v1574, %v1573
        %v1589 = vpack.c.b16 %v1576, %v1575
        %v1590 = vpack.c.b16 %v1578, %v1577
        %v1591 = vpack.c.b16 %v1580, %v1579
        %v1592 = vpack.c.b16 %v1582, %v1581
        %v1593 = vpack.c.b16 %v1584, %v1583
        %v1594 = vpack.c.b16 %v1586, %v1585
        %1603 = vmatprep.subr.bf16.mxu0 0
        %1604 = vmatpush1.bf16.msra.mxu0 %v1587
        %1605 = vmatprep.subr.bf16.mxu0 0
        %1606 = vmatpush1.bf16.msra.mxu0 %v1588
        %1607 = vmatprep.subr.bf16.mxu0 0
        %1608 = vmatpush1.bf16.msra.mxu0 %v1589
        %1609 = vmatprep.subr.bf16.mxu0 0
        %1610 = vmatpush1.bf16.msra.mxu0 %v1590
        %1611 = vmatprep.subr.bf16.mxu0 0
        %1612 = vmatpush1.bf16.msra.mxu0 %v1591
        %1613 = vmatprep.subr.bf16.mxu0 0
        %1614 = vmatpush1.bf16.msra.mxu0 %v1592
        %1615 = vmatprep.subr.bf16.mxu0 0
        %1616 = vmatpush1.bf16.msra.mxu0 %v1593
        %1617 = vmatprep.subr.bf16.mxu0 0
        %1618 = vmatpush1.bf16.msra.mxu0 %v1594
        %1619 = vmatprep.subr.bf16.mxu0 0
        %1620 = vmatpush1.bf16.msra.mxu0 0
        %1621 = vmatprep.subr.bf16.mxu0 0
        %1622 = vmatpush1.bf16.msra.mxu0 0
        %1623 = vmatprep.subr.bf16.mxu0 0
        %1624 = vmatpush1.bf16.msra.mxu0 0
        %1625 = vmatprep.subr.bf16.mxu0 0
        %1626 = vmatpush1.bf16.msra.mxu0 0
        %1627 = vmatprep.subr.bf16.mxu0 0
        %1628 = vmatpush1.bf16.msra.mxu0 0
        %1629 = vmatprep.subr.bf16.mxu0 0
        %1630 = vmatpush1.bf16.msra.mxu0 0
        %1631 = vmatprep.subr.bf16.mxu0 0
        %1632 = vmatpush1.bf16.msra.mxu0 0
        %1633 = vmatprep.subr.bf16.mxu0 0
        %1634 = vmatpush1.bf16.msra.mxu0 0
        %1635 = vmatprep.mubr.bf16.mxu0 0
        %1636 = vmatmul.mubr.bf16.gmra.mrb[0].mxu0 %v1531
        %v1637 = vpop.f32.mrb[0].mxu0
        %v1638 = vadd.f32 %v1553, %v1637
        %v1639 = vpop.f32.mrb[0].mxu0
        %v1640 = vpop.f32.mrb[0].mxu0
        %v1641 = vadd.f32 %v1553, %v1640
        %v1642 = vpop.f32.mrb[0].mxu0
        %1643 = vdwg.mxu0
        %vm1644 = vcmp.eq.s32.totalorder %v1158, %v1155
        %v1645 = vsel %vm1644, 1.0, 0.0
        %v1646 = vadd.s32 %v1155, 6
        %vm1647 = vcmp.eq.s32.totalorder %v1158, %v1646
        %v1648 = vsel %vm1647, 1.0, %v1645
        %v1649 = vld [vmem:[#allocation2] sm:$0x3f]
        %v1651 = vsel %vm1234, %v1648, 0
        %vm1653 = vcmask 1043456
        %v1655 = vsel %vm1653, %v1417, 0
        %1657 = vmatprep.subr.mxu0 0.0
        %1658 = vmatpush1.msra.mxu0 %v1414
        %1659 = vmatprep.subr.mxu0 0.0
        %1660 = vmatpush1.msra.mxu0 %v1655
        %1661 = vmatprep.subr.mxu0 0.0
        %1662 = vmatpush1.msra.mxu0 0.0
        %1663 = vmatprep.subr.mxu0 0.0
        %1664 = vmatpush1.msra.mxu0 0.0
        %1665 = vmatprep.subr.mxu0 0.0
        %1666 = vmatpush1.msra.mxu0 0.0
        %1667 = vmatprep.subr.mxu0 0.0
        %1668 = vmatpush1.msra.mxu0 0.0
        %1669 = vmatprep.subr.mxu0 0.0
        %1670 = vmatpush1.msra.mxu0 0.0
        %1671 = vmatprep.subr.mxu0 0.0
        %1672 = vmatpush1.msra.mxu0 0.0
        %1673 = vmatprep.subr.mxu0 0.0
        %1674 = vmatpush1.msra.mxu0 0.0
        %1675 = vmatprep.subr.mxu0 0.0
        %1676 = vmatpush1.msra.mxu0 0.0
        %1677 = vmatprep.subr.mxu0 0.0
        %1678 = vmatpush1.msra.mxu0 0.0
        %1679 = vmatprep.subr.mxu0 0.0
        %1680 = vmatpush1.msra.mxu0 0.0
        %1681 = vmatprep.subr.mxu0 0.0
        %1682 = vmatpush1.msra.mxu0 0.0
        %1683 = vmatprep.subr.mxu0 0.0
        %1684 = vmatpush1.msra.mxu0 0.0
        %1685 = vmatprep.subr.mxu0 0.0
        %1686 = vmatpush1.msra.mxu0 0.0
        %1687 = vmatprep.subr.mxu0 0.0
        %1688 = vmatpush1.msra.mxu0 0.0
        %1689 = vmatprep.subr.mxu0 0.0
        %1690 = vmatpush1.msra.mxu0 0.0
        %1691 = vmatprep.subr.mxu0 0.0
        %1692 = vmatpush1.msra.mxu0 0.0
        %1693 = vmatprep.subr.mxu0 0.0
        %1694 = vmatpush1.msra.mxu0 0.0
        %1695 = vmatprep.subr.mxu0 0.0
        %1696 = vmatpush1.msra.mxu0 0.0
        %1697 = vmatprep.subr.mxu0 0.0
        %1698 = vmatpush1.msra.mxu0 0.0
        %1699 = vmatprep.subr.mxu0 0.0
        %1700 = vmatpush1.msra.mxu0 0.0
        %1701 = vmatprep.subr.mxu0 0.0
        %1702 = vmatpush1.msra.mxu0 0.0
        %1703 = vmatprep.subr.mxu0 0.0
        %1704 = vmatpush1.msra.mxu0 0.0
        %1705 = vmatprep.subr.mxu0 0.0
        %1706 = vmatpush1.msra.mxu0 0.0
        %1707 = vmatprep.subr.mxu0 0.0
        %1708 = vmatpush1.msra.mxu0 0.0
        %1709 = vmatprep.subr.mxu0 0.0
        %1710 = vmatpush1.msra.mxu0 0.0
        %1711 = vmatprep.subr.mxu0 0.0
        %1712 = vmatpush1.msra.mxu0 0.0
        %1713 = vmatprep.subr.mxu0 0.0
        %1714 = vmatpush1.msra.mxu0 0.0
        %1715 = vmatprep.subr.mxu0 0.0
        %1716 = vmatpush1.msra.mxu0 0.0
        %1717 = vmatprep.subr.mxu0 0.0
        %1718 = vmatpush1.msra.mxu0 0.0
        %1719 = vmatprep.subr.mxu0 0.0
        %1720 = vmatpush1.msra.mxu0 0.0
        %1721 = vmatprep.mubr.f32.mxu0 0.0
        %1722 = vmatmul.mubr.f32.gmra.mrb[0].mxu0 %v1651
        %v1723 = vpop.f32.mrb[0].mxu0
        %v1724 = vadd.f32 0.0, %v1723
        %v1725 = vpop.f32.mrb[0].mxu0
        %1726 = vdwg.mxu0
        %v1727 = vadd.f32 %v1649, %v1724
        %1728 = vst [vmem:[#allocation2] sm:$0x3f] %v1727
        %v1729 = vld [vmem:[#allocation3] sm:$0x3f]
        %v1731 = vsel %vm1653, %v1641, 0
        %1733 = vmatprep.subr.mxu0 0.0
        %1734 = vmatpush1.msra.mxu0 %v1638
        %1735 = vmatprep.subr.mxu0 0.0
        %1736 = vmatpush1.msra.mxu0 %v1731
        %1737 = vmatprep.subr.mxu0 0.0
        %1738 = vmatpush1.msra.mxu0 0.0
        %1739 = vmatprep.subr.mxu0 0.0
        %1740 = vmatpush1.msra.mxu0 0.0
        %1741 = vmatprep.subr.mxu0 0.0
        %1742 = vmatpush1.msra.mxu0 0.0
        %1743 = vmatprep.subr.mxu0 0.0
        %1744 = vmatpush1.msra.mxu0 0.0
        %1745 = vmatprep.subr.mxu0 0.0
        %1746 = vmatpush1.msra.mxu0 0.0
        %1747 = vmatprep.subr.mxu0 0.0
        %1748 = vmatpush1.msra.mxu0 0.0
        %1749 = vmatprep.subr.mxu0 0.0
        %1750 = vmatpush1.msra.mxu0 0.0
        %1751 = vmatprep.subr.mxu0 0.0
        %1752 = vmatpush1.msra.mxu0 0.0
        %1753 = vmatprep.subr.mxu0 0.0
        %1754 = vmatpush1.msra.mxu0 0.0
        %1755 = vmatprep.subr.mxu0 0.0
        %1756 = vmatpush1.msra.mxu0 0.0
        %1757 = vmatprep.subr.mxu0 0.0
        %1758 = vmatpush1.msra.mxu0 0.0
        %1759 = vmatprep.subr.mxu0 0.0
        %1760 = vmatpush1.msra.mxu0 0.0
        %1761 = vmatprep.subr.mxu0 0.0
        %1762 = vmatpush1.msra.mxu0 0.0
        %1763 = vmatprep.subr.mxu0 0.0
        %1764 = vmatpush1.msra.mxu0 0.0
        %1765 = vmatprep.subr.mxu0 0.0
        %1766 = vmatpush1.msra.mxu0 0.0
        %1767 = vmatprep.subr.mxu0 0.0
        %1768 = vmatpush1.msra.mxu0 0.0
        %1769 = vmatprep.subr.mxu0 0.0
        %1770 = vmatpush1.msra.mxu0 0.0
        %1771 = vmatprep.subr.mxu0 0.0
        %1772 = vmatpush1.msra.mxu0 0.0
        %1773 = vmatprep.subr.mxu0 0.0
        %1774 = vmatpush1.msra.mxu0 0.0
        %1775 = vmatprep.subr.mxu0 0.0
        %1776 = vmatpush1.msra.mxu0 0.0
        %1777 = vmatprep.subr.mxu0 0.0
        %1778 = vmatpush1.msra.mxu0 0.0
        %1779 = vmatprep.subr.mxu0 0.0
        %1780 = vmatpush1.msra.mxu0 0.0
        %1781 = vmatprep.subr.mxu0 0.0
        %1782 = vmatpush1.msra.mxu0 0.0
        %1783 = vmatprep.subr.mxu0 0.0
        %1784 = vmatpush1.msra.mxu0 0.0
        %1785 = vmatprep.subr.mxu0 0.0
        %1786 = vmatpush1.msra.mxu0 0.0
        %1787 = vmatprep.subr.mxu0 0.0
        %1788 = vmatpush1.msra.mxu0 0.0
        %1789 = vmatprep.subr.mxu0 0.0
        %1790 = vmatpush1.msra.mxu0 0.0
        %1791 = vmatprep.subr.mxu0 0.0
        %1792 = vmatpush1.msra.mxu0 0.0
        %1793 = vmatprep.subr.mxu0 0.0
        %1794 = vmatpush1.msra.mxu0 0.0
        %1795 = vmatprep.subr.mxu0 0.0
        %1796 = vmatpush1.msra.mxu0 0.0
        %1797 = vmatprep.mubr.f32.mxu0 0.0
        %1798 = vmatmul.mubr.f32.gmra.mrb[0].mxu0 %v1651
        %v1799 = vpop.f32.mrb[0].mxu0
        %v1800 = vadd.f32 0.0, %v1799
        %v1801 = vpop.f32.mrb[0].mxu0
        %1802 = vdwg.mxu0
        %v1803 = vadd.f32 %v1729, %v1800
        %1804 = vst [vmem:[#allocation3] sm:$0x3f] %v1803
        %v1805 = vsel %vm1647, 1.0, 0.0
        %v1807 = vsel %vm1234, %v1805, 0
        %1809 = vmatprep.subr.mxu0 0.0
        %1810 = vmatpush1.msra.mxu0 %v1414
        %1811 = vmatprep.subr.mxu0 0.0
        %1812 = vmatpush1.msra.mxu0 %v1655
        %1813 = vmatprep.subr.mxu0 0.0
        %1814 = vmatpush1.msra.mxu0 0.0
        %1815 = vmatprep.subr.mxu0 0.0
        %1816 = vmatpush1.msra.mxu0 0.0
        %1817 = vmatprep.subr.mxu0 0.0
        %1818 = vmatpush1.msra.mxu0 0.0
        %1819 = vmatprep.subr.mxu0 0.0
        %1820 = vmatpush1.msra.mxu0 0.0
        %1821 = vmatprep.subr.mxu0 0.0
        %1822 = vmatpush1.msra.mxu0 0.0
        %1823 = vmatprep.subr.mxu0 0.0
        %1824 = vmatpush1.msra.mxu0 0.0
        %1825 = vmatprep.subr.mxu0 0.0
        %1826 = vmatpush1.msra.mxu0 0.0
        %1827 = vmatprep.subr.mxu0 0.0
        %1828 = vmatpush1.msra.mxu0 0.0
        %1829 = vmatprep.subr.mxu0 0.0
        %1830 = vmatpush1.msra.mxu0 0.0
        %1831 = vmatprep.subr.mxu0 0.0
        %1832 = vmatpush1.msra.mxu0 0.0
        %1833 = vmatprep.subr.mxu0 0.0
        %1834 = vmatpush1.msra.mxu0 0.0
        %1835 = vmatprep.subr.mxu0 0.0
        %1836 = vmatpush1.msra.mxu0 0.0
        %1837 = vmatprep.subr.mxu0 0.0
        %1838 = vmatpush1.msra.mxu0 0.0
        %1839 = vmatprep.subr.mxu0 0.0
        %1840 = vmatpush1.msra.mxu0 0.0
        %1841 = vmatprep.subr.mxu0 0.0
        %1842 = vmatpush1.msra.mxu0 0.0
        %1843 = vmatprep.subr.mxu0 0.0
        %1844 = vmatpush1.msra.mxu0 0.0
        %1845 = vmatprep.subr.mxu0 0.0
        %1846 = vmatpush1.msra.mxu0 0.0
        %1847 = vmatprep.subr.mxu0 0.0
        %1848 = vmatpush1.msra.mxu0 0.0
        %1849 = vmatprep.subr.mxu0 0.0
        %1850 = vmatpush1.msra.mxu0 0.0
        %1851 = vmatprep.subr.mxu0 0.0
        %1852 = vmatpush1.msra.mxu0 0.0
        %1853 = vmatprep.subr.mxu0 0.0
        %1854 = vmatpush1.msra.mxu0 0.0
        %1855 = vmatprep.subr.mxu0 0.0
        %1856 = vmatpush1.msra.mxu0 0.0
        %1857 = vmatprep.subr.mxu0 0.0
        %1858 = vmatpush1.msra.mxu0 0.0
        %1859 = vmatprep.subr.mxu0 0.0
        %1860 = vmatpush1.msra.mxu0 0.0
        %1861 = vmatprep.subr.mxu0 0.0
        %1862 = vmatpush1.msra.mxu0 0.0
        %1863 = vmatprep.subr.mxu0 0.0
        %1864 = vmatpush1.msra.mxu0 0.0
        %1865 = vmatprep.subr.mxu0 0.0
        %1866 = vmatpush1.msra.mxu0 0.0
        %1867 = vmatprep.subr.mxu0 0.0
        %1868 = vmatpush1.msra.mxu0 0.0
        %1869 = vmatprep.subr.mxu0 0.0
        %1870 = vmatpush1.msra.mxu0 0.0
        %1871 = vmatprep.subr.mxu0 0.0
        %1872 = vmatpush1.msra.mxu0 0.0
        %1873 = vmatprep.mubr.f32.mxu0 0.0
        %1874 = vmatmul.mubr.f32.gmra.mrb[0].mxu0 %v1807
        %v1875 = vpop.f32.mrb[0].mxu0
        %v1876 = vadd.f32 0.0, %v1875
        %v1877 = vpop.f32.mrb[0].mxu0
        %1878 = vdwg.mxu0
        %1879 = vst [vmem:[%s12] sm:$0x3f] %v1876
        %p1880 = scmp.eq.s32.totalorder %s27, 1
        // Predicated region
        $region85: #{llm_open_qa_forward.3} parent=59 // pred_check
          %p1881 = pneg %p1880
        $region86: #{llm_open_qa_forward.3} parent=59 // pred_check_branch
          %1883 = sbr.rel (%p1881) target = $region88
        $region87: #{llm_open_qa_forward.3} parent=59 // pred_region
          %v1884 = vld [vmem:[#allocation2] sm:$0x3f]
          %v1885 = vmul.f32 %v1884, 0.25
          %1886 = vst [vmem:[%s10] sm:$0x3f] %v1885
          %v1887 = vld [vmem:[#allocation3] sm:$0x3f]
          %v1888 = vmul.f32 %v1887, 0.25
          %1889 = vst [vmem:[%s11] sm:$0x3f] %v1888
        $region88: #{llm_open_qa_forward.3} parent=59 // pred_fallthru
          _
        // Predicated region
        $region89: #{llm_open_qa_forward.3} parent=59 // pred_check
          %p1890 = pneg %p255
        $region90: #{llm_open_qa_forward.3} parent=59 // pred_check_branch
          %1892 = sbr.rel (%p1890) target = $region92
        $region91: #{llm_open_qa_forward.3} parent=59 // pred_region
          _
        $region92: #{llm_open_qa_forward.3} parent=59 // pred_fallthru
          _
        // Predicated region
        $region93: #{llm_open_qa_forward.3} parent=59 // pred_check
          %p1893 = pneg %p276
        $region94: #{llm_open_qa_forward.3} parent=59 // pred_check_branch
          %1895 = sbr.rel (%p1893) target = $region96
        $region95: #{llm_open_qa_forward.3} parent=59 // pred_region
          _
        $region96: #{llm_open_qa_forward.3} parent=59 // pred_fallthru
          _
        // Predicated region
        $region97: #{llm_open_qa_forward.3} parent=59 // pred_check
          %p1896 = pneg %p297
        $region98: #{llm_open_qa_forward.3} parent=59 // pred_check_branch
          %1898 = sbr.rel (%p1896) target = $region100
        $region99: #{llm_open_qa_forward.3} parent=59 // pred_region
          _
        $region100: #{llm_open_qa_forward.3} parent=59 // pred_fallthru
          _
        // Predicated region
        $region101: #{llm_open_qa_forward.3} parent=59 // pred_check
          %p1899 = pneg %p255
        $region102: #{llm_open_qa_forward.3} parent=59 // pred_check_branch
          %1901 = sbr.rel (%p1899) target = $region104
        $region103: #{llm_open_qa_forward.3} parent=59 // pred_region
          _
        $region104: #{llm_open_qa_forward.3} parent=59 // pred_fallthru
          _
        // Predicated region
        $region105: #{llm_open_qa_forward.3} parent=59 // pred_check
          %p1902 = pneg %p276
        $region106: #{llm_open_qa_forward.3} parent=59 // pred_check_branch
          %1904 = sbr.rel (%p1902) target = $region108
        $region107: #{llm_open_qa_forward.3} parent=59 // pred_region
          _
        $region108: #{llm_open_qa_forward.3} parent=59 // pred_fallthru
          _
        // Predicated region
        $region109: #{llm_open_qa_forward.3} parent=59 // pred_check
          %p1905 = pneg %p297
        $region110: #{llm_open_qa_forward.3} parent=59 // pred_check_branch
          %1907 = sbr.rel (%p1905) target = $region112
        $region111: #{llm_open_qa_forward.3} parent=59 // pred_region
          _
        $region112: #{llm_open_qa_forward.3} parent=59 // pred_fallthru
          _
      $region60: #{llm_open_qa_forward.3} parent=5 // pred_fallthru
        _
      %p1908 = scmp.le.s32.totalorder 2, %s22
      // Predicated region
      $region113: #{llm_open_qa_forward.3} parent=5 // pred_check
        %p1909 = pneg %p1908
      $region114: #{llm_open_qa_forward.3} parent=5 // pred_check_branch
        %1911 = sbr.rel (%p1909) target = $region116
      $region115: #{llm_open_qa_forward.3} parent=5 // pred_region
        %s1912 = ssub.s32 %s22, 2
      $region116: #{llm_open_qa_forward.3} parent=5 // pred_fallthru
        _
    $region6: #{llm_open_qa_forward.3} parent=1 // loop_footer
      %s26 = sadd.s32 1, %s22
    $region7: #{llm_open_qa_forward.3} parent=1 // loop_footer_branch
      %21 = sbr.rel target = $region3
    $region8: #{llm_open_qa_forward.3} parent=1 // loop_exit
      _
    %1913 = vsyncpa [#allocation5], 1
    %s1914 = scalar_lea.sflag [#allocation5], 1
    %1915 = vsyncpa %s1914, 1
    %1916 = vsyncpa [#allocation7], 1
    %1917 = vsyncpa [#allocation10], 1

</llo_original>
